<compile_context>
chip_gen: v5e
topology: v5e:2x2
jax: 0.10.0
libtpu: 0.0.40
codegen_flags: <defaults>
</compile_context>

<pallas_src>
import functools

import jax
import jax.numpy as jnp
from jax import lax
from jax.experimental import pallas as pl
from jax.experimental.pallas import tpu as pltpu


# ---------------------------------------------------------------------------
# Fused 3x3 conv (stride 1, pad already applied) + bias + ReLU + 2x2/2 maxpool
# Grid: one image per grid step (batch axis, "parallel").
# ---------------------------------------------------------------------------

def _conv3x3_relu_pool_kernel(x_ref, w_ref, b_ref, o_ref, row_scratch,
                              *, H, W, Cin, Cout):
    """One image: x_ref (H+2, W+2, Cin), w_ref (9, Cin, Cout), b_ref (1, Cout),
    o_ref (H//2, W//2, Cout), row_scratch (W, Cout) f32."""
    Hh, Wh = H // 2, W // 2
    bias = b_ref[...]                                     # (1, Cout)

    def row_pair(r, carry):
        # Compute the two conv+bias+ReLU output rows (2r, 2r+1) of this pool row.
        rows = []
        for dy in range(2):
            acc = jnp.zeros((W, Cout), jnp.float32)
            for ky in range(3):
                xrow = x_ref[2 * r + dy + ky]             # (W+2, Cin), dynamic row
                for kx in range(3):
                    patch = xrow[kx:kx + W, :]            # (W, Cin)
                    wt = w_ref[ky * 3 + kx]               # (Cin, Cout)
                    if Cin == 1:
                        # K=1 contraction: keep it on the VPU (outer-product FMA),
                        # don't waste an MXU push on a 1-deep matmul.
                        acc = acc + patch * wt
                    else:
                        acc = acc + jnp.dot(
                            patch, wt, preferred_element_type=jnp.float32)
            rows.append(jnp.maximum(acc + bias, 0.0))

        # Vertical max of the row pair, staged in VMEM so the horizontal
        # stride-2 pool is two strided ref reads (no value reshapes/gathers).
        row_scratch[...] = jnp.maximum(rows[0], rows[1])  # (W, Cout)
        pooled = jnp.maximum(row_scratch[pl.ds(0, Wh, stride=2), :],
                             row_scratch[pl.ds(1, Wh, stride=2), :])
        o_ref[r] = pooled.astype(o_ref.dtype)             # (Wh, Cout)
        return carry

    lax.fori_loop(0, Hh, row_pair, 0)


def conv3x3_relu_pool(x_nhwc, w_hwio, b):
    """y = maxpool2x2(relu(conv3x3_same(x) + b)), NHWC in / NHWC out."""
    B, H, W, Cin = x_nhwc.shape
    Cout = w_hwio.shape[-1]
    Hh, Wh = H // 2, W // 2
    Hp, Wp = H + 2, W + 2

    xp = jnp.pad(x_nhwc, ((0, 0), (1, 1), (1, 1), (0, 0)))   # layout glue
    w9 = w_hwio.reshape(9, Cin, Cout)                        # (ky*3+kx, cin, cout)
    b2 = b.reshape(1, Cout)

    kern = functools.partial(_conv3x3_relu_pool_kernel,
                             H=H, W=W, Cin=Cin, Cout=Cout)
    flops = 2 * B * H * W * 9 * Cin * Cout
    bytes_accessed = 4 * (B * Hp * Wp * Cin + 9 * Cin * Cout + B * Hh * Wh * Cout)

    return pl.pallas_call(
        kern,
        out_shape=jax.ShapeDtypeStruct((B, Hh, Wh, Cout), jnp.float32),
        grid=(B,),
        in_specs=[
            pl.BlockSpec((None, Hp, Wp, Cin), lambda i: (i, 0, 0, 0)),
            pl.BlockSpec((9, Cin, Cout), lambda i: (0, 0, 0)),
            pl.BlockSpec((1, Cout), lambda i: (0, 0)),
        ],
        out_specs=pl.BlockSpec((None, Hh, Wh, Cout), lambda i: (i, 0, 0, 0)),
        scratch_shapes=[pltpu.VMEM((W, Cout), jnp.float32)],
        compiler_params=pltpu.CompilerParams(dimension_semantics=("parallel",)),
        cost_estimate=pl.CostEstimate(flops=flops, transcendentals=0,
                                      bytes_accessed=bytes_accessed),
    )(xp, w9, b2)


# ---------------------------------------------------------------------------
# Fused MLP head: relu(x @ W1 + b1) @ W2 + b2, M-tiled grid ("parallel").
# ---------------------------------------------------------------------------

def _mlp_kernel(x_ref, w1_ref, b1_ref, w2_ref, b2_ref, o_ref):
    h = jnp.dot(x_ref[...], w1_ref[...], preferred_element_type=jnp.float32)
    h = jnp.maximum(h + b1_ref[...], 0.0)
    o = jnp.dot(h, w2_ref[...], preferred_element_type=jnp.float32) + b2_ref[...]
    o_ref[...] = o.astype(o_ref.dtype)


def mlp_head(x2d, w1, b1_2d, w2, b2_2d, *, tm=128):
    M, K = x2d.shape
    Hdim = w1.shape[1]
    N = w2.shape[1]
    tm = min(tm, M)
    grid = (pl.cdiv(M, tm),)
    flops = 2 * M * K * Hdim + 2 * M * Hdim * N
    bytes_accessed = 4 * (M * K + K * Hdim + Hdim * N + M * N)

    return pl.pallas_call(
        _mlp_kernel,
        out_shape=jax.ShapeDtypeStruct((M, N), jnp.float32),
        grid=grid,
        in_specs=[
            pl.BlockSpec((tm, K), lambda i: (i, 0)),
            pl.BlockSpec((K, Hdim), lambda i: (0, 0)),
            pl.BlockSpec((1, Hdim), lambda i: (0, 0)),
            pl.BlockSpec((Hdim, N), lambda i: (0, 0)),
            pl.BlockSpec((1, N), lambda i: (0, 0)),
        ],
        out_specs=pl.BlockSpec((tm, N), lambda i: (i, 0)),
        compiler_params=pltpu.CompilerParams(dimension_semantics=("parallel",)),
        cost_estimate=pl.CostEstimate(flops=flops, transcendentals=0,
                                      bytes_accessed=bytes_accessed),
    )(x2d, w1, b1_2d, w2, b2_2d)


# ---------------------------------------------------------------------------
# Forward pass (matches PyTorch CNN.forward semantics).
# ---------------------------------------------------------------------------

def cnn_forward(x_nchw, params):
    # NCHW -> NHWC; Cin == 1 so this transpose is a free view.
    x = jnp.transpose(x_nchw, (0, 2, 3, 1))
    x = conv3x3_relu_pool(x, params["w1"], params["b1"])        # (B, 14, 14, 32)
    x = conv3x3_relu_pool(x, params["w2"], params["b2"])        # (B, 7, 7, 64)
    B = x.shape[0]
    # NHWC flatten is contiguous; torch's NCHW .view() semantics are recovered
    # by the one-time row permutation of wfc1 (see prepare_params).
    x = x.reshape(B, 7 * 7 * 64)
    return mlp_head(x, params["wfc1_nhwc"], params["bfc1"].reshape(1, -1),
                    params["wfc2"], params["bfc2"].reshape(1, -1))   # (B, 10)


# ---------------------------------------------------------------------------
# Deterministic params (torch-style init / torch-ordered fc1 rows).
# ---------------------------------------------------------------------------

def init_params(key):
    ks = jax.random.split(key, 8)

    def u(k, shape, fan_in):
        bound = 1.0 / jnp.sqrt(jnp.float32(fan_in))
        return jax.random.uniform(k, shape, jnp.float32, -bound, bound)

    return {
        "w1": u(ks[0], (3, 3, 1, 32), 9),                 # HWIO
        "b1": u(ks[1], (32,), 9),
        "w2": u(ks[2], (3, 3, 32, 64), 9 * 32),           # HWIO
        "b2": u(ks[3], (64,), 9 * 32),
        "wfc1": u(ks[4], (64 * 7 * 7, 128), 64 * 7 * 7),  # rows in torch (c,h,w) order
        "bfc1": u(ks[5], (128,), 64 * 7 * 7),
        "wfc2": u(ks[6], (128, 10), 128),
        "bfc2": u(ks[7], (10,), 128),
    }


def prepare_params(p):
    """One-time (outside the jitted forward) re-layout of fc1 so the NHWC
    flatten can feed fc1 directly, removing the per-step activation transpose."""
    q = dict(p)
    q["wfc1_nhwc"] = (p["wfc1"].reshape(64, 7, 7, 128)     # (c, h, w, out)
                      .transpose(1, 2, 0, 3)               # (h, w, c, out)
                      .reshape(64 * 7 * 7, 128))
    return q


# ---------------------------------------------------------------------------
# Pure-JAX reference (torch semantics, high precision) for a sanity check.
# ---------------------------------------------------------------------------

def _reference_forward(x_nchw, params):
    hi = jax.lax.Precision.HIGHEST
    x = jnp.transpose(x_nchw, (0, 2, 3, 1))

    def conv_pool(x, w, b):
        B, H, W, Cin = x.shape
        Cout = w.shape[-1]
        xp = jnp.pad(x, ((0, 0), (1, 1), (1, 1), (0, 0)))
        y = jnp.zeros((B, H, W, Cout), jnp.float32)
        for ky in range(3):
            for kx in range(3):
                y = y + jnp.einsum("bhwc,cd->bhwd", xp[:, ky:ky + H, kx:kx + W, :],
                                   w[ky, kx], precision=hi)
        y = jnp.maximum(y + b, 0.0)
        return jnp.max(y.reshape(B, H // 2, 2, W // 2, 2, Cout), axis=(2, 4))

    x = conv_pool(x, params["w1"], params["b1"])
    x = conv_pool(x, params["w2"], params["b2"])
    B = x.shape[0]
    xf = jnp.transpose(x, (0, 3, 1, 2)).reshape(B, 64 * 7 * 7)   # torch .view order
    h = jnp.maximum(jnp.dot(xf, params["wfc1"], precision=hi) + params["bfc1"], 0.0)
    return jnp.dot(h, params["wfc2"], precision=hi) + params["bfc2"]


if __name__ == "__main__":
    key = jax.random.PRNGKey(0)
    pkey, xkey = jax.random.split(key)
    raw_params = init_params(pkey)
    params = prepare_params(raw_params)

    # MNIST-shaped input (28x28 is required by the 64*7*7 flatten); small batch.
    x = jax.random.normal(xkey, (2, 1, 28, 28), jnp.float32)      # NCHW like PyTorch

    out = jax.jit(cnn_forward)(x, params)
    out = jax.block_until_ready(out)
    assert out.shape == (2, 10) and out.dtype == jnp.float32

    ref = _reference_forward(x, raw_params)
    assert jnp.allclose(out, ref, rtol=2e-2, atol=2e-2), "mismatch vs reference"

    print("KERNEL_OK")
</pallas_src>

<mosaic_0001>
module attributes {stable_mosaic.version = 11 : i64} {
  func.func @_conv3x3_relu_pool_kernel(%arg0: i32, %arg1: memref<1x30x30x1xf32, #tpu.memory_space<vmem>>, %arg2: memref<9x1x32xf32, #tpu.memory_space<vmem>>, %arg3: memref<1x32xf32, #tpu.memory_space<vmem>>, %arg4: memref<1x14x14x32xf32, #tpu.memory_space<vmem>>, %arg5: memref<28x32xf32, #tpu.memory_space<vmem>>) attributes {dimension_semantics = [#tpu.dimension_semantics<parallel>], iteration_bounds = array<i64: 2>, scalar_prefetch = 0 : i64, scratch_operands = 1 : i64, tpu.core_type = #tpu.core_type<tc>, window_params = [{transform_indices = @transform_0, window_bounds = array<i64: 1, 30, 30, 1>}, {pipeline_mode = #tpu.pipeline_mode<synchronous>, transform_indices = @transform_1, window_bounds = array<i64: 9, 1, 32>}, {pipeline_mode = #tpu.pipeline_mode<synchronous>, transform_indices = @transform_2, window_bounds = array<i64: 1, 32>}, {transform_indices = @transform_3, window_bounds = array<i64: 1, 14, 14, 32>}]} {
    %c0 = arith.constant 0 : index
    %c0_0 = arith.constant 0 : index
    %0 = vector.load %arg3[%c0, %c0_0] : memref<1x32xf32, #tpu.memory_space<vmem>>, vector<1x32xf32>
    %c0_i32 = arith.constant 0 : i32
    %c14_i32 = arith.constant 14 : i32
    %1 = arith.addi %c0_i32, %c14_i32 : i32
    %c1_i32 = arith.constant 1 : i32
    scf.for %arg6 = %c0_i32 to %1 step %c1_i32  : i32 {
      %cst = arith.constant 0.000000e+00 : f32
      %2 = vector.broadcast %cst : f32 to vector<28x32xf32>
      %c2_i32 = arith.constant 2 : i32
      %3 = arith.muli %c2_i32, %arg6 : i32
      %c0_i32_2 = arith.constant 0 : i32
      %4 = arith.addi %3, %c0_i32_2 : i32
      %c0_i32_3 = arith.constant 0 : i32
      %5 = arith.addi %4, %c0_i32_3 : i32
      %c0_4 = arith.constant 0 : index
      %6 = arith.index_cast %5 : i32 to index
      %c0_5 = arith.constant 0 : index
      %c0_6 = arith.constant 0 : index
      %7 = vector.load %arg1[%c0_4, %6, %c0_5, %c0_6] : memref<1x30x30x1xf32, #tpu.memory_space<vmem>>, vector<1x1x30x1xf32>
      %8 = vector.shape_cast %7 : vector<1x1x30x1xf32> to vector<30x1xf32>
      %9 = vector.extract_strided_slice %8 {offsets = [0, 0], sizes = [28, 1], strides = [1, 1]} : vector<30x1xf32> to vector<28x1xf32>
      %c0_7 = arith.constant 0 : index
      %c0_8 = arith.constant 0 : index
      %c0_9 = arith.constant 0 : index
      %10 = vector.load %arg2[%c0_7, %c0_8, %c0_9] : memref<9x1x32xf32, #tpu.memory_space<vmem>>, vector<1x1x32xf32>
      %11 = vector.shape_cast %10 : vector<1x1x32xf32> to vector<1x32xf32>
      %12 = vector.broadcast %9 : vector<28x1xf32> to vector<28x32xf32>
      %13 = vector.broadcast %11 : vector<1x32xf32> to vector<28x32xf32>
      %14 = arith.mulf %12, %13 : vector<28x32xf32>
      %15 = arith.addf %2, %14 : vector<28x32xf32>
      %16 = vector.extract_strided_slice %8 {offsets = [1, 0], sizes = [28, 1], strides = [1, 1]} : vector<30x1xf32> to vector<28x1xf32>
      %c1 = arith.constant 1 : index
      %c0_10 = arith.constant 0 : index
      %c0_11 = arith.constant 0 : index
      %17 = vector.load %arg2[%c1, %c0_10, %c0_11] : memref<9x1x32xf32, #tpu.memory_space<vmem>>, vector<1x1x32xf32>
      %18 = vector.shape_cast %17 : vector<1x1x32xf32> to vector<1x32xf32>
      %19 = vector.broadcast %16 : vector<28x1xf32> to vector<28x32xf32>
      %20 = vector.broadcast %18 : vector<1x32xf32> to vector<28x32xf32>
      %21 = arith.mulf %19, %20 : vector<28x32xf32>
      %22 = arith.addf %15, %21 : vector<28x32xf32>
      %23 = vector.extract_strided_slice %8 {offsets = [2, 0], sizes = [28, 1], strides = [1, 1]} : vector<30x1xf32> to vector<28x1xf32>
      %c2 = arith.constant 2 : index
      %c0_12 = arith.constant 0 : index
      %c0_13 = arith.constant 0 : index
      %24 = vector.load %arg2[%c2, %c0_12, %c0_13] : memref<9x1x32xf32, #tpu.memory_space<vmem>>, vector<1x1x32xf32>
      %25 = vector.shape_cast %24 : vector<1x1x32xf32> to vector<1x32xf32>
      %26 = vector.broadcast %23 : vector<28x1xf32> to vector<28x32xf32>
      %27 = vector.broadcast %25 : vector<1x32xf32> to vector<28x32xf32>
      %28 = arith.mulf %26, %27 : vector<28x32xf32>
      %29 = arith.addf %22, %28 : vector<28x32xf32>
      %c2_i32_14 = arith.constant 2 : i32
      %30 = arith.muli %c2_i32_14, %arg6 : i32
      %c0_i32_15 = arith.constant 0 : i32
      %31 = arith.addi %30, %c0_i32_15 : i32
      %c1_i32_16 = arith.constant 1 : i32
      %32 = arith.addi %31, %c1_i32_16 : i32
      %c0_17 = arith.constant 0 : index
      %33 = arith.index_cast %32 : i32 to index
      %c0_18 = arith.constant 0 : index
      %c0_19 = arith.constant 0 : index
      %34 = vector.load %arg1[%c0_17, %33, %c0_18, %c0_19] : memref<1x30x30x1xf32, #tpu.memory_space<vmem>>, vector<1x1x30x1xf32>
      %35 = vector.shape_cast %34 : vector<1x1x30x1xf32> to vector<30x1xf32>
      %36 = vector.extract_strided_slice %35 {offsets = [0, 0], sizes = [28, 1], strides = [1, 1]} : vector<30x1xf32> to vector<28x1xf32>
      %c3 = arith.constant 3 : index
      %c0_20 = arith.constant 0 : index
      %c0_21 = arith.constant 0 : index
      %37 = vector.load %arg2[%c3, %c0_20, %c0_21] : memref<9x1x32xf32, #tpu.memory_space<vmem>>, vector<1x1x32xf32>
      %38 = vector.shape_cast %37 : vector<1x1x32xf32> to vector<1x32xf32>
      %39 = vector.broadcast %36 : vector<28x1xf32> to vector<28x32xf32>
      %40 = vector.broadcast %38 : vector<1x32xf32> to vector<28x32xf32>
      %41 = arith.mulf %39, %40 : vector<28x32xf32>
      %42 = arith.addf %29, %41 : vector<28x32xf32>
      %43 = vector.extract_strided_slice %35 {offsets = [1, 0], sizes = [28, 1], strides = [1, 1]} : vector<30x1xf32> to vector<28x1xf32>
      %c4 = arith.constant 4 : index
      %c0_22 = arith.constant 0 : index
      %c0_23 = arith.constant 0 : index
      %44 = vector.load %arg2[%c4, %c0_22, %c0_23] : memref<9x1x32xf32, #tpu.memory_space<vmem>>, vector<1x1x32xf32>
      %45 = vector.shape_cast %44 : vector<1x1x32xf32> to vector<1x32xf32>
      %46 = vector.broadcast %43 : vector<28x1xf32> to vector<28x32xf32>
      %47 = vector.broadcast %45 : vector<1x32xf32> to vector<28x32xf32>
      %48 = arith.mulf %46, %47 : vector<28x32xf32>
      %49 = arith.addf %42, %48 : vector<28x32xf32>
      %50 = vector.extract_strided_slice %35 {offsets = [2, 0], sizes = [28, 1], strides = [1, 1]} : vector<30x1xf32> to vector<28x1xf32>
      %c5 = arith.constant 5 : index
      %c0_24 = arith.constant 0 : index
      %c0_25 = arith.constant 0 : index
      %51 = vector.load %arg2[%c5, %c0_24, %c0_25] : memref<9x1x32xf32, #tpu.memory_space<vmem>>, vector<1x1x32xf32>
      %52 = vector.shape_cast %51 : vector<1x1x32xf32> to vector<1x32xf32>
      %53 = vector.broadcast %50 : vector<28x1xf32> to vector<28x32xf32>
      %54 = vector.broadcast %52 : vector<1x32xf32> to vector<28x32xf32>
      %55 = arith.mulf %53, %54 : vector<28x32xf32>
      %56 = arith.addf %49, %55 : vector<28x32xf32>
      %c2_i32_26 = arith.constant 2 : i32
      %57 = arith.muli %c2_i32_26, %arg6 : i32
      %c0_i32_27 = arith.constant 0 : i32
      %58 = arith.addi %57, %c0_i32_27 : i32
      %c2_i32_28 = arith.constant 2 : i32
      %59 = arith.addi %58, %c2_i32_28 : i32
      %c0_29 = arith.constant 0 : index
      %60 = arith.index_cast %59 : i32 to index
      %c0_30 = arith.constant 0 : index
      %c0_31 = arith.constant 0 : index
      %61 = vector.load %arg1[%c0_29, %60, %c0_30, %c0_31] : memref<1x30x30x1xf32, #tpu.memory_space<vmem>>, vector<1x1x30x1xf32>
      %62 = vector.shape_cast %61 : vector<1x1x30x1xf32> to vector<30x1xf32>
      %63 = vector.extract_strided_slice %62 {offsets = [0, 0], sizes = [28, 1], strides = [1, 1]} : vector<30x1xf32> to vector<28x1xf32>
      %c6 = arith.constant 6 : index
      %c0_32 = arith.constant 0 : index
      %c0_33 = arith.constant 0 : index
      %64 = vector.load %arg2[%c6, %c0_32, %c0_33] : memref<9x1x32xf32, #tpu.memory_space<vmem>>, vector<1x1x32xf32>
      %65 = vector.shape_cast %64 : vector<1x1x32xf32> to vector<1x32xf32>
      %66 = vector.broadcast %63 : vector<28x1xf32> to vector<28x32xf32>
      %67 = vector.broadcast %65 : vector<1x32xf32> to vector<28x32xf32>
      %68 = arith.mulf %66, %67 : vector<28x32xf32>
      %69 = arith.addf %56, %68 : vector<28x32xf32>
      %70 = vector.extract_strided_slice %62 {offsets = [1, 0], sizes = [28, 1], strides = [1, 1]} : vector<30x1xf32> to vector<28x1xf32>
      %c7 = arith.constant 7 : index
      %c0_34 = arith.constant 0 : index
      %c0_35 = arith.constant 0 : index
      %71 = vector.load %arg2[%c7, %c0_34, %c0_35] : memref<9x1x32xf32, #tpu.memory_space<vmem>>, vector<1x1x32xf32>
      %72 = vector.shape_cast %71 : vector<1x1x32xf32> to vector<1x32xf32>
      %73 = vector.broadcast %70 : vector<28x1xf32> to vector<28x32xf32>
      %74 = vector.broadcast %72 : vector<1x32xf32> to vector<28x32xf32>
      %75 = arith.mulf %73, %74 : vector<28x32xf32>
      %76 = arith.addf %69, %75 : vector<28x32xf32>
      %77 = vector.extract_strided_slice %62 {offsets = [2, 0], sizes = [28, 1], strides = [1, 1]} : vector<30x1xf32> to vector<28x1xf32>
      %c8 = arith.constant 8 : index
      %c0_36 = arith.constant 0 : index
      %c0_37 = arith.constant 0 : index
      %78 = vector.load %arg2[%c8, %c0_36, %c0_37] : memref<9x1x32xf32, #tpu.memory_space<vmem>>, vector<1x1x32xf32>
      %79 = vector.shape_cast %78 : vector<1x1x32xf32> to vector<1x32xf32>
      %80 = vector.broadcast %77 : vector<28x1xf32> to vector<28x32xf32>
      %81 = vector.broadcast %79 : vector<1x32xf32> to vector<28x32xf32>
      %82 = arith.mulf %80, %81 : vector<28x32xf32>
      %83 = arith.addf %76, %82 : vector<28x32xf32>
      %84 = vector.broadcast %0 : vector<1x32xf32> to vector<28x32xf32>
      %85 = arith.addf %83, %84 : vector<28x32xf32>
      %cst_38 = arith.constant 0.000000e+00 : f32
      %86 = vector.broadcast %cst_38 : f32 to vector<28x32xf32>
      %87 = arith.maximumf %85, %86 : vector<28x32xf32>
      %cst_39 = arith.constant 0.000000e+00 : f32
      %88 = vector.broadcast %cst_39 : f32 to vector<28x32xf32>
      %c2_i32_40 = arith.constant 2 : i32
      %89 = arith.muli %c2_i32_40, %arg6 : i32
      %c1_i32_41 = arith.constant 1 : i32
      %90 = arith.addi %89, %c1_i32_41 : i32
      %c0_i32_42 = arith.constant 0 : i32
      %91 = arith.addi %90, %c0_i32_42 : i32
      %c0_43 = arith.constant 0 : index
      %92 = arith.index_cast %91 : i32 to index
      %c0_44 = arith.constant 0 : index
      %c0_45 = arith.constant 0 : index
      %93 = vector.load %arg1[%c0_43, %92, %c0_44, %c0_45] : memref<1x30x30x1xf32, #tpu.memory_space<vmem>>, vector<1x1x30x1xf32>
      %94 = vector.shape_cast %93 : vector<1x1x30x1xf32> to vector<30x1xf32>
      %95 = vector.extract_strided_slice %94 {offsets = [0, 0], sizes = [28, 1], strides = [1, 1]} : vector<30x1xf32> to vector<28x1xf32>
      %c0_46 = arith.constant 0 : index
      %c0_47 = arith.constant 0 : index
      %c0_48 = arith.constant 0 : index
      %96 = vector.load %arg2[%c0_46, %c0_47, %c0_48] : memref<9x1x32xf32, #tpu.memory_space<vmem>>, vector<1x1x32xf32>
      %97 = vector.shape_cast %96 : vector<1x1x32xf32> to vector<1x32xf32>
      %98 = vector.broadcast %95 : vector<28x1xf32> to vector<28x32xf32>
      %99 = vector.broadcast %97 : vector<1x32xf32> to vector<28x32xf32>
      %100 = arith.mulf %98, %99 : vector<28x32xf32>
      %101 = arith.addf %88, %100 : vector<28x32xf32>
      %102 = vector.extract_strided_slice %94 {offsets = [1, 0], sizes = [28, 1], strides = [1, 1]} : vector<30x1xf32> to vector<28x1xf32>
      %c1_49 = arith.constant 1 : index
      %c0_50 = arith.constant 0 : index
      %c0_51 = arith.constant 0 : index
      %103 = vector.load %arg2[%c1_49, %c0_50, %c0_51] : memref<9x1x32xf32, #tpu.memory_space<vmem>>, vector<1x1x32xf32>
      %104 = vector.shape_cast %103 : vector<1x1x32xf32> to vector<1x32xf32>
      %105 = vector.broadcast %102 : vector<28x1xf32> to vector<28x32xf32>
      %106 = vector.broadcast %104 : vector<1x32xf32> to vector<28x32xf32>
      %107 = arith.mulf %105, %106 : vector<28x32xf32>
      %108 = arith.addf %101, %107 : vector<28x32xf32>
      %109 = vector.extract_strided_slice %94 {offsets = [2, 0], sizes = [28, 1], strides = [1, 1]} : vector<30x1xf32> to vector<28x1xf32>
      %c2_52 = arith.constant 2 : index
      %c0_53 = arith.constant 0 : index
      %c0_54 = arith.constant 0 : index
      %110 = vector.load %arg2[%c2_52, %c0_53, %c0_54] : memref<9x1x32xf32, #tpu.memory_space<vmem>>, vector<1x1x32xf32>
      %111 = vector.shape_cast %110 : vector<1x1x32xf32> to vector<1x32xf32>
      %112 = vector.broadcast %109 : vector<28x1xf32> to vector<28x32xf32>
      %113 = vector.broadcast %111 : vector<1x32xf32> to vector<28x32xf32>
      %114 = arith.mulf %112, %113 : vector<28x32xf32>
      %115 = arith.addf %108, %114 : vector<28x32xf32>
      %c2_i32_55 = arith.constant 2 : i32
      %116 = arith.muli %c2_i32_55, %arg6 : i32
      %c1_i32_56 = arith.constant 1 : i32
      %117 = arith.addi %116, %c1_i32_56 : i32
      %c1_i32_57 = arith.constant 1 : i32
      %118 = arith.addi %117, %c1_i32_57 : i32
      %c0_58 = arith.constant 0 : index
      %119 = arith.index_cast %118 : i32 to index
      %c0_59 = arith.constant 0 : index
      %c0_60 = arith.constant 0 : index
      %120 = vector.load %arg1[%c0_58, %119, %c0_59, %c0_60] : memref<1x30x30x1xf32, #tpu.memory_space<vmem>>, vector<1x1x30x1xf32>
      %121 = vector.shape_cast %120 : vector<1x1x30x1xf32> to vector<30x1xf32>
      %122 = vector.extract_strided_slice %121 {offsets = [0, 0], sizes = [28, 1], strides = [1, 1]} : vector<30x1xf32> to vector<28x1xf32>
      %c3_61 = arith.constant 3 : index
      %c0_62 = arith.constant 0 : index
      %c0_63 = arith.constant 0 : index
      %123 = vector.load %arg2[%c3_61, %c0_62, %c0_63] : memref<9x1x32xf32, #tpu.memory_space<vmem>>, vector<1x1x32xf32>
      %124 = vector.shape_cast %123 : vector<1x1x32xf32> to vector<1x32xf32>
      %125 = vector.broadcast %122 : vector<28x1xf32> to vector<28x32xf32>
      %126 = vector.broadcast %124 : vector<1x32xf32> to vector<28x32xf32>
      %127 = arith.mulf %125, %126 : vector<28x32xf32>
      %128 = arith.addf %115, %127 : vector<28x32xf32>
      %129 = vector.extract_strided_slice %121 {offsets = [1, 0], sizes = [28, 1], strides = [1, 1]} : vector<30x1xf32> to vector<28x1xf32>
      %c4_64 = arith.constant 4 : index
      %c0_65 = arith.constant 0 : index
      %c0_66 = arith.constant 0 : index
      %130 = vector.load %arg2[%c4_64, %c0_65, %c0_66] : memref<9x1x32xf32, #tpu.memory_space<vmem>>, vector<1x1x32xf32>
      %131 = vector.shape_cast %130 : vector<1x1x32xf32> to vector<1x32xf32>
      %132 = vector.broadcast %129 : vector<28x1xf32> to vector<28x32xf32>
      %133 = vector.broadcast %131 : vector<1x32xf32> to vector<28x32xf32>
      %134 = arith.mulf %132, %133 : vector<28x32xf32>
      %135 = arith.addf %128, %134 : vector<28x32xf32>
      %136 = vector.extract_strided_slice %121 {offsets = [2, 0], sizes = [28, 1], strides = [1, 1]} : vector<30x1xf32> to vector<28x1xf32>
      %c5_67 = arith.constant 5 : index
      %c0_68 = arith.constant 0 : index
      %c0_69 = arith.constant 0 : index
      %137 = vector.load %arg2[%c5_67, %c0_68, %c0_69] : memref<9x1x32xf32, #tpu.memory_space<vmem>>, vector<1x1x32xf32>
      %138 = vector.shape_cast %137 : vector<1x1x32xf32> to vector<1x32xf32>
      %139 = vector.broadcast %136 : vector<28x1xf32> to vector<28x32xf32>
      %140 = vector.broadcast %138 : vector<1x32xf32> to vector<28x32xf32>
      %141 = arith.mulf %139, %140 : vector<28x32xf32>
      %142 = arith.addf %135, %141 : vector<28x32xf32>
      %c2_i32_70 = arith.constant 2 : i32
      %143 = arith.muli %c2_i32_70, %arg6 : i32
      %c1_i32_71 = arith.constant 1 : i32
      %144 = arith.addi %143, %c1_i32_71 : i32
      %c2_i32_72 = arith.constant 2 : i32
      %145 = arith.addi %144, %c2_i32_72 : i32
      %c0_73 = arith.constant 0 : index
      %146 = arith.index_cast %145 : i32 to index
      %c0_74 = arith.constant 0 : index
      %c0_75 = arith.constant 0 : index
      %147 = vector.load %arg1[%c0_73, %146, %c0_74, %c0_75] : memref<1x30x30x1xf32, #tpu.memory_space<vmem>>, vector<1x1x30x1xf32>
      %148 = vector.shape_cast %147 : vector<1x1x30x1xf32> to vector<30x1xf32>
      %149 = vector.extract_strided_slice %148 {offsets = [0, 0], sizes = [28, 1], strides = [1, 1]} : vector<30x1xf32> to vector<28x1xf32>
      %c6_76 = arith.constant 6 : index
      %c0_77 = arith.constant 0 : index
      %c0_78 = arith.constant 0 : index
      %150 = vector.load %arg2[%c6_76, %c0_77, %c0_78] : memref<9x1x32xf32, #tpu.memory_space<vmem>>, vector<1x1x32xf32>
      %151 = vector.shape_cast %150 : vector<1x1x32xf32> to vector<1x32xf32>
      %152 = vector.broadcast %149 : vector<28x1xf32> to vector<28x32xf32>
      %153 = vector.broadcast %151 : vector<1x32xf32> to vector<28x32xf32>
      %154 = arith.mulf %152, %153 : vector<28x32xf32>
      %155 = arith.addf %142, %154 : vector<28x32xf32>
      %156 = vector.extract_strided_slice %148 {offsets = [1, 0], sizes = [28, 1], strides = [1, 1]} : vector<30x1xf32> to vector<28x1xf32>
      %c7_79 = arith.constant 7 : index
      %c0_80 = arith.constant 0 : index
      %c0_81 = arith.constant 0 : index
      %157 = vector.load %arg2[%c7_79, %c0_80, %c0_81] : memref<9x1x32xf32, #tpu.memory_space<vmem>>, vector<1x1x32xf32>
      %158 = vector.shape_cast %157 : vector<1x1x32xf32> to vector<1x32xf32>
      %159 = vector.broadcast %156 : vector<28x1xf32> to vector<28x32xf32>
      %160 = vector.broadcast %158 : vector<1x32xf32> to vector<28x32xf32>
      %161 = arith.mulf %159, %160 : vector<28x32xf32>
      %162 = arith.addf %155, %161 : vector<28x32xf32>
      %163 = vector.extract_strided_slice %148 {offsets = [2, 0], sizes = [28, 1], strides = [1, 1]} : vector<30x1xf32> to vector<28x1xf32>
      %c8_82 = arith.constant 8 : index
      %c0_83 = arith.constant 0 : index
      %c0_84 = arith.constant 0 : index
      %164 = vector.load %arg2[%c8_82, %c0_83, %c0_84] : memref<9x1x32xf32, #tpu.memory_space<vmem>>, vector<1x1x32xf32>
      %165 = vector.shape_cast %164 : vector<1x1x32xf32> to vector<1x32xf32>
      %166 = vector.broadcast %163 : vector<28x1xf32> to vector<28x32xf32>
      %167 = vector.broadcast %165 : vector<1x32xf32> to vector<28x32xf32>
      %168 = arith.mulf %166, %167 : vector<28x32xf32>
      %169 = arith.addf %162, %168 : vector<28x32xf32>
      %170 = vector.broadcast %0 : vector<1x32xf32> to vector<28x32xf32>
      %171 = arith.addf %169, %170 : vector<28x32xf32>
      %cst_85 = arith.constant 0.000000e+00 : f32
      %172 = vector.broadcast %cst_85 : f32 to vector<28x32xf32>
      %173 = arith.maximumf %171, %172 : vector<28x32xf32>
      %174 = arith.maximumf %87, %173 : vector<28x32xf32>
      %c0_86 = arith.constant 0 : index
      %c0_87 = arith.constant 0 : index
      %175 = vector.load %arg5[%c0_86, %c0_87] : memref<28x32xf32, #tpu.memory_space<vmem>>, vector<28x32xf32>
      tpu.vector_store %arg5[%c0_86, %c0_87], %174 {strides = array<i32>} : memref<28x32xf32, #tpu.memory_space<vmem>>, vector<28x32xf32>,
      %c0_88 = arith.constant 0 : index
      %c0_89 = arith.constant 0 : index
      %176 = tpu.strided_load %arg5[%c0_88, %c0_89] {strides = array<i32: 2, 1>} : memref<28x32xf32, #tpu.memory_space<vmem>>, vector<14x32xf32>
      %c1_90 = arith.constant 1 : index
      %c0_91 = arith.constant 0 : index
      %177 = tpu.strided_load %arg5[%c1_90, %c0_91] {strides = array<i32: 2, 1>} : memref<28x32xf32, #tpu.memory_space<vmem>>, vector<14x32xf32>
      %178 = arith.maximumf %176, %177 : vector<14x32xf32>
      %c0_92 = arith.constant 0 : index
      %179 = arith.index_cast %arg6 : i32 to index
      %c0_93 = arith.constant 0 : index
      %c0_94 = arith.constant 0 : index
      %180 = vector.load %arg4[%c0_92, %179, %c0_93, %c0_94] : memref<1x14x14x32xf32, #tpu.memory_space<vmem>>, vector<1x1x14x32xf32>
      %181 = vector.shape_cast %180 : vector<1x1x14x32xf32> to vector<14x32xf32>
      %182 = vector.shape_cast %178 : vector<14x32xf32> to vector<1x1x14x32xf32>
      tpu.vector_store %arg4[%c0_92, %179, %c0_93, %c0_94], %182 {strides = array<i32>} : memref<1x14x14x32xf32, #tpu.memory_space<vmem>>, vector<1x1x14x32xf32>,
    }
    %c14_i32_1 = arith.constant 14 : i32
    return
  }
  func.func @transform_0(%arg0: i32) -> (i32, i32, i32, i32) {
    %c0_i32 = arith.constant 0 : i32
    %c0_i32_0 = arith.constant 0 : i32
    %c0_i32_1 = arith.constant 0 : i32
    %c0_i32_2 = arith.constant 0 : i32
    return %arg0, %c0_i32, %c0_i32_0, %c0_i32_1 : i32, i32, i32, i32
  }
  func.func @transform_1(%arg0: i32) -> (i32, i32, i32) {
    %c0_i32 = arith.constant 0 : i32
    %c0_i32_0 = arith.constant 0 : i32
    %c0_i32_1 = arith.constant 0 : i32
    %c0_i32_2 = arith.constant 0 : i32
    return %c0_i32, %c0_i32_0, %c0_i32_1 : i32, i32, i32
  }
  func.func @transform_2(%arg0: i32) -> (i32, i32) {
    %c0_i32 = arith.constant 0 : i32
    %c0_i32_0 = arith.constant 0 : i32
    %c0_i32_1 = arith.constant 0 : i32
    return %c0_i32, %c0_i32_0 : i32, i32
  }
  func.func @transform_3(%arg0: i32) -> (i32, i32, i32, i32) {
    %c0_i32 = arith.constant 0 : i32
    %c0_i32_0 = arith.constant 0 : i32
    %c0_i32_1 = arith.constant 0 : i32
    %c0_i32_2 = arith.constant 0 : i32
    return %arg0, %c0_i32, %c0_i32_0, %c0_i32_1 : i32, i32, i32, i32
  }
}

module attributes {stable_mosaic.version = 11 : i64} {
  func.func @_conv3x3_relu_pool_kernel(%arg0: i32, %arg1: memref<1x16x16x32xf32, #tpu.memory_space<vmem>>, %arg2: memref<9x32x64xf32, #tpu.memory_space<vmem>>, %arg3: memref<1x64xf32, #tpu.memory_space<vmem>>, %arg4: memref<1x7x7x64xf32, #tpu.memory_space<vmem>>, %arg5: memref<14x64xf32, #tpu.memory_space<vmem>>) attributes {dimension_semantics = [#tpu.dimension_semantics<parallel>], iteration_bounds = array<i64: 2>, scalar_prefetch = 0 : i64, scratch_operands = 1 : i64, tpu.core_type = #tpu.core_type<tc>, window_params = [{transform_indices = @transform_0, window_bounds = array<i64: 1, 16, 16, 32>}, {pipeline_mode = #tpu.pipeline_mode<synchronous>, transform_indices = @transform_1, window_bounds = array<i64: 9, 32, 64>}, {pipeline_mode = #tpu.pipeline_mode<synchronous>, transform_indices = @transform_2, window_bounds = array<i64: 1, 64>}, {transform_indices = @transform_3, window_bounds = array<i64: 1, 7, 7, 64>}]} {
    %c0 = arith.constant 0 : index
    %c0_0 = arith.constant 0 : index
    %0 = vector.load %arg3[%c0, %c0_0] : memref<1x64xf32, #tpu.memory_space<vmem>>, vector<1x64xf32>
    %c0_i32 = arith.constant 0 : i32
    %c7_i32 = arith.constant 7 : i32
    %1 = arith.addi %c0_i32, %c7_i32 : i32
    %c1_i32 = arith.constant 1 : i32
    scf.for %arg6 = %c0_i32 to %1 step %c1_i32  : i32 {
      %cst = arith.constant 0.000000e+00 : f32
      %2 = vector.broadcast %cst : f32 to vector<14x64xf32>
      %c2_i32 = arith.constant 2 : i32
      %3 = arith.muli %c2_i32, %arg6 : i32
      %c0_i32_2 = arith.constant 0 : i32
      %4 = arith.addi %3, %c0_i32_2 : i32
      %c0_i32_3 = arith.constant 0 : i32
      %5 = arith.addi %4, %c0_i32_3 : i32
      %c0_4 = arith.constant 0 : index
      %6 = arith.index_cast %5 : i32 to index
      %c0_5 = arith.constant 0 : index
      %c0_6 = arith.constant 0 : index
      %7 = vector.load %arg1[%c0_4, %6, %c0_5, %c0_6] : memref<1x16x16x32xf32, #tpu.memory_space<vmem>>, vector<1x1x16x32xf32>
      %8 = vector.shape_cast %7 : vector<1x1x16x32xf32> to vector<16x32xf32>
      %9 = vector.extract_strided_slice %8 {offsets = [0, 0], sizes = [14, 32], strides = [1, 1]} : vector<16x32xf32> to vector<14x32xf32>
      %c0_7 = arith.constant 0 : index
      %c0_8 = arith.constant 0 : index
      %c0_9 = arith.constant 0 : index
      %10 = vector.load %arg2[%c0_7, %c0_8, %c0_9] : memref<9x32x64xf32, #tpu.memory_space<vmem>>, vector<1x32x64xf32>
      %11 = vector.shape_cast %10 : vector<1x32x64xf32> to vector<32x64xf32>
      %cst_10 = arith.constant dense<0.000000e+00> : vector<14x64xf32>
      %12 = tpu.matmul %9, %11, %cst_10 {dimension_numbers = #tpu.dot_dimension_numbers<[1], [0], [0], [1], [0, 0, 1, 1], [], []>} : vector<14x32xf32>, vector<32x64xf32>, vector<14x64xf32> -> vector<14x64xf32>
      %13 = arith.addf %2, %12 : vector<14x64xf32>
      %14 = vector.extract_strided_slice %8 {offsets = [1, 0], sizes = [14, 32], strides = [1, 1]} : vector<16x32xf32> to vector<14x32xf32>
      %c1 = arith.constant 1 : index
      %c0_11 = arith.constant 0 : index
      %c0_12 = arith.constant 0 : index
      %15 = vector.load %arg2[%c1, %c0_11, %c0_12] : memref<9x32x64xf32, #tpu.memory_space<vmem>>, vector<1x32x64xf32>
      %16 = vector.shape_cast %15 : vector<1x32x64xf32> to vector<32x64xf32>
      %cst_13 = arith.constant dense<0.000000e+00> : vector<14x64xf32>
      %17 = tpu.matmul %14, %16, %cst_13 {dimension_numbers = #tpu.dot_dimension_numbers<[1], [0], [0], [1], [0, 0, 1, 1], [], []>} : vector<14x32xf32>, vector<32x64xf32>, vector<14x64xf32> -> vector<14x64xf32>
      %18 = arith.addf %13, %17 : vector<14x64xf32>
      %19 = vector.extract_strided_slice %8 {offsets = [2, 0], sizes = [14, 32], strides = [1, 1]} : vector<16x32xf32> to vector<14x32xf32>
      %c2 = arith.constant 2 : index
      %c0_14 = arith.constant 0 : index
      %c0_15 = arith.constant 0 : index
      %20 = vector.load %arg2[%c2, %c0_14, %c0_15] : memref<9x32x64xf32, #tpu.memory_space<vmem>>, vector<1x32x64xf32>
      %21 = vector.shape_cast %20 : vector<1x32x64xf32> to vector<32x64xf32>
      %cst_16 = arith.constant dense<0.000000e+00> : vector<14x64xf32>
      %22 = tpu.matmul %19, %21, %cst_16 {dimension_numbers = #tpu.dot_dimension_numbers<[1], [0], [0], [1], [0, 0, 1, 1], [], []>} : vector<14x32xf32>, vector<32x64xf32>, vector<14x64xf32> -> vector<14x64xf32>
      %23 = arith.addf %18, %22 : vector<14x64xf32>
      %c2_i32_17 = arith.constant 2 : i32
      %24 = arith.muli %c2_i32_17, %arg6 : i32
      %c0_i32_18 = arith.constant 0 : i32
      %25 = arith.addi %24, %c0_i32_18 : i32
      %c1_i32_19 = arith.constant 1 : i32
      %26 = arith.addi %25, %c1_i32_19 : i32
      %c0_20 = arith.constant 0 : index
      %27 = arith.index_cast %26 : i32 to index
      %c0_21 = arith.constant 0 : index
      %c0_22 = arith.constant 0 : index
      %28 = vector.load %arg1[%c0_20, %27, %c0_21, %c0_22] : memref<1x16x16x32xf32, #tpu.memory_space<vmem>>, vector<1x1x16x32xf32>
      %29 = vector.shape_cast %28 : vector<1x1x16x32xf32> to vector<16x32xf32>
      %30 = vector.extract_strided_slice %29 {offsets = [0, 0], sizes = [14, 32], strides = [1, 1]} : vector<16x32xf32> to vector<14x32xf32>
      %c3 = arith.constant 3 : index
      %c0_23 = arith.constant 0 : index
      %c0_24 = arith.constant 0 : index
      %31 = vector.load %arg2[%c3, %c0_23, %c0_24] : memref<9x32x64xf32, #tpu.memory_space<vmem>>, vector<1x32x64xf32>
      %32 = vector.shape_cast %31 : vector<1x32x64xf32> to vector<32x64xf32>
      %cst_25 = arith.constant dense<0.000000e+00> : vector<14x64xf32>
      %33 = tpu.matmul %30, %32, %cst_25 {dimension_numbers = #tpu.dot_dimension_numbers<[1], [0], [0], [1], [0, 0, 1, 1], [], []>} : vector<14x32xf32>, vector<32x64xf32>, vector<14x64xf32> -> vector<14x64xf32>
      %34 = arith.addf %23, %33 : vector<14x64xf32>
      %35 = vector.extract_strided_slice %29 {offsets = [1, 0], sizes = [14, 32], strides = [1, 1]} : vector<16x32xf32> to vector<14x32xf32>
      %c4 = arith.constant 4 : index
      %c0_26 = arith.constant 0 : index
      %c0_27 = arith.constant 0 : index
      %36 = vector.load %arg2[%c4, %c0_26, %c0_27] : memref<9x32x64xf32, #tpu.memory_space<vmem>>, vector<1x32x64xf32>
      %37 = vector.shape_cast %36 : vector<1x32x64xf32> to vector<32x64xf32>
      %cst_28 = arith.constant dense<0.000000e+00> : vector<14x64xf32>
      %38 = tpu.matmul %35, %37, %cst_28 {dimension_numbers = #tpu.dot_dimension_numbers<[1], [0], [0], [1], [0, 0, 1, 1], [], []>} : vector<14x32xf32>, vector<32x64xf32>, vector<14x64xf32> -> vector<14x64xf32>
      %39 = arith.addf %34, %38 : vector<14x64xf32>
      %40 = vector.extract_strided_slice %29 {offsets = [2, 0], sizes = [14, 32], strides = [1, 1]} : vector<16x32xf32> to vector<14x32xf32>
      %c5 = arith.constant 5 : index
      %c0_29 = arith.constant 0 : index
      %c0_30 = arith.constant 0 : index
      %41 = vector.load %arg2[%c5, %c0_29, %c0_30] : memref<9x32x64xf32, #tpu.memory_space<vmem>>, vector<1x32x64xf32>
      %42 = vector.shape_cast %41 : vector<1x32x64xf32> to vector<32x64xf32>
      %cst_31 = arith.constant dense<0.000000e+00> : vector<14x64xf32>
      %43 = tpu.matmul %40, %42, %cst_31 {dimension_numbers = #tpu.dot_dimension_numbers<[1], [0], [0], [1], [0, 0, 1, 1], [], []>} : vector<14x32xf32>, vector<32x64xf32>, vector<14x64xf32> -> vector<14x64xf32>
      %44 = arith.addf %39, %43 : vector<14x64xf32>
      %c2_i32_32 = arith.constant 2 : i32
      %45 = arith.muli %c2_i32_32, %arg6 : i32
      %c0_i32_33 = arith.constant 0 : i32
      %46 = arith.addi %45, %c0_i32_33 : i32
      %c2_i32_34 = arith.constant 2 : i32
      %47 = arith.addi %46, %c2_i32_34 : i32
      %c0_35 = arith.constant 0 : index
      %48 = arith.index_cast %47 : i32 to index
      %c0_36 = arith.constant 0 : index
      %c0_37 = arith.constant 0 : index
      %49 = vector.load %arg1[%c0_35, %48, %c0_36, %c0_37] : memref<1x16x16x32xf32, #tpu.memory_space<vmem>>, vector<1x1x16x32xf32>
      %50 = vector.shape_cast %49 : vector<1x1x16x32xf32> to vector<16x32xf32>
      %51 = vector.extract_strided_slice %50 {offsets = [0, 0], sizes = [14, 32], strides = [1, 1]} : vector<16x32xf32> to vector<14x32xf32>
      %c6 = arith.constant 6 : index
      %c0_38 = arith.constant 0 : index
      %c0_39 = arith.constant 0 : index
      %52 = vector.load %arg2[%c6, %c0_38, %c0_39] : memref<9x32x64xf32, #tpu.memory_space<vmem>>, vector<1x32x64xf32>
      %53 = vector.shape_cast %52 : vector<1x32x64xf32> to vector<32x64xf32>
      %cst_40 = arith.constant dense<0.000000e+00> : vector<14x64xf32>
      %54 = tpu.matmul %51, %53, %cst_40 {dimension_numbers = #tpu.dot_dimension_numbers<[1], [0], [0], [1], [0, 0, 1, 1], [], []>} : vector<14x32xf32>, vector<32x64xf32>, vector<14x64xf32> -> vector<14x64xf32>
      %55 = arith.addf %44, %54 : vector<14x64xf32>
      %56 = vector.extract_strided_slice %50 {offsets = [1, 0], sizes = [14, 32], strides = [1, 1]} : vector<16x32xf32> to vector<14x32xf32>
      %c7 = arith.constant 7 : index
      %c0_41 = arith.constant 0 : index
      %c0_42 = arith.constant 0 : index
      %57 = vector.load %arg2[%c7, %c0_41, %c0_42] : memref<9x32x64xf32, #tpu.memory_space<vmem>>, vector<1x32x64xf32>
      %58 = vector.shape_cast %57 : vector<1x32x64xf32> to vector<32x64xf32>
      %cst_43 = arith.constant dense<0.000000e+00> : vector<14x64xf32>
      %59 = tpu.matmul %56, %58, %cst_43 {dimension_numbers = #tpu.dot_dimension_numbers<[1], [0], [0], [1], [0, 0, 1, 1], [], []>} : vector<14x32xf32>, vector<32x64xf32>, vector<14x64xf32> -> vector<14x64xf32>
      %60 = arith.addf %55, %59 : vector<14x64xf32>
      %61 = vector.extract_strided_slice %50 {offsets = [2, 0], sizes = [14, 32], strides = [1, 1]} : vector<16x32xf32> to vector<14x32xf32>
      %c8 = arith.constant 8 : index
      %c0_44 = arith.constant 0 : index
      %c0_45 = arith.constant 0 : index
      %62 = vector.load %arg2[%c8, %c0_44, %c0_45] : memref<9x32x64xf32, #tpu.memory_space<vmem>>, vector<1x32x64xf32>
      %63 = vector.shape_cast %62 : vector<1x32x64xf32> to vector<32x64xf32>
      %cst_46 = arith.constant dense<0.000000e+00> : vector<14x64xf32>
      %64 = tpu.matmul %61, %63, %cst_46 {dimension_numbers = #tpu.dot_dimension_numbers<[1], [0], [0], [1], [0, 0, 1, 1], [], []>} : vector<14x32xf32>, vector<32x64xf32>, vector<14x64xf32> -> vector<14x64xf32>
      %65 = arith.addf %60, %64 : vector<14x64xf32>
      %66 = vector.broadcast %0 : vector<1x64xf32> to vector<14x64xf32>
      %67 = arith.addf %65, %66 : vector<14x64xf32>
      %cst_47 = arith.constant 0.000000e+00 : f32
      %68 = vector.broadcast %cst_47 : f32 to vector<14x64xf32>
      %69 = arith.maximumf %67, %68 : vector<14x64xf32>
      %cst_48 = arith.constant 0.000000e+00 : f32
      %70 = vector.broadcast %cst_48 : f32 to vector<14x64xf32>
      %c2_i32_49 = arith.constant 2 : i32
      %71 = arith.muli %c2_i32_49, %arg6 : i32
      %c1_i32_50 = arith.constant 1 : i32
      %72 = arith.addi %71, %c1_i32_50 : i32
      %c0_i32_51 = arith.constant 0 : i32
      %73 = arith.addi %72, %c0_i32_51 : i32
      %c0_52 = arith.constant 0 : index
      %74 = arith.index_cast %73 : i32 to index
      %c0_53 = arith.constant 0 : index
      %c0_54 = arith.constant 0 : index
      %75 = vector.load %arg1[%c0_52, %74, %c0_53, %c0_54] : memref<1x16x16x32xf32, #tpu.memory_space<vmem>>, vector<1x1x16x32xf32>
      %76 = vector.shape_cast %75 : vector<1x1x16x32xf32> to vector<16x32xf32>
      %77 = vector.extract_strided_slice %76 {offsets = [0, 0], sizes = [14, 32], strides = [1, 1]} : vector<16x32xf32> to vector<14x32xf32>
      %c0_55 = arith.constant 0 : index
      %c0_56 = arith.constant 0 : index
      %c0_57 = arith.constant 0 : index
      %78 = vector.load %arg2[%c0_55, %c0_56, %c0_57] : memref<9x32x64xf32, #tpu.memory_space<vmem>>, vector<1x32x64xf32>
      %79 = vector.shape_cast %78 : vector<1x32x64xf32> to vector<32x64xf32>
      %cst_58 = arith.constant dense<0.000000e+00> : vector<14x64xf32>
      %80 = tpu.matmul %77, %79, %cst_58 {dimension_numbers = #tpu.dot_dimension_numbers<[1], [0], [0], [1], [0, 0, 1, 1], [], []>} : vector<14x32xf32>, vector<32x64xf32>, vector<14x64xf32> -> vector<14x64xf32>
      %81 = arith.addf %70, %80 : vector<14x64xf32>
      %82 = vector.extract_strided_slice %76 {offsets = [1, 0], sizes = [14, 32], strides = [1, 1]} : vector<16x32xf32> to vector<14x32xf32>
      %c1_59 = arith.constant 1 : index
      %c0_60 = arith.constant 0 : index
      %c0_61 = arith.constant 0 : index
      %83 = vector.load %arg2[%c1_59, %c0_60, %c0_61] : memref<9x32x64xf32, #tpu.memory_space<vmem>>, vector<1x32x64xf32>
      %84 = vector.shape_cast %83 : vector<1x32x64xf32> to vector<32x64xf32>
      %cst_62 = arith.constant dense<0.000000e+00> : vector<14x64xf32>
      %85 = tpu.matmul %82, %84, %cst_62 {dimension_numbers = #tpu.dot_dimension_numbers<[1], [0], [0], [1], [0, 0, 1, 1], [], []>} : vector<14x32xf32>, vector<32x64xf32>, vector<14x64xf32> -> vector<14x64xf32>
      %86 = arith.addf %81, %85 : vector<14x64xf32>
      %87 = vector.extract_strided_slice %76 {offsets = [2, 0], sizes = [14, 32], strides = [1, 1]} : vector<16x32xf32> to vector<14x32xf32>
      %c2_63 = arith.constant 2 : index
      %c0_64 = arith.constant 0 : index
      %c0_65 = arith.constant 0 : index
      %88 = vector.load %arg2[%c2_63, %c0_64, %c0_65] : memref<9x32x64xf32, #tpu.memory_space<vmem>>, vector<1x32x64xf32>
      %89 = vector.shape_cast %88 : vector<1x32x64xf32> to vector<32x64xf32>
      %cst_66 = arith.constant dense<0.000000e+00> : vector<14x64xf32>
      %90 = tpu.matmul %87, %89, %cst_66 {dimension_numbers = #tpu.dot_dimension_numbers<[1], [0], [0], [1], [0, 0, 1, 1], [], []>} : vector<14x32xf32>, vector<32x64xf32>, vector<14x64xf32> -> vector<14x64xf32>
      %91 = arith.addf %86, %90 : vector<14x64xf32>
      %c2_i32_67 = arith.constant 2 : i32
      %92 = arith.muli %c2_i32_67, %arg6 : i32
      %c1_i32_68 = arith.constant 1 : i32
      %93 = arith.addi %92, %c1_i32_68 : i32
      %c1_i32_69 = arith.constant 1 : i32
      %94 = arith.addi %93, %c1_i32_69 : i32
      %c0_70 = arith.constant 0 : index
      %95 = arith.index_cast %94 : i32 to index
      %c0_71 = arith.constant 0 : index
      %c0_72 = arith.constant 0 : index
      %96 = vector.load %arg1[%c0_70, %95, %c0_71, %c0_72] : memref<1x16x16x32xf32, #tpu.memory_space<vmem>>, vector<1x1x16x32xf32>
      %97 = vector.shape_cast %96 : vector<1x1x16x32xf32> to vector<16x32xf32>
      %98 = vector.extract_strided_slice %97 {offsets = [0, 0], sizes = [14, 32], strides = [1, 1]} : vector<16x32xf32> to vector<14x32xf32>
      %c3_73 = arith.constant 3 : index
      %c0_74 = arith.constant 0 : index
      %c0_75 = arith.constant 0 : index
      %99 = vector.load %arg2[%c3_73, %c0_74, %c0_75] : memref<9x32x64xf32, #tpu.memory_space<vmem>>, vector<1x32x64xf32>
      %100 = vector.shape_cast %99 : vector<1x32x64xf32> to vector<32x64xf32>
      %cst_76 = arith.constant dense<0.000000e+00> : vector<14x64xf32>
      %101 = tpu.matmul %98, %100, %cst_76 {dimension_numbers = #tpu.dot_dimension_numbers<[1], [0], [0], [1], [0, 0, 1, 1], [], []>} : vector<14x32xf32>, vector<32x64xf32>, vector<14x64xf32> -> vector<14x64xf32>
      %102 = arith.addf %91, %101 : vector<14x64xf32>
      %103 = vector.extract_strided_slice %97 {offsets = [1, 0], sizes = [14, 32], strides = [1, 1]} : vector<16x32xf32> to vector<14x32xf32>
      %c4_77 = arith.constant 4 : index
      %c0_78 = arith.constant 0 : index
      %c0_79 = arith.constant 0 : index
      %104 = vector.load %arg2[%c4_77, %c0_78, %c0_79] : memref<9x32x64xf32, #tpu.memory_space<vmem>>, vector<1x32x64xf32>
      %105 = vector.shape_cast %104 : vector<1x32x64xf32> to vector<32x64xf32>
      %cst_80 = arith.constant dense<0.000000e+00> : vector<14x64xf32>
      %106 = tpu.matmul %103, %105, %cst_80 {dimension_numbers = #tpu.dot_dimension_numbers<[1], [0], [0], [1], [0, 0, 1, 1], [], []>} : vector<14x32xf32>, vector<32x64xf32>, vector<14x64xf32> -> vector<14x64xf32>
      %107 = arith.addf %102, %106 : vector<14x64xf32>
      %108 = vector.extract_strided_slice %97 {offsets = [2, 0], sizes = [14, 32], strides = [1, 1]} : vector<16x32xf32> to vector<14x32xf32>
      %c5_81 = arith.constant 5 : index
      %c0_82 = arith.constant 0 : index
      %c0_83 = arith.constant 0 : index
      %109 = vector.load %arg2[%c5_81, %c0_82, %c0_83] : memref<9x32x64xf32, #tpu.memory_space<vmem>>, vector<1x32x64xf32>
      %110 = vector.shape_cast %109 : vector<1x32x64xf32> to vector<32x64xf32>
      %cst_84 = arith.constant dense<0.000000e+00> : vector<14x64xf32>
      %111 = tpu.matmul %108, %110, %cst_84 {dimension_numbers = #tpu.dot_dimension_numbers<[1], [0], [0], [1], [0, 0, 1, 1], [], []>} : vector<14x32xf32>, vector<32x64xf32>, vector<14x64xf32> -> vector<14x64xf32>
      %112 = arith.addf %107, %111 : vector<14x64xf32>
      %c2_i32_85 = arith.constant 2 : i32
      %113 = arith.muli %c2_i32_85, %arg6 : i32
      %c1_i32_86 = arith.constant 1 : i32
      %114 = arith.addi %113, %c1_i32_86 : i32
      %c2_i32_87 = arith.constant 2 : i32
      %115 = arith.addi %114, %c2_i32_87 : i32
      %c0_88 = arith.constant 0 : index
      %116 = arith.index_cast %115 : i32 to index
      %c0_89 = arith.constant 0 : index
      %c0_90 = arith.constant 0 : index
      %117 = vector.load %arg1[%c0_88, %116, %c0_89, %c0_90] : memref<1x16x16x32xf32, #tpu.memory_space<vmem>>, vector<1x1x16x32xf32>
      %118 = vector.shape_cast %117 : vector<1x1x16x32xf32> to vector<16x32xf32>
      %119 = vector.extract_strided_slice %118 {offsets = [0, 0], sizes = [14, 32], strides = [1, 1]} : vector<16x32xf32> to vector<14x32xf32>
      %c6_91 = arith.constant 6 : index
      %c0_92 = arith.constant 0 : index
      %c0_93 = arith.constant 0 : index
      %120 = vector.load %arg2[%c6_91, %c0_92, %c0_93] : memref<9x32x64xf32, #tpu.memory_space<vmem>>, vector<1x32x64xf32>
      %121 = vector.shape_cast %120 : vector<1x32x64xf32> to vector<32x64xf32>
      %cst_94 = arith.constant dense<0.000000e+00> : vector<14x64xf32>
      %122 = tpu.matmul %119, %121, %cst_94 {dimension_numbers = #tpu.dot_dimension_numbers<[1], [0], [0], [1], [0, 0, 1, 1], [], []>} : vector<14x32xf32>, vector<32x64xf32>, vector<14x64xf32> -> vector<14x64xf32>
      %123 = arith.addf %112, %122 : vector<14x64xf32>
      %124 = vector.extract_strided_slice %118 {offsets = [1, 0], sizes = [14, 32], strides = [1, 1]} : vector<16x32xf32> to vector<14x32xf32>
      %c7_95 = arith.constant 7 : index
      %c0_96 = arith.constant 0 : index
      %c0_97 = arith.constant 0 : index
      %125 = vector.load %arg2[%c7_95, %c0_96, %c0_97] : memref<9x32x64xf32, #tpu.memory_space<vmem>>, vector<1x32x64xf32>
      %126 = vector.shape_cast %125 : vector<1x32x64xf32> to vector<32x64xf32>
      %cst_98 = arith.constant dense<0.000000e+00> : vector<14x64xf32>
      %127 = tpu.matmul %124, %126, %cst_98 {dimension_numbers = #tpu.dot_dimension_numbers<[1], [0], [0], [1], [0, 0, 1, 1], [], []>} : vector<14x32xf32>, vector<32x64xf32>, vector<14x64xf32> -> vector<14x64xf32>
      %128 = arith.addf %123, %127 : vector<14x64xf32>
      %129 = vector.extract_strided_slice %118 {offsets = [2, 0], sizes = [14, 32], strides = [1, 1]} : vector<16x32xf32> to vector<14x32xf32>
      %c8_99 = arith.constant 8 : index
      %c0_100 = arith.constant 0 : index
      %c0_101 = arith.constant 0 : index
      %130 = vector.load %arg2[%c8_99, %c0_100, %c0_101] : memref<9x32x64xf32, #tpu.memory_space<vmem>>, vector<1x32x64xf32>
      %131 = vector.shape_cast %130 : vector<1x32x64xf32> to vector<32x64xf32>
      %cst_102 = arith.constant dense<0.000000e+00> : vector<14x64xf32>
      %132 = tpu.matmul %129, %131, %cst_102 {dimension_numbers = #tpu.dot_dimension_numbers<[1], [0], [0], [1], [0, 0, 1, 1], [], []>} : vector<14x32xf32>, vector<32x64xf32>, vector<14x64xf32> -> vector<14x64xf32>
      %133 = arith.addf %128, %132 : vector<14x64xf32>
      %134 = vector.broadcast %0 : vector<1x64xf32> to vector<14x64xf32>
      %135 = arith.addf %133, %134 : vector<14x64xf32>
      %cst_103 = arith.constant 0.000000e+00 : f32
      %136 = vector.broadcast %cst_103 : f32 to vector<14x64xf32>
      %137 = arith.maximumf %135, %136 : vector<14x64xf32>
      %138 = arith.maximumf %69, %137 : vector<14x64xf32>
      %c0_104 = arith.constant 0 : index
      %c0_105 = arith.constant 0 : index
      %139 = vector.load %arg5[%c0_104, %c0_105] : memref<14x64xf32, #tpu.memory_space<vmem>>, vector<14x64xf32>
      tpu.vector_store %arg5[%c0_104, %c0_105], %138 {strides = array<i32>} : memref<14x64xf32, #tpu.memory_space<vmem>>, vector<14x64xf32>,
      %c0_106 = arith.constant 0 : index
      %c0_107 = arith.constant 0 : index
      %140 = tpu.strided_load %arg5[%c0_106, %c0_107] {strides = array<i32: 2, 1>} : memref<14x64xf32, #tpu.memory_space<vmem>>, vector<7x64xf32>
      %c1_108 = arith.constant 1 : index
      %c0_109 = arith.constant 0 : index
      %141 = tpu.strided_load %arg5[%c1_108, %c0_109] {strides = array<i32: 2, 1>} : memref<14x64xf32, #tpu.memory_space<vmem>>, vector<7x64xf32>
      %142 = arith.maximumf %140, %141 : vector<7x64xf32>
      %c0_110 = arith.constant 0 : index
      %143 = arith.index_cast %arg6 : i32 to index
      %c0_111 = arith.constant 0 : index
      %c0_112 = arith.constant 0 : index
      %144 = vector.load %arg4[%c0_110, %143, %c0_111, %c0_112] : memref<1x7x7x64xf32, #tpu.memory_space<vmem>>, vector<1x1x7x64xf32>
      %145 = vector.shape_cast %144 : vector<1x1x7x64xf32> to vector<7x64xf32>
      %146 = vector.shape_cast %142 : vector<7x64xf32> to vector<1x1x7x64xf32>
      tpu.vector_store %arg4[%c0_110, %143, %c0_111, %c0_112], %146 {strides = array<i32>} : memref<1x7x7x64xf32, #tpu.memory_space<vmem>>, vector<1x1x7x64xf32>,
    }
    %c7_i32_1 = arith.constant 7 : i32
    return
  }
  func.func @transform_0(%arg0: i32) -> (i32, i32, i32, i32) {
    %c0_i32 = arith.constant 0 : i32
    %c0_i32_0 = arith.constant 0 : i32
    %c0_i32_1 = arith.constant 0 : i32
    %c0_i32_2 = arith.constant 0 : i32
    return %arg0, %c0_i32, %c0_i32_0, %c0_i32_1 : i32, i32, i32, i32
  }
  func.func @transform_1(%arg0: i32) -> (i32, i32, i32) {
    %c0_i32 = arith.constant 0 : i32
    %c0_i32_0 = arith.constant 0 : i32
    %c0_i32_1 = arith.constant 0 : i32
    %c0_i32_2 = arith.constant 0 : i32
    return %c0_i32, %c0_i32_0, %c0_i32_1 : i32, i32, i32
  }
  func.func @transform_2(%arg0: i32) -> (i32, i32) {
    %c0_i32 = arith.constant 0 : i32
    %c0_i32_0 = arith.constant 0 : i32
    %c0_i32_1 = arith.constant 0 : i32
    return %c0_i32, %c0_i32_0 : i32, i32
  }
  func.func @transform_3(%arg0: i32) -> (i32, i32, i32, i32) {
    %c0_i32 = arith.constant 0 : i32
    %c0_i32_0 = arith.constant 0 : i32
    %c0_i32_1 = arith.constant 0 : i32
    %c0_i32_2 = arith.constant 0 : i32
    return %arg0, %c0_i32, %c0_i32_0, %c0_i32_1 : i32, i32, i32, i32
  }
}

module attributes {stable_mosaic.version = 11 : i64} {
  func.func @_mlp_kernel(%arg0: i32, %arg1: memref<2x3136xf32, #tpu.memory_space<vmem>>, %arg2: memref<3136x128xf32, #tpu.memory_space<vmem>>, %arg3: memref<1x128xf32, #tpu.memory_space<vmem>>, %arg4: memref<128x10xf32, #tpu.memory_space<vmem>>, %arg5: memref<1x10xf32, #tpu.memory_space<vmem>>, %arg6: memref<2x10xf32, #tpu.memory_space<vmem>>) attributes {dimension_semantics = [#tpu.dimension_semantics<parallel>], iteration_bounds = array<i64: 1>, scalar_prefetch = 0 : i64, scratch_operands = 0 : i64, tpu.core_type = #tpu.core_type<tc>, window_params = [{transform_indices = @transform_0, window_bounds = array<i64: 2, 3136>}, {pipeline_mode = #tpu.pipeline_mode<synchronous>, transform_indices = @transform_1, window_bounds = array<i64: 3136, 128>}, {pipeline_mode = #tpu.pipeline_mode<synchronous>, transform_indices = @transform_2, window_bounds = array<i64: 1, 128>}, {pipeline_mode = #tpu.pipeline_mode<synchronous>, transform_indices = @transform_3, window_bounds = array<i64: 128, 10>}, {pipeline_mode = #tpu.pipeline_mode<synchronous>, transform_indices = @transform_4, window_bounds = array<i64: 1, 10>}, {transform_indices = @transform_5, window_bounds = array<i64: 2, 10>}]} {
    %c0 = arith.constant 0 : index
    %c0_0 = arith.constant 0 : index
    %0 = vector.load %arg1[%c0, %c0_0] : memref<2x3136xf32, #tpu.memory_space<vmem>>, vector<2x3136xf32>
    %c0_1 = arith.constant 0 : index
    %c0_2 = arith.constant 0 : index
    %1 = vector.load %arg2[%c0_1, %c0_2] : memref<3136x128xf32, #tpu.memory_space<vmem>>, vector<3136x128xf32>
    %cst = arith.constant dense<0.000000e+00> : vector<2x128xf32>
    %2 = tpu.matmul %0, %1, %cst {dimension_numbers = #tpu.dot_dimension_numbers<[1], [0], [0], [1], [0, 0, 1, 1], [], []>} : vector<2x3136xf32>, vector<3136x128xf32>, vector<2x128xf32> -> vector<2x128xf32>
    %c0_3 = arith.constant 0 : index
    %c0_4 = arith.constant 0 : index
    %3 = vector.load %arg3[%c0_3, %c0_4] : memref<1x128xf32, #tpu.memory_space<vmem>>, vector<1x128xf32>
    %4 = vector.broadcast %3 : vector<1x128xf32> to vector<2x128xf32>
    %5 = arith.addf %2, %4 : vector<2x128xf32>
    %cst_5 = arith.constant 0.000000e+00 : f32
    %6 = vector.broadcast %cst_5 : f32 to vector<2x128xf32>
    %7 = arith.maximumf %5, %6 : vector<2x128xf32>
    %c0_6 = arith.constant 0 : index
    %c0_7 = arith.constant 0 : index
    %8 = vector.load %arg4[%c0_6, %c0_7] : memref<128x10xf32, #tpu.memory_space<vmem>>, vector<128x10xf32>
    %cst_8 = arith.constant dense<0.000000e+00> : vector<2x10xf32>
    %9 = tpu.matmul %7, %8, %cst_8 {dimension_numbers = #tpu.dot_dimension_numbers<[1], [0], [0], [1], [0, 0, 1, 1], [], []>} : vector<2x128xf32>, vector<128x10xf32>, vector<2x10xf32> -> vector<2x10xf32>
    %c0_9 = arith.constant 0 : index
    %c0_10 = arith.constant 0 : index
    %10 = vector.load %arg5[%c0_9, %c0_10] : memref<1x10xf32, #tpu.memory_space<vmem>>, vector<1x10xf32>
    %11 = vector.broadcast %10 : vector<1x10xf32> to vector<2x10xf32>
    %12 = arith.addf %9, %11 : vector<2x10xf32>
    %c0_11 = arith.constant 0 : index
    %c0_12 = arith.constant 0 : index
    %13 = vector.load %arg6[%c0_11, %c0_12] : memref<2x10xf32, #tpu.memory_space<vmem>>, vector<2x10xf32>
    tpu.vector_store %arg6[%c0_11, %c0_12], %12 {strides = array<i32>} : memref<2x10xf32, #tpu.memory_space<vmem>>, vector<2x10xf32>,
    return
  }
  func.func @transform_0(%arg0: i32) -> (i32, i32) {
    %c0_i32 = arith.constant 0 : i32
    %c0_i32_0 = arith.constant 0 : i32
    return %arg0, %c0_i32 : i32, i32
  }
  func.func @transform_1(%arg0: i32) -> (i32, i32) {
    %c0_i32 = arith.constant 0 : i32
    %c0_i32_0 = arith.constant 0 : i32
    %c0_i32_1 = arith.constant 0 : i32
    return %c0_i32, %c0_i32_0 : i32, i32
  }
  func.func @transform_2(%arg0: i32) -> (i32, i32) {
    %c0_i32 = arith.constant 0 : i32
    %c0_i32_0 = arith.constant 0 : i32
    %c0_i32_1 = arith.constant 0 : i32
    return %c0_i32, %c0_i32_0 : i32, i32
  }
  func.func @transform_3(%arg0: i32) -> (i32, i32) {
    %c0_i32 = arith.constant 0 : i32
    %c0_i32_0 = arith.constant 0 : i32
    %c0_i32_1 = arith.constant 0 : i32
    return %c0_i32, %c0_i32_0 : i32, i32
  }
  func.func @transform_4(%arg0: i32) -> (i32, i32) {
    %c0_i32 = arith.constant 0 : i32
    %c0_i32_0 = arith.constant 0 : i32
    %c0_i32_1 = arith.constant 0 : i32
    return %c0_i32, %c0_i32_0 : i32, i32
  }
  func.func @transform_5(%arg0: i32) -> (i32, i32) {
    %c0_i32 = arith.constant 0 : i32
    %c0_i32_0 = arith.constant 0 : i32
    return %arg0, %c0_i32 : i32, i32
  }
}

</mosaic_0001>

<llo_original>
// kernel: cnn_forward.3
$region0: #{cnn_forward.3}
  #allocation0 [shape = 'u32[]', space=smem, size = 0x4, offset = 0x4, fixed_abs, tag = 'smem constant byte address 0x4 - core index']
  #allocation1 [shape = 'u32[72,128]{1,0:T(1,128)}', space=vmem, size = 0x9000, scoped, tag = 'internal scratch']
  #allocation2 [shape = 'f32[28,32]{1,0:T(8,128)}', space=vmem, size = 0x4000, scoped, tag = 'scratch operand']
  %s0 = inlined_call_operand.vmem [shape: f32[2,30,30,1], index: 0, kind: input, shape index: {}]
  %s1 = inlined_call_operand.vmem [shape: f32[9,1,32], index: 1, kind: input, shape index: {}]
  %s2 = inlined_call_operand.vmem [shape: f32[1,32], index: 2, kind: input, shape index: {}]
  %s3 = inlined_call_operand.vmem [shape: f32[2,14,14,32], index: 3, kind: output, shape index: {}]
  %s4 = sld [smem:[#allocation0]]
  $region52: #{cnn_forward.3} parent=0
    _
  %s6 = ssub.s32 1, %s4
  %s7 = scalar_select 0, %s6, %s4
  loop: start=0, step=1, limit=4
  $region2: #{cnn_forward.3} parent=0 // loop_pre_header
    _
  $region3: #{cnn_forward.3} parent=0 // loop_header
    %s9 = sphi 0, %s13
    %p10 = scmp.ge.s32.totalorder %s9, 4
    %s19 = sphi 0, %s21
    %s22 = sphi 0, %s19
    %s23 = sphi 0, %s22
    %s39 = sphi 0, %s23
    %s43 = sphi 0, %s43
    %s45 = sphi 0, %s43
    %s46 = sphi 0, %s45
    %s60 = sphi 0, %s46
    %s64 = sphi 0, %s64
    %s66 = sphi 0, %s64
    %s67 = sphi 0, %s66
    %s81 = sphi 0, %s67
    %s87 = sphi 0, %s89
    %s90 = sphi 0, %s87
    %s91 = sphi 0, %s90
    %s107 = sphi 0, %s91
  $region4: #{cnn_forward.3} parent=0 // loop_header_branch
    %12 = sbr.rel (%p10) target = $region8
  $region5: #{cnn_forward.3} parent=0 // loop_body
    %s14 = ssub.s32 %s9, 1
    %s15 = ssub.s32 %s9, 2
    %s16 = sadd.s32 %s9, 1
    %s17 = ssub.s32 %s9, %s16
    %p18 = scmp.eq.s32.totalorder %s17, 0
    %s20 = sadd.s32 %s19, 1
    %s21 = scalar_select %p18, %s19, %s20
    %p24 = pneg %p18
    %p25 = scmp.eq.s32.totalorder %s9, 1
    %p26 = por %p24, %p25
    %p27 = scmp.ne.s32.totalorder %s19, %s22
    %p28 = scmp.eq.s32.totalorder %s9, 0
    %p29 = por %p27, %p28
    %p30 = scmp.ne.s32.totalorder %s19, %s22
    %p31 = scmp.eq.s32.totalorder %s14, 1
    %p32 = por %p30, %p31
    %p33 = scmp.ne.s32.totalorder %s22, %s23
    %p34 = scmp.eq.s32.totalorder %s14, 0
    %p35 = por %p33, %p34
    %p36 = scmp.ne.s32.totalorder %s22, %s23
    %p37 = scmp.eq.s32.totalorder %s15, 1
    %p38 = por %p36, %p37
    %p40 = scmp.ne.s32.totalorder %s23, %s39
    %p41 = scmp.eq.s32.totalorder %s15, 0
    %p42 = por %p40, %p41
    %s44 = sadd.s32 %s43, 1
    %p47 = scmp.eq.s32.totalorder %s9, 1
    %p48 = scmp.ne.s32.totalorder %s43, %s45
    %p49 = scmp.eq.s32.totalorder %s9, 0
    %p50 = por %p48, %p49
    %p51 = scmp.ne.s32.totalorder %s43, %s45
    %p52 = scmp.eq.s32.totalorder %s14, 1
    %p53 = por %p51, %p52
    %p54 = scmp.ne.s32.totalorder %s45, %s46
    %p55 = scmp.eq.s32.totalorder %s14, 0
    %p56 = por %p54, %p55
    %p57 = scmp.ne.s32.totalorder %s45, %s46
    %p58 = scmp.eq.s32.totalorder %s15, 1
    %p59 = por %p57, %p58
    %p61 = scmp.ne.s32.totalorder %s46, %s60
    %p62 = scmp.eq.s32.totalorder %s15, 0
    %p63 = por %p61, %p62
    %s65 = sadd.s32 %s64, 1
    %p68 = scmp.eq.s32.totalorder %s9, 1
    %p69 = scmp.ne.s32.totalorder %s64, %s66
    %p70 = scmp.eq.s32.totalorder %s9, 0
    %p71 = por %p69, %p70
    %p72 = scmp.ne.s32.totalorder %s64, %s66
    %p73 = scmp.eq.s32.totalorder %s14, 1
    %p74 = por %p72, %p73
    %p75 = scmp.ne.s32.totalorder %s66, %s67
    %p76 = scmp.eq.s32.totalorder %s14, 0
    %p77 = por %p75, %p76
    %p78 = scmp.ne.s32.totalorder %s66, %s67
    %p79 = scmp.eq.s32.totalorder %s15, 1
    %p80 = por %p78, %p79
    %p82 = scmp.ne.s32.totalorder %s67, %s81
    %p83 = scmp.eq.s32.totalorder %s15, 0
    %p84 = por %p82, %p83
    %s85 = ssub.s32 %s9, %s16
    %p86 = scmp.eq.s32.totalorder %s85, 0
    %s88 = sadd.s32 %s87, 1
    %s89 = scalar_select %p86, %s87, %s88
    %p92 = pneg %p86
    %p93 = scmp.eq.s32.totalorder %s9, 1
    %p94 = por %p92, %p93
    %p95 = scmp.ne.s32.totalorder %s87, %s90
    %p96 = scmp.eq.s32.totalorder %s9, 0
    %p97 = por %p95, %p96
    %p98 = scmp.ne.s32.totalorder %s87, %s90
    %p99 = scmp.eq.s32.totalorder %s14, 1
    %p100 = por %p98, %p99
    %p101 = scmp.ne.s32.totalorder %s90, %s91
    %p102 = scmp.eq.s32.totalorder %s14, 0
    %p103 = por %p101, %p102
    %p104 = scmp.ne.s32.totalorder %s90, %s91
    %p105 = scmp.eq.s32.totalorder %s15, 1
    %p106 = por %p104, %p105
    %p108 = scmp.ne.s32.totalorder %s91, %s107
    %p109 = scmp.eq.s32.totalorder %s15, 0
    %p110 = por %p108, %p109
    %p111 = scmp.le.s32.totalorder 1, %s9
    %p112 = scmp.lt.s32.totalorder %s9, 3
    %p113 = pnand %p111, %p112
    %p114 = pneg %p113
    // Predicated region
    $region9: #{cnn_forward.3} parent=5 // pred_check
      _
    $region10: #{cnn_forward.3} parent=5 // pred_check_branch
      %116 = sbr.rel (%p113) target = $region12
    $region11: #{cnn_forward.3} parent=5 // pred_region
      %s117 = ssub.s32 %s9, 1
      // Predicated region
      $region13: #{cnn_forward.3} parent=11 // pred_check
        %p118 = pneg %p56
      $region14: #{cnn_forward.3} parent=11 // pred_check_branch
        %120 = sbr.rel (%p118) target = $region16
      $region15: #{cnn_forward.3} parent=11 // pred_region
        _
      $region16: #{cnn_forward.3} parent=11 // pred_fallthru
        _
      // Predicated region
      $region17: #{cnn_forward.3} parent=11 // pred_check
        %p121 = pneg %p77
      $region18: #{cnn_forward.3} parent=11 // pred_check_branch
        %123 = sbr.rel (%p121) target = $region20
      $region19: #{cnn_forward.3} parent=11 // pred_region
        _
      $region20: #{cnn_forward.3} parent=11 // pred_fallthru
        _
    $region12: #{cnn_forward.3} parent=5 // pred_fallthru
      _
    %p124 = scmp.lt.s32.totalorder %s9, 2
    // Predicated region
    $region21: #{cnn_forward.3} parent=5 // pred_check
      %p125 = pneg %p124
    $region22: #{cnn_forward.3} parent=5 // pred_check_branch
      %127 = sbr.rel (%p125) target = $region24
    $region23: #{cnn_forward.3} parent=5 // pred_region
      // Predicated region
      $region25: #{cnn_forward.3} parent=23 // pred_check
        %p128 = pneg %p29
      $region26: #{cnn_forward.3} parent=23 // pred_check_branch
        %130 = sbr.rel (%p128) target = $region28
      $region27: #{cnn_forward.3} parent=23 // pred_region
        %p131 = scmp.lt.s32.totalorder %s9, 1
        %s132 = scalar_select %p131, %s9, 1
        %s133 = smul.addr %s132, 120
        %s134 = smul.addr %s133, 8
        %s135 = scalar_lea.vmem %s0, %s134
      $region28: #{cnn_forward.3} parent=23 // pred_fallthru
        _
    $region24: #{cnn_forward.3} parent=5 // pred_fallthru
      _
    %p136 = scmp.le.s32.totalorder 1, %s9
    %p137 = scmp.lt.s32.totalorder %s9, 3
    %p138 = pnand %p136, %p137
    %p139 = pneg %p138
    // Predicated region
    $region29: #{cnn_forward.3} parent=5 // pred_check
      _
    $region30: #{cnn_forward.3} parent=5 // pred_check_branch
      %141 = sbr.rel (%p138) target = $region32
    $region31: #{cnn_forward.3} parent=5 // pred_region
      %s142 = ssub.s32 %s9, 1
      %p143 = scmp.lt.s32.totalorder %s14, 1
      %s144 = scalar_select %p143, %s14, 1
      %s145 = smul.addr %s144, 120
      %s146 = smul.addr %s145, 8
      %s147 = scalar_lea.vmem %s0, %s146
      %p148 = pneg %p35
      %p149 = pneg %p32
      %p150 = pneg %p56
      %p151 = pneg %p53
      %p152 = pneg %p77
      %p153 = pneg %p74
      %p154 = pneg %p103
      %p155 = pneg %p100
      %p156 = scmp.lt.s32.totalorder %s14, 1
      %s157 = scalar_select %p156, %s14, 1
      %s158 = smul.addr %s157, 28
      %s159 = smul.addr %s158, 8
      %s160 = scalar_lea.vmem %s3, %s159
      %p161 = scmp.lt.s32.totalorder %s14, 1
      %s162 = scalar_select %p161, %s14, 1
      %s163 = smul.addr %s162, 120
      %s164 = smul.addr %s163, 8
      %s165 = scalar_lea.vmem %s0, %s164
      %p166 = scmp.lt.s32.totalorder %s14, 1
      %s167 = scalar_select %p166, %s14, 1
      %s168 = smul.addr %s167, 28
      %s169 = smul.addr %s168, 8
      %s170 = scalar_lea.vmem %s3, %s169
      %v171 = vld [vmem:[%s2] sm:$0x1]
      loop: start=0, step=1, limit=14
      $region33: #{cnn_forward.3} parent=31 // loop_pre_header
        _
      $region34: #{cnn_forward.3} parent=31 // loop_header
        %s173 = sphi 0, %s177
        %p174 = scmp.ge.s32.totalorder %s173, 14
      $region35: #{cnn_forward.3} parent=31 // loop_header_branch
        %176 = sbr.rel (%p174) target = $region39
      $region36: #{cnn_forward.3} parent=31 // loop_body
        %s178 = smul.u32 %s173, 2
        %s179 = smul.u32 %s178, 32
        %s180 = scalar_lea.vmem %s165, %s179
        %v181 = vld [vmem:[%s180] sm:$0xff]
        %v182 = vld [vmem:[%s180 + $0x8] sm:$0xff]
        %v183 = vld [vmem:[%s180 + $0x10] sm:$0xff]
        %v184 = vld [vmem:[%s180 + $0x18] sm:$0x3f]
        %v185 = vld [vmem:[%s1] sm:$0x1]
        %187 = vset.pattern.permute.xlu0 0
        %188 = vperm.xlu0 %187, %v181
        %v189 = vpop.permute.xlu0 %188
        %192 = vset.pattern.permute.xlu0 0
        %193 = vperm.xlu0 %192, %v182
        %v194 = vpop.permute.xlu0 %193
        %197 = vset.pattern.permute.xlu0 0
        %198 = vperm.xlu0 %197, %v183
        %v199 = vpop.permute.xlu0 %198
        %202 = vset.pattern.permute.xlu0 0
        %203 = vperm.xlu0 %202, %v184
        %v204 = vpop.permute.xlu0 %203
        %v207 = vperm.slane %v185, 0
        %v209 = vmul.f32 %v189, %v207
        %v210 = vmul.f32 %v194, %v207
        %v211 = vmul.f32 %v199, %v207
        %v212 = vmul.f32 %v204, %v207
        %v213 = vadd.f32 %v209, 0.0
        %v214 = vadd.f32 %v210, 0.0
        %v215 = vadd.f32 %v211, 0.0
        %v216 = vadd.f32 %v212, 0.0
        %s217 = scalar_lea.vmem %s1, 1
        %v218 = vld [vmem:[%s217] sm:$0x1]
        %v220 = vperm.slane %v218, 0
        %v222 = vmul.f32 %v189, %v220
        %v223 = vmul.f32 %v194, %v220
        %v224 = vmul.f32 %v199, %v220
        %v225 = vmul.f32 %v204, %v220
        %vm230 = vcmask 1046528
        %v231 = vrot.slane %v222, 1
        %v232 = vrot.slane %v223, 1
        %v233 = vsel %vm230, %v231, %v232
        %v234 = vrot.slane %v224, 1
        %v235 = vsel %vm230, %v232, %v234
        %v236 = vrot.slane %v225, 1
        %v237 = vsel %vm230, %v234, %v236
        %v242 = vadd.f32 %v213, %v233
        %v243 = vadd.f32 %v214, %v235
        %v244 = vadd.f32 %v215, %v237
        %v245 = vadd.f32 %v216, %v236
        %s246 = scalar_lea.vmem %s1, 2
        %v247 = vld [vmem:[%s246] sm:$0x1]
        %v249 = vperm.slane %v247, 0
        %v251 = vmul.f32 %v189, %v249
        %v252 = vmul.f32 %v194, %v249
        %v253 = vmul.f32 %v199, %v249
        %v254 = vmul.f32 %v204, %v249
        %vm259 = vcmask 1045504
        %v260 = vrot.slane %v251, 2
        %v261 = vrot.slane %v252, 2
        %v262 = vsel %vm259, %v260, %v261
        %v263 = vrot.slane %v253, 2
        %v264 = vsel %vm259, %v261, %v263
        %v265 = vrot.slane %v254, 2
        %v266 = vsel %vm259, %v263, %v265
        %v271 = vadd.f32 %v242, %v262
        %v272 = vadd.f32 %v243, %v264
        %v273 = vadd.f32 %v244, %v266
        %v274 = vadd.f32 %v245, %v265
        %s275 = sadd.s32 %s178, 1
        %s276 = smul.u32 %s275, 32
        %s277 = scalar_lea.vmem %s165, %s276
        %v278 = vld [vmem:[%s277] sm:$0xff]
        %v279 = vld [vmem:[%s277 + $0x8] sm:$0xff]
        %v280 = vld [vmem:[%s277 + $0x10] sm:$0xff]
        %v281 = vld [vmem:[%s277 + $0x18] sm:$0x3f]
        %s282 = scalar_lea.vmem %s1, 3
        %v283 = vld [vmem:[%s282] sm:$0x1]
        %285 = vset.pattern.permute.xlu0 0
        %286 = vperm.xlu0 %285, %v278
        %v287 = vpop.permute.xlu0 %286
        %290 = vset.pattern.permute.xlu0 0
        %291 = vperm.xlu0 %290, %v279
        %v292 = vpop.permute.xlu0 %291
        %295 = vset.pattern.permute.xlu0 0
        %296 = vperm.xlu0 %295, %v280
        %v297 = vpop.permute.xlu0 %296
        %300 = vset.pattern.permute.xlu0 0
        %301 = vperm.xlu0 %300, %v281
        %v302 = vpop.permute.xlu0 %301
        %v305 = vperm.slane %v283, 0
        %v307 = vmul.f32 %v287, %v305
        %v308 = vmul.f32 %v292, %v305
        %v309 = vmul.f32 %v297, %v305
        %v310 = vmul.f32 %v302, %v305
        %v311 = vadd.f32 %v271, %v307
        %v312 = vadd.f32 %v272, %v308
        %v313 = vadd.f32 %v273, %v309
        %v314 = vadd.f32 %v274, %v310
        %s315 = scalar_lea.vmem %s1, 4
        %v316 = vld [vmem:[%s315] sm:$0x1]
        %v318 = vperm.slane %v316, 0
        %v320 = vmul.f32 %v287, %v318
        %v321 = vmul.f32 %v292, %v318
        %v322 = vmul.f32 %v297, %v318
        %v323 = vmul.f32 %v302, %v318
        %v328 = vrot.slane %v320, 1
        %v329 = vrot.slane %v321, 1
        %v330 = vsel %vm230, %v328, %v329
        %v331 = vrot.slane %v322, 1
        %v332 = vsel %vm230, %v329, %v331
        %v333 = vrot.slane %v323, 1
        %v334 = vsel %vm230, %v331, %v333
        %v339 = vadd.f32 %v311, %v330
        %v340 = vadd.f32 %v312, %v332
        %v341 = vadd.f32 %v313, %v334
        %v342 = vadd.f32 %v314, %v333
        %s343 = scalar_lea.vmem %s1, 5
        %v344 = vld [vmem:[%s343] sm:$0x1]
        %v346 = vperm.slane %v344, 0
        %v348 = vmul.f32 %v287, %v346
        %v349 = vmul.f32 %v292, %v346
        %v350 = vmul.f32 %v297, %v346
        %v351 = vmul.f32 %v302, %v346
        %v356 = vrot.slane %v348, 2
        %v357 = vrot.slane %v349, 2
        %v358 = vsel %vm259, %v356, %v357
        %v359 = vrot.slane %v350, 2
        %v360 = vsel %vm259, %v357, %v359
        %v361 = vrot.slane %v351, 2
        %v362 = vsel %vm259, %v359, %v361
        %v367 = vadd.f32 %v339, %v358
        %v368 = vadd.f32 %v340, %v360
        %v369 = vadd.f32 %v341, %v362
        %v370 = vadd.f32 %v342, %v361
        %s371 = sadd.s32 %s178, 2
        %s372 = smul.u32 %s371, 32
        %s373 = scalar_lea.vmem %s165, %s372
        %v374 = vld [vmem:[%s373] sm:$0xff]
        %v375 = vld [vmem:[%s373 + $0x8] sm:$0xff]
        %v376 = vld [vmem:[%s373 + $0x10] sm:$0xff]
        %v377 = vld [vmem:[%s373 + $0x18] sm:$0x3f]
        %s378 = scalar_lea.vmem %s1, 6
        %v379 = vld [vmem:[%s378] sm:$0x1]
        %381 = vset.pattern.permute.xlu0 0
        %382 = vperm.xlu0 %381, %v374
        %v383 = vpop.permute.xlu0 %382
        %386 = vset.pattern.permute.xlu0 0
        %387 = vperm.xlu0 %386, %v375
        %v388 = vpop.permute.xlu0 %387
        %391 = vset.pattern.permute.xlu0 0
        %392 = vperm.xlu0 %391, %v376
        %v393 = vpop.permute.xlu0 %392
        %396 = vset.pattern.permute.xlu0 0
        %397 = vperm.xlu0 %396, %v377
        %v398 = vpop.permute.xlu0 %397
        %v401 = vperm.slane %v379, 0
        %v403 = vmul.f32 %v383, %v401
        %v404 = vmul.f32 %v388, %v401
        %v405 = vmul.f32 %v393, %v401
        %v406 = vmul.f32 %v398, %v401
        %v407 = vadd.f32 %v367, %v403
        %v408 = vadd.f32 %v368, %v404
        %v409 = vadd.f32 %v369, %v405
        %v410 = vadd.f32 %v370, %v406
        %s411 = scalar_lea.vmem %s1, 7
        %v412 = vld [vmem:[%s411] sm:$0x1]
        %v414 = vperm.slane %v412, 0
        %v416 = vmul.f32 %v383, %v414
        %v417 = vmul.f32 %v388, %v414
        %v418 = vmul.f32 %v393, %v414
        %v419 = vmul.f32 %v398, %v414
        %v424 = vrot.slane %v416, 1
        %v425 = vrot.slane %v417, 1
        %v426 = vsel %vm230, %v424, %v425
        %v427 = vrot.slane %v418, 1
        %v428 = vsel %vm230, %v425, %v427
        %v429 = vrot.slane %v419, 1
        %v430 = vsel %vm230, %v427, %v429
        %v435 = vadd.f32 %v407, %v426
        %v436 = vadd.f32 %v408, %v428
        %v437 = vadd.f32 %v409, %v430
        %v438 = vadd.f32 %v410, %v429
        %s439 = scalar_lea.vmem %s1, 8
        %v440 = vld [vmem:[%s439] sm:$0x1]
        %v442 = vperm.slane %v440, 0
        %v444 = vmul.f32 %v383, %v442
        %v445 = vmul.f32 %v388, %v442
        %v446 = vmul.f32 %v393, %v442
        %v447 = vmul.f32 %v398, %v442
        %v452 = vrot.slane %v444, 2
        %v453 = vrot.slane %v445, 2
        %v454 = vsel %vm259, %v452, %v453
        %v455 = vrot.slane %v446, 2
        %v456 = vsel %vm259, %v453, %v455
        %v457 = vrot.slane %v447, 2
        %v458 = vsel %vm259, %v455, %v457
        %v463 = vadd.f32 %v435, %v454
        %v464 = vadd.f32 %v436, %v456
        %v465 = vadd.f32 %v437, %v458
        %v466 = vadd.f32 %v438, %v457
        %v468 = vperm.slane %v171, 0
        %v470 = vadd.f32 %v463, %v468
        %v471 = vadd.f32 %v464, %v468
        %v472 = vadd.f32 %v465, %v468
        %v473 = vadd.f32 %v466, %v468
        %v474 = vmax.f32 %v470, 0.0
        %v475 = vmax.f32 %v471, 0.0
        %v476 = vmax.f32 %v472, 0.0
        %v477 = vmax.f32 %v473, 0.0
        %v478 = vmul.f32 %v287, %v207
        %v479 = vmul.f32 %v292, %v207
        %v480 = vmul.f32 %v297, %v207
        %v481 = vmul.f32 %v302, %v207
        %v482 = vadd.f32 %v478, 0.0
        %v483 = vadd.f32 %v479, 0.0
        %v484 = vadd.f32 %v480, 0.0
        %v485 = vadd.f32 %v481, 0.0
        %v486 = vmul.f32 %v287, %v220
        %v487 = vmul.f32 %v292, %v220
        %v488 = vmul.f32 %v297, %v220
        %v489 = vmul.f32 %v302, %v220
        %v494 = vrot.slane %v486, 1
        %v495 = vrot.slane %v487, 1
        %v496 = vsel %vm230, %v494, %v495
        %v497 = vrot.slane %v488, 1
        %v498 = vsel %vm230, %v495, %v497
        %v499 = vrot.slane %v489, 1
        %v500 = vsel %vm230, %v497, %v499
        %v505 = vadd.f32 %v482, %v496
        %v506 = vadd.f32 %v483, %v498
        %v507 = vadd.f32 %v484, %v500
        %v508 = vadd.f32 %v485, %v499
        %v509 = vmul.f32 %v287, %v249
        %v510 = vmul.f32 %v292, %v249
        %v511 = vmul.f32 %v297, %v249
        %v512 = vmul.f32 %v302, %v249
        %v517 = vrot.slane %v509, 2
        %v518 = vrot.slane %v510, 2
        %v519 = vsel %vm259, %v517, %v518
        %v520 = vrot.slane %v511, 2
        %v521 = vsel %vm259, %v518, %v520
        %v522 = vrot.slane %v512, 2
        %v523 = vsel %vm259, %v520, %v522
        %v528 = vadd.f32 %v505, %v519
        %v529 = vadd.f32 %v506, %v521
        %v530 = vadd.f32 %v507, %v523
        %v531 = vadd.f32 %v508, %v522
        %v532 = vmul.f32 %v383, %v305
        %v533 = vmul.f32 %v388, %v305
        %v534 = vmul.f32 %v393, %v305
        %v535 = vmul.f32 %v398, %v305
        %v536 = vadd.f32 %v528, %v532
        %v537 = vadd.f32 %v529, %v533
        %v538 = vadd.f32 %v530, %v534
        %v539 = vadd.f32 %v531, %v535
        %v540 = vmul.f32 %v383, %v318
        %v541 = vmul.f32 %v388, %v318
        %v542 = vmul.f32 %v393, %v318
        %v543 = vmul.f32 %v398, %v318
        %v548 = vrot.slane %v540, 1
        %v549 = vrot.slane %v541, 1
        %v550 = vsel %vm230, %v548, %v549
        %v551 = vrot.slane %v542, 1
        %v552 = vsel %vm230, %v549, %v551
        %v553 = vrot.slane %v543, 1
        %v554 = vsel %vm230, %v551, %v553
        %v559 = vadd.f32 %v536, %v550
        %v560 = vadd.f32 %v537, %v552
        %v561 = vadd.f32 %v538, %v554
        %v562 = vadd.f32 %v539, %v553
        %v563 = vmul.f32 %v383, %v346
        %v564 = vmul.f32 %v388, %v346
        %v565 = vmul.f32 %v393, %v346
        %v566 = vmul.f32 %v398, %v346
        %v571 = vrot.slane %v563, 2
        %v572 = vrot.slane %v564, 2
        %v573 = vsel %vm259, %v571, %v572
        %v574 = vrot.slane %v565, 2
        %v575 = vsel %vm259, %v572, %v574
        %v576 = vrot.slane %v566, 2
        %v577 = vsel %vm259, %v574, %v576
        %v582 = vadd.f32 %v559, %v573
        %v583 = vadd.f32 %v560, %v575
        %v584 = vadd.f32 %v561, %v577
        %v585 = vadd.f32 %v562, %v576
        %s586 = sadd.s32 %s178, 3
        %s587 = smul.u32 %s586, 32
        %s588 = scalar_lea.vmem %s165, %s587
        %v589 = vld [vmem:[%s588] sm:$0xff]
        %v590 = vld [vmem:[%s588 + $0x8] sm:$0xff]
        %v591 = vld [vmem:[%s588 + $0x10] sm:$0xff]
        %v592 = vld [vmem:[%s588 + $0x18] sm:$0x3f]
        %594 = vset.pattern.permute.xlu0 0
        %595 = vperm.xlu0 %594, %v589
        %v596 = vpop.permute.xlu0 %595
        %599 = vset.pattern.permute.xlu0 0
        %600 = vperm.xlu0 %599, %v590
        %v601 = vpop.permute.xlu0 %600
        %604 = vset.pattern.permute.xlu0 0
        %605 = vperm.xlu0 %604, %v591
        %v606 = vpop.permute.xlu0 %605
        %609 = vset.pattern.permute.xlu0 0
        %610 = vperm.xlu0 %609, %v592
        %v611 = vpop.permute.xlu0 %610
        %v613 = vmul.f32 %v596, %v401
        %v614 = vmul.f32 %v601, %v401
        %v615 = vmul.f32 %v606, %v401
        %v616 = vmul.f32 %v611, %v401
        %v617 = vadd.f32 %v582, %v613
        %v618 = vadd.f32 %v583, %v614
        %v619 = vadd.f32 %v584, %v615
        %v620 = vadd.f32 %v585, %v616
        %v621 = vmul.f32 %v596, %v414
        %v622 = vmul.f32 %v601, %v414
        %v623 = vmul.f32 %v606, %v414
        %v624 = vmul.f32 %v611, %v414
        %v629 = vrot.slane %v621, 1
        %v630 = vrot.slane %v622, 1
        %v631 = vsel %vm230, %v629, %v630
        %v632 = vrot.slane %v623, 1
        %v633 = vsel %vm230, %v630, %v632
        %v634 = vrot.slane %v624, 1
        %v635 = vsel %vm230, %v632, %v634
        %v640 = vadd.f32 %v617, %v631
        %v641 = vadd.f32 %v618, %v633
        %v642 = vadd.f32 %v619, %v635
        %v643 = vadd.f32 %v620, %v634
        %v644 = vmul.f32 %v596, %v442
        %v645 = vmul.f32 %v601, %v442
        %v646 = vmul.f32 %v606, %v442
        %v647 = vmul.f32 %v611, %v442
        %v652 = vrot.slane %v644, 2
        %v653 = vrot.slane %v645, 2
        %v654 = vsel %vm259, %v652, %v653
        %v655 = vrot.slane %v646, 2
        %v656 = vsel %vm259, %v653, %v655
        %v657 = vrot.slane %v647, 2
        %v658 = vsel %vm259, %v655, %v657
        %v663 = vadd.f32 %v640, %v654
        %v664 = vadd.f32 %v641, %v656
        %v665 = vadd.f32 %v642, %v658
        %v666 = vadd.f32 %v643, %v657
        %v667 = vadd.f32 %v663, %v468
        %v668 = vadd.f32 %v664, %v468
        %v669 = vadd.f32 %v665, %v468
        %v670 = vadd.f32 %v666, %v468
        %v671 = vmax.f32 %v667, 0.0
        %v672 = vmax.f32 %v668, 0.0
        %v673 = vmax.f32 %v669, 0.0
        %v674 = vmax.f32 %v670, 0.0
        %v675 = vmax.f32 %v474, %v671
        %v676 = vmax.f32 %v475, %v672
        %v677 = vmax.f32 %v476, %v673
        %v678 = vmax.f32 %v477, %v674
        %vm679 = vcmask 261120
        %680 = vst.msk [vmem:[#allocation2] sm:$0xff] %vm679, %v675
        %681 = vst.msk [vmem:[#allocation2 + $0x8] sm:$0xff] %vm679, %v676
        %682 = vst.msk [vmem:[#allocation2 + $0x10] sm:$0xff] %vm679, %v677
        %vm683 = vcmask 257024
        %684 = vst.msk [vmem:[#allocation2 + $0x18] sm:$0xf] %vm683, %v678
        %v685 = vld [vmem:[#allocation2] ss:$2 sm:$0xff]
        %s686 = scalar_lea.vmem [#allocation2], 16
        %v687 = vld [vmem:[%s686] ss:$2 sm:$0x3f]
        %s688 = scalar_lea.vmem [#allocation2], 1
        %v689 = vld [vmem:[%s688] ss:$2 sm:$0xff]
        %s690 = scalar_lea.vmem [#allocation2], 17
        %v691 = vld [vmem:[%s690] ss:$2 sm:$0x3f]
        %v692 = vmax.f32 %v685, %v689
        %v693 = vmax.f32 %v687, %v691
        %s694 = smul.u32 %s173, 16
        %s695 = scalar_lea.vmem %s170, %s694
        %696 = vst.msk [vmem:[%s695] sm:$0xff] %vm679, %v692
        %vm697 = vcmask 259072
        %698 = vst.msk [vmem:[%s695 + $0x8] sm:$0x3f] %vm697, %v693
      $region37: #{cnn_forward.3} parent=31 // loop_footer
        %s177 = sadd.s32 1, %s173
      $region38: #{cnn_forward.3} parent=31 // loop_footer_branch
        %172 = sbr.rel target = $region34
      $region39: #{cnn_forward.3} parent=31 // loop_exit
        _
      %p699 = scmp.lt.s32.totalorder %s14, 1
      %s700 = scalar_select %p699, %s14, 1
      %s701 = smul.addr %s700, 28
      %s702 = smul.addr %s701, 8
      %s703 = scalar_lea.vmem %s3, %s702
      // Predicated region
      $region40: #{cnn_forward.3} parent=31 // pred_check
        %p704 = pneg %p100
      $region41: #{cnn_forward.3} parent=31 // pred_check_branch
        %706 = sbr.rel (%p704) target = $region43
      $region42: #{cnn_forward.3} parent=31 // pred_region
        _
      $region43: #{cnn_forward.3} parent=31 // pred_fallthru
        _
    $region32: #{cnn_forward.3} parent=5 // pred_fallthru
      _
    %p707 = scmp.le.s32.totalorder 2, %s9
    // Predicated region
    $region44: #{cnn_forward.3} parent=5 // pred_check
      %p708 = pneg %p707
    $region45: #{cnn_forward.3} parent=5 // pred_check_branch
      %710 = sbr.rel (%p708) target = $region47
    $region46: #{cnn_forward.3} parent=5 // pred_region
      %s711 = ssub.s32 %s9, 2
      // Predicated region
      $region48: #{cnn_forward.3} parent=46 // pred_check
        %p712 = pneg %p106
      $region49: #{cnn_forward.3} parent=46 // pred_check_branch
        %714 = sbr.rel (%p712) target = $region51
      $region50: #{cnn_forward.3} parent=46 // pred_region
        %p715 = scmp.lt.s32.totalorder %s15, 1
        %s716 = scalar_select %p715, %s15, 1
        %s717 = smul.addr %s716, 28
        %s718 = smul.addr %s717, 8
        %s719 = scalar_lea.vmem %s3, %s718
      $region51: #{cnn_forward.3} parent=46 // pred_fallthru
        _
    $region47: #{cnn_forward.3} parent=5 // pred_fallthru
      _
  $region6: #{cnn_forward.3} parent=0 // loop_footer
    %s13 = sadd.s32 1, %s9
  $region7: #{cnn_forward.3} parent=0 // loop_footer_branch
    %8 = sbr.rel target = $region3
  $region8: #{cnn_forward.3} parent=0 // loop_exit
    _

// kernel: cnn_forward.4
$region0: #{cnn_forward.4}
  #allocation0 [shape = 'u32[]', space=smem, size = 0x4, offset = 0x4, fixed_abs, tag = 'smem constant byte address 0x4 - core index']
  #allocation1 [shape = 'u32[72,128]{1,0:T(1,128)}', space=vmem, size = 0x9000, scoped, tag = 'internal scratch']
  #allocation2 [shape = 'f32[14,64]{1,0:T(8,128)}', space=vmem, size = 0x2000, scoped, tag = 'scratch operand']
  %s0 = inlined_call_operand.vmem [shape: f32[2,16,16,32], index: 0, kind: input, shape index: {}]
  %s1 = inlined_call_operand.vmem [shape: f32[9,32,64], index: 1, kind: input, shape index: {}]
  %s2 = inlined_call_operand.vmem [shape: f32[1,64], index: 2, kind: input, shape index: {}]
  %s3 = inlined_call_operand.vmem [shape: f32[2,7,7,64], index: 3, kind: output, shape index: {}]
  %s4 = sld [smem:[#allocation0]]
  $region52: #{cnn_forward.4} parent=0
    _
  %s6 = ssub.s32 1, %s4
  %s7 = scalar_select 0, %s6, %s4
  loop: start=0, step=1, limit=4
  $region2: #{cnn_forward.4} parent=0 // loop_pre_header
    _
  $region3: #{cnn_forward.4} parent=0 // loop_header
    %s9 = sphi 0, %s13
    %p10 = scmp.ge.s32.totalorder %s9, 4
    %s19 = sphi 0, %s21
    %s22 = sphi 0, %s19
    %s23 = sphi 0, %s22
    %s39 = sphi 0, %s23
    %s43 = sphi 0, %s43
    %s45 = sphi 0, %s43
    %s46 = sphi 0, %s45
    %s60 = sphi 0, %s46
    %s64 = sphi 0, %s64
    %s66 = sphi 0, %s64
    %s67 = sphi 0, %s66
    %s81 = sphi 0, %s67
    %s87 = sphi 0, %s89
    %s90 = sphi 0, %s87
    %s91 = sphi 0, %s90
    %s107 = sphi 0, %s91
  $region4: #{cnn_forward.4} parent=0 // loop_header_branch
    %12 = sbr.rel (%p10) target = $region8
  $region5: #{cnn_forward.4} parent=0 // loop_body
    %s14 = ssub.s32 %s9, 1
    %s15 = ssub.s32 %s9, 2
    %s16 = sadd.s32 %s9, 1
    %s17 = ssub.s32 %s9, %s16
    %p18 = scmp.eq.s32.totalorder %s17, 0
    %s20 = sadd.s32 %s19, 1
    %s21 = scalar_select %p18, %s19, %s20
    %p24 = pneg %p18
    %p25 = scmp.eq.s32.totalorder %s9, 1
    %p26 = por %p24, %p25
    %p27 = scmp.ne.s32.totalorder %s19, %s22
    %p28 = scmp.eq.s32.totalorder %s9, 0
    %p29 = por %p27, %p28
    %p30 = scmp.ne.s32.totalorder %s19, %s22
    %p31 = scmp.eq.s32.totalorder %s14, 1
    %p32 = por %p30, %p31
    %p33 = scmp.ne.s32.totalorder %s22, %s23
    %p34 = scmp.eq.s32.totalorder %s14, 0
    %p35 = por %p33, %p34
    %p36 = scmp.ne.s32.totalorder %s22, %s23
    %p37 = scmp.eq.s32.totalorder %s15, 1
    %p38 = por %p36, %p37
    %p40 = scmp.ne.s32.totalorder %s23, %s39
    %p41 = scmp.eq.s32.totalorder %s15, 0
    %p42 = por %p40, %p41
    %s44 = sadd.s32 %s43, 1
    %p47 = scmp.eq.s32.totalorder %s9, 1
    %p48 = scmp.ne.s32.totalorder %s43, %s45
    %p49 = scmp.eq.s32.totalorder %s9, 0
    %p50 = por %p48, %p49
    %p51 = scmp.ne.s32.totalorder %s43, %s45
    %p52 = scmp.eq.s32.totalorder %s14, 1
    %p53 = por %p51, %p52
    %p54 = scmp.ne.s32.totalorder %s45, %s46
    %p55 = scmp.eq.s32.totalorder %s14, 0
    %p56 = por %p54, %p55
    %p57 = scmp.ne.s32.totalorder %s45, %s46
    %p58 = scmp.eq.s32.totalorder %s15, 1
    %p59 = por %p57, %p58
    %p61 = scmp.ne.s32.totalorder %s46, %s60
    %p62 = scmp.eq.s32.totalorder %s15, 0
    %p63 = por %p61, %p62
    %s65 = sadd.s32 %s64, 1
    %p68 = scmp.eq.s32.totalorder %s9, 1
    %p69 = scmp.ne.s32.totalorder %s64, %s66
    %p70 = scmp.eq.s32.totalorder %s9, 0
    %p71 = por %p69, %p70
    %p72 = scmp.ne.s32.totalorder %s64, %s66
    %p73 = scmp.eq.s32.totalorder %s14, 1
    %p74 = por %p72, %p73
    %p75 = scmp.ne.s32.totalorder %s66, %s67
    %p76 = scmp.eq.s32.totalorder %s14, 0
    %p77 = por %p75, %p76
    %p78 = scmp.ne.s32.totalorder %s66, %s67
    %p79 = scmp.eq.s32.totalorder %s15, 1
    %p80 = por %p78, %p79
    %p82 = scmp.ne.s32.totalorder %s67, %s81
    %p83 = scmp.eq.s32.totalorder %s15, 0
    %p84 = por %p82, %p83
    %s85 = ssub.s32 %s9, %s16
    %p86 = scmp.eq.s32.totalorder %s85, 0
    %s88 = sadd.s32 %s87, 1
    %s89 = scalar_select %p86, %s87, %s88
    %p92 = pneg %p86
    %p93 = scmp.eq.s32.totalorder %s9, 1
    %p94 = por %p92, %p93
    %p95 = scmp.ne.s32.totalorder %s87, %s90
    %p96 = scmp.eq.s32.totalorder %s9, 0
    %p97 = por %p95, %p96
    %p98 = scmp.ne.s32.totalorder %s87, %s90
    %p99 = scmp.eq.s32.totalorder %s14, 1
    %p100 = por %p98, %p99
    %p101 = scmp.ne.s32.totalorder %s90, %s91
    %p102 = scmp.eq.s32.totalorder %s14, 0
    %p103 = por %p101, %p102
    %p104 = scmp.ne.s32.totalorder %s90, %s91
    %p105 = scmp.eq.s32.totalorder %s15, 1
    %p106 = por %p104, %p105
    %p108 = scmp.ne.s32.totalorder %s91, %s107
    %p109 = scmp.eq.s32.totalorder %s15, 0
    %p110 = por %p108, %p109
    %p111 = scmp.le.s32.totalorder 1, %s9
    %p112 = scmp.lt.s32.totalorder %s9, 3
    %p113 = pnand %p111, %p112
    %p114 = pneg %p113
    // Predicated region
    $region9: #{cnn_forward.4} parent=5 // pred_check
      _
    $region10: #{cnn_forward.4} parent=5 // pred_check_branch
      %116 = sbr.rel (%p113) target = $region12
    $region11: #{cnn_forward.4} parent=5 // pred_region
      %s117 = ssub.s32 %s9, 1
      // Predicated region
      $region13: #{cnn_forward.4} parent=11 // pred_check
        %p118 = pneg %p56
      $region14: #{cnn_forward.4} parent=11 // pred_check_branch
        %120 = sbr.rel (%p118) target = $region16
      $region15: #{cnn_forward.4} parent=11 // pred_region
        _
      $region16: #{cnn_forward.4} parent=11 // pred_fallthru
        _
      // Predicated region
      $region17: #{cnn_forward.4} parent=11 // pred_check
        %p121 = pneg %p77
      $region18: #{cnn_forward.4} parent=11 // pred_check_branch
        %123 = sbr.rel (%p121) target = $region20
      $region19: #{cnn_forward.4} parent=11 // pred_region
        _
      $region20: #{cnn_forward.4} parent=11 // pred_fallthru
        _
    $region12: #{cnn_forward.4} parent=5 // pred_fallthru
      _
    %p124 = scmp.lt.s32.totalorder %s9, 2
    // Predicated region
    $region21: #{cnn_forward.4} parent=5 // pred_check
      %p125 = pneg %p124
    $region22: #{cnn_forward.4} parent=5 // pred_check_branch
      %127 = sbr.rel (%p125) target = $region24
    $region23: #{cnn_forward.4} parent=5 // pred_region
      // Predicated region
      $region25: #{cnn_forward.4} parent=23 // pred_check
        %p128 = pneg %p29
      $region26: #{cnn_forward.4} parent=23 // pred_check_branch
        %130 = sbr.rel (%p128) target = $region28
      $region27: #{cnn_forward.4} parent=23 // pred_region
        %p131 = scmp.lt.s32.totalorder %s9, 1
        %s132 = scalar_select %p131, %s9, 1
        %s133 = smul.addr %s132, 32
        %s134 = smul.addr %s133, 8
        %s135 = scalar_lea.vmem %s0, %s134
      $region28: #{cnn_forward.4} parent=23 // pred_fallthru
        _
    $region24: #{cnn_forward.4} parent=5 // pred_fallthru
      _
    %p136 = scmp.le.s32.totalorder 1, %s9
    %p137 = scmp.lt.s32.totalorder %s9, 3
    %p138 = pnand %p136, %p137
    %p139 = pneg %p138
    // Predicated region
    $region29: #{cnn_forward.4} parent=5 // pred_check
      _
    $region30: #{cnn_forward.4} parent=5 // pred_check_branch
      %141 = sbr.rel (%p138) target = $region32
    $region31: #{cnn_forward.4} parent=5 // pred_region
      %s142 = ssub.s32 %s9, 1
      %p143 = scmp.lt.s32.totalorder %s14, 1
      %s144 = scalar_select %p143, %s14, 1
      %s145 = smul.addr %s144, 32
      %s146 = smul.addr %s145, 8
      %s147 = scalar_lea.vmem %s0, %s146
      %p148 = pneg %p35
      %p149 = pneg %p32
      %p150 = pneg %p56
      %p151 = pneg %p53
      %p152 = pneg %p77
      %p153 = pneg %p74
      %p154 = pneg %p103
      %p155 = pneg %p100
      %p156 = scmp.lt.s32.totalorder %s14, 1
      %s157 = scalar_select %p156, %s14, 1
      %s158 = smul.addr %s157, 7
      %s159 = smul.addr %s158, 8
      %s160 = scalar_lea.vmem %s3, %s159
      %p161 = scmp.lt.s32.totalorder %s14, 1
      %s162 = scalar_select %p161, %s14, 1
      %s163 = smul.addr %s162, 32
      %s164 = smul.addr %s163, 8
      %s165 = scalar_lea.vmem %s0, %s164
      %p166 = scmp.lt.s32.totalorder %s14, 1
      %s167 = scalar_select %p166, %s14, 1
      %s168 = smul.addr %s167, 7
      %s169 = smul.addr %s168, 8
      %s170 = scalar_lea.vmem %s3, %s169
      %v171 = vld [vmem:[%s2] sm:$0x1]
      loop: start=0, step=1, limit=7
      $region33: #{cnn_forward.4} parent=31 // loop_pre_header
        _
      $region34: #{cnn_forward.4} parent=31 // loop_header
        %s173 = sphi 0, %s177
        %p174 = scmp.ge.s32.totalorder %s173, 7
      $region35: #{cnn_forward.4} parent=31 // loop_header_branch
        %176 = sbr.rel (%p174) target = $region39
      $region36: #{cnn_forward.4} parent=31 // loop_body
        %s178 = smul.u32 %s173, 2
        %s179 = smul.u32 %s178, 16
        %s180 = scalar_lea.vmem %s165, %s179
        %v181 = vld [vmem:[%s180] sm:$0xff]
        %v182 = vld [vmem:[%s180 + $0x8] sm:$0xff]
        %v183 = vld [vmem:[%s1] sm:$0xff]
        %v184 = vld [vmem:[%s1 + $0x8] sm:$0xff]
        %v185 = vld [vmem:[%s1 + $0x10] sm:$0xff]
        %v186 = vld [vmem:[%s1 + $0x18] sm:$0xff]
        %s187 = scalar_lea.vmem %s1, 32
        %v188 = vld [vmem:[%s187] sm:$0xff]
        %v189 = vld [vmem:[%s187 + $0x8] sm:$0xff]
        %v190 = vld [vmem:[%s187 + $0x10] sm:$0xff]
        %v191 = vld [vmem:[%s187 + $0x18] sm:$0xff]
        %vm194 = vcmask 1046528
        %v195 = vrot.slane %v181, 1
        %v196 = vrot.slane %v182, 1
        %v197 = vsel %vm194, %v195, %v196
        %vm198 = vcmask 261120
        %v199 = vsel %vm198, %v197, 0
        %v201 = vsel %vm198, %v196, 0
        %203 = vmatpush.msra.mxu0 0.0
        %204 = vmatpush.msra.mxu0 0.0
        %205 = vmatpush.msra.mxu0 0.0
        %206 = vmatpush.msra.mxu0 0.0
        %207 = vmatpush.msra.mxu0 0.0
        %208 = vmatpush.msra.mxu0 0.0
        %209 = vmatpush.msra.mxu0 0.0
        %210 = vmatpush.msra.mxu0 0.0
        %211 = vmatpush.msra.mxu0 0.0
        %212 = vmatpush.msra.mxu0 0.0
        %213 = vmatpush.msra.mxu0 0.0
        %214 = vmatpush.msra.mxu0 0.0
        %215 = vmatpush.msra.mxu0 %v191
        %216 = vmatpush.msra.mxu0 %v190
        %217 = vmatpush.msra.mxu0 %v189
        %218 = vmatpush.msra.mxu0 %v188
        %219 = vmatmul.f32.gmra.mxu0 %v199
        %v220 = vpop.f32.mrf.mxu0
        %v221 = vadd.f32 0.0, %v220
        %222 = vmatmul.f32.gmra.mxu0 %v201
        %v223 = vpop.f32.mrf.mxu0
        %v224 = vadd.f32 0.0, %v223
        %225 = vdwg.mxu0
        %v226 = vsel %vm198, %v181, 0
        %v228 = vsel %vm198, %v182, 0
        %230 = vmatpush.msra.mxu0 0.0
        %231 = vmatpush.msra.mxu0 0.0
        %232 = vmatpush.msra.mxu0 0.0
        %233 = vmatpush.msra.mxu0 0.0
        %234 = vmatpush.msra.mxu0 0.0
        %235 = vmatpush.msra.mxu0 0.0
        %236 = vmatpush.msra.mxu0 0.0
        %237 = vmatpush.msra.mxu0 0.0
        %238 = vmatpush.msra.mxu0 0.0
        %239 = vmatpush.msra.mxu0 0.0
        %240 = vmatpush.msra.mxu0 0.0
        %241 = vmatpush.msra.mxu0 0.0
        %242 = vmatpush.msra.mxu0 %v186
        %243 = vmatpush.msra.mxu0 %v185
        %244 = vmatpush.msra.mxu0 %v184
        %245 = vmatpush.msra.mxu0 %v183
        %246 = vmatmul.f32.gmra.mxu0 %v226
        %v247 = vpop.f32.mrf.mxu0
        %v248 = vadd.f32 %v221, %v247
        %249 = vmatmul.f32.gmra.mxu0 %v228
        %v250 = vpop.f32.mrf.mxu0
        %v251 = vadd.f32 %v224, %v250
        %252 = vdwg.mxu0
        %s253 = scalar_lea.vmem %s1, 64
        %v254 = vld [vmem:[%s253] sm:$0xff]
        %v255 = vld [vmem:[%s253 + $0x8] sm:$0xff]
        %v256 = vld [vmem:[%s253 + $0x10] sm:$0xff]
        %v257 = vld [vmem:[%s253 + $0x18] sm:$0xff]
        %vm258 = vcmask 1045504
        %v259 = vrot.slane %v181, 2
        %v260 = vrot.slane %v182, 2
        %v261 = vsel %vm258, %v259, %v260
        %v262 = vsel %vm198, %v261, 0
        %v264 = vsel %vm198, %v260, 0
        %266 = vmatpush.msra.mxu0 0.0
        %267 = vmatpush.msra.mxu0 0.0
        %268 = vmatpush.msra.mxu0 0.0
        %269 = vmatpush.msra.mxu0 0.0
        %270 = vmatpush.msra.mxu0 0.0
        %271 = vmatpush.msra.mxu0 0.0
        %272 = vmatpush.msra.mxu0 0.0
        %273 = vmatpush.msra.mxu0 0.0
        %274 = vmatpush.msra.mxu0 0.0
        %275 = vmatpush.msra.mxu0 0.0
        %276 = vmatpush.msra.mxu0 0.0
        %277 = vmatpush.msra.mxu0 0.0
        %278 = vmatpush.msra.mxu0 %v257
        %279 = vmatpush.msra.mxu0 %v256
        %280 = vmatpush.msra.mxu0 %v255
        %281 = vmatpush.msra.mxu0 %v254
        %282 = vmatmul.f32.gmra.mxu0 %v262
        %v283 = vpop.f32.mrf.mxu0
        %v284 = vadd.f32 0.0, %v283
        %285 = vmatmul.f32.gmra.mxu0 %v264
        %v286 = vpop.f32.mrf.mxu0
        %v287 = vadd.f32 0.0, %v286
        %288 = vdwg.mxu0
        %v289 = vadd.f32 %v248, %v284
        %v290 = vadd.f32 %v251, %v287
        %s291 = sadd.s32 %s178, 1
        %s292 = smul.u32 %s291, 16
        %s293 = scalar_lea.vmem %s165, %s292
        %v294 = vld [vmem:[%s293] sm:$0xff]
        %v295 = vld [vmem:[%s293 + $0x8] sm:$0xff]
        %s296 = scalar_lea.vmem %s1, 96
        %v297 = vld [vmem:[%s296] sm:$0xff]
        %v298 = vld [vmem:[%s296 + $0x8] sm:$0xff]
        %v299 = vld [vmem:[%s296 + $0x10] sm:$0xff]
        %v300 = vld [vmem:[%s296 + $0x18] sm:$0xff]
        %v302 = vsel %vm198, %v294, 0
        %v305 = vsel %vm198, %v295, 0
        %307 = vmatpush.msra.mxu0 0.0
        %308 = vmatpush.msra.mxu0 0.0
        %309 = vmatpush.msra.mxu0 0.0
        %310 = vmatpush.msra.mxu0 0.0
        %311 = vmatpush.msra.mxu0 0.0
        %312 = vmatpush.msra.mxu0 0.0
        %313 = vmatpush.msra.mxu0 0.0
        %314 = vmatpush.msra.mxu0 0.0
        %315 = vmatpush.msra.mxu0 0.0
        %316 = vmatpush.msra.mxu0 0.0
        %317 = vmatpush.msra.mxu0 0.0
        %318 = vmatpush.msra.mxu0 0.0
        %319 = vmatpush.msra.mxu0 %v300
        %320 = vmatpush.msra.mxu0 %v299
        %321 = vmatpush.msra.mxu0 %v298
        %322 = vmatpush.msra.mxu0 %v297
        %323 = vmatmul.f32.gmra.mxu0 %v302
        %v324 = vpop.f32.mrf.mxu0
        %v325 = vadd.f32 0.0, %v324
        %326 = vmatmul.f32.gmra.mxu0 %v305
        %v327 = vpop.f32.mrf.mxu0
        %v328 = vadd.f32 0.0, %v327
        %329 = vdwg.mxu0
        %v330 = vadd.f32 %v289, %v325
        %v331 = vadd.f32 %v290, %v328
        %s332 = scalar_lea.vmem %s1, 128
        %v333 = vld [vmem:[%s332] sm:$0xff]
        %v334 = vld [vmem:[%s332 + $0x8] sm:$0xff]
        %v335 = vld [vmem:[%s332 + $0x10] sm:$0xff]
        %v336 = vld [vmem:[%s332 + $0x18] sm:$0xff]
        %v337 = vrot.slane %v294, 1
        %v338 = vrot.slane %v295, 1
        %v339 = vsel %vm194, %v337, %v338
        %v340 = vsel %vm198, %v339, 0
        %v342 = vsel %vm198, %v338, 0
        %344 = vmatpush.msra.mxu0 0.0
        %345 = vmatpush.msra.mxu0 0.0
        %346 = vmatpush.msra.mxu0 0.0
        %347 = vmatpush.msra.mxu0 0.0
        %348 = vmatpush.msra.mxu0 0.0
        %349 = vmatpush.msra.mxu0 0.0
        %350 = vmatpush.msra.mxu0 0.0
        %351 = vmatpush.msra.mxu0 0.0
        %352 = vmatpush.msra.mxu0 0.0
        %353 = vmatpush.msra.mxu0 0.0
        %354 = vmatpush.msra.mxu0 0.0
        %355 = vmatpush.msra.mxu0 0.0
        %356 = vmatpush.msra.mxu0 %v336
        %357 = vmatpush.msra.mxu0 %v335
        %358 = vmatpush.msra.mxu0 %v334
        %359 = vmatpush.msra.mxu0 %v333
        %360 = vmatmul.f32.gmra.mxu0 %v340
        %v361 = vpop.f32.mrf.mxu0
        %v362 = vadd.f32 0.0, %v361
        %363 = vmatmul.f32.gmra.mxu0 %v342
        %v364 = vpop.f32.mrf.mxu0
        %v365 = vadd.f32 0.0, %v364
        %366 = vdwg.mxu0
        %v367 = vadd.f32 %v330, %v362
        %v368 = vadd.f32 %v331, %v365
        %s369 = scalar_lea.vmem %s1, 160
        %v370 = vld [vmem:[%s369] sm:$0xff]
        %v371 = vld [vmem:[%s369 + $0x8] sm:$0xff]
        %v372 = vld [vmem:[%s369 + $0x10] sm:$0xff]
        %v373 = vld [vmem:[%s369 + $0x18] sm:$0xff]
        %v374 = vrot.slane %v294, 2
        %v375 = vrot.slane %v295, 2
        %v376 = vsel %vm258, %v374, %v375
        %v377 = vsel %vm198, %v376, 0
        %v379 = vsel %vm198, %v375, 0
        %381 = vmatpush.msra.mxu0 0.0
        %382 = vmatpush.msra.mxu0 0.0
        %383 = vmatpush.msra.mxu0 0.0
        %384 = vmatpush.msra.mxu0 0.0
        %385 = vmatpush.msra.mxu0 0.0
        %386 = vmatpush.msra.mxu0 0.0
        %387 = vmatpush.msra.mxu0 0.0
        %388 = vmatpush.msra.mxu0 0.0
        %389 = vmatpush.msra.mxu0 0.0
        %390 = vmatpush.msra.mxu0 0.0
        %391 = vmatpush.msra.mxu0 0.0
        %392 = vmatpush.msra.mxu0 0.0
        %393 = vmatpush.msra.mxu0 %v373
        %394 = vmatpush.msra.mxu0 %v372
        %395 = vmatpush.msra.mxu0 %v371
        %396 = vmatpush.msra.mxu0 %v370
        %397 = vmatmul.f32.gmra.mxu0 %v377
        %v398 = vpop.f32.mrf.mxu0
        %v399 = vadd.f32 0.0, %v398
        %400 = vmatmul.f32.gmra.mxu0 %v379
        %v401 = vpop.f32.mrf.mxu0
        %v402 = vadd.f32 0.0, %v401
        %403 = vdwg.mxu0
        %v404 = vadd.f32 %v367, %v399
        %v405 = vadd.f32 %v368, %v402
        %s406 = sadd.s32 %s178, 2
        %s407 = smul.u32 %s406, 16
        %s408 = scalar_lea.vmem %s165, %s407
        %v409 = vld [vmem:[%s408] sm:$0xff]
        %v410 = vld [vmem:[%s408 + $0x8] sm:$0xff]
        %s411 = scalar_lea.vmem %s1, 192
        %v412 = vld [vmem:[%s411] sm:$0xff]
        %v413 = vld [vmem:[%s411 + $0x8] sm:$0xff]
        %v414 = vld [vmem:[%s411 + $0x10] sm:$0xff]
        %v415 = vld [vmem:[%s411 + $0x18] sm:$0xff]
        %v417 = vsel %vm198, %v409, 0
        %v420 = vsel %vm198, %v410, 0
        %422 = vmatpush.msra.mxu0 0.0
        %423 = vmatpush.msra.mxu0 0.0
        %424 = vmatpush.msra.mxu0 0.0
        %425 = vmatpush.msra.mxu0 0.0
        %426 = vmatpush.msra.mxu0 0.0
        %427 = vmatpush.msra.mxu0 0.0
        %428 = vmatpush.msra.mxu0 0.0
        %429 = vmatpush.msra.mxu0 0.0
        %430 = vmatpush.msra.mxu0 0.0
        %431 = vmatpush.msra.mxu0 0.0
        %432 = vmatpush.msra.mxu0 0.0
        %433 = vmatpush.msra.mxu0 0.0
        %434 = vmatpush.msra.mxu0 %v415
        %435 = vmatpush.msra.mxu0 %v414
        %436 = vmatpush.msra.mxu0 %v413
        %437 = vmatpush.msra.mxu0 %v412
        %438 = vmatmul.f32.gmra.mxu0 %v417
        %v439 = vpop.f32.mrf.mxu0
        %v440 = vadd.f32 0.0, %v439
        %441 = vmatmul.f32.gmra.mxu0 %v420
        %v442 = vpop.f32.mrf.mxu0
        %v443 = vadd.f32 0.0, %v442
        %444 = vdwg.mxu0
        %v445 = vadd.f32 %v404, %v440
        %v446 = vadd.f32 %v405, %v443
        %s447 = scalar_lea.vmem %s1, 224
        %v448 = vld [vmem:[%s447] sm:$0xff]
        %v449 = vld [vmem:[%s447 + $0x8] sm:$0xff]
        %v450 = vld [vmem:[%s447 + $0x10] sm:$0xff]
        %v451 = vld [vmem:[%s447 + $0x18] sm:$0xff]
        %v452 = vrot.slane %v409, 1
        %v453 = vrot.slane %v410, 1
        %v454 = vsel %vm194, %v452, %v453
        %v455 = vsel %vm198, %v454, 0
        %v457 = vsel %vm198, %v453, 0
        %459 = vmatpush.msra.mxu0 0.0
        %460 = vmatpush.msra.mxu0 0.0
        %461 = vmatpush.msra.mxu0 0.0
        %462 = vmatpush.msra.mxu0 0.0
        %463 = vmatpush.msra.mxu0 0.0
        %464 = vmatpush.msra.mxu0 0.0
        %465 = vmatpush.msra.mxu0 0.0
        %466 = vmatpush.msra.mxu0 0.0
        %467 = vmatpush.msra.mxu0 0.0
        %468 = vmatpush.msra.mxu0 0.0
        %469 = vmatpush.msra.mxu0 0.0
        %470 = vmatpush.msra.mxu0 0.0
        %471 = vmatpush.msra.mxu0 %v451
        %472 = vmatpush.msra.mxu0 %v450
        %473 = vmatpush.msra.mxu0 %v449
        %474 = vmatpush.msra.mxu0 %v448
        %475 = vmatmul.f32.gmra.mxu0 %v455
        %v476 = vpop.f32.mrf.mxu0
        %v477 = vadd.f32 0.0, %v476
        %478 = vmatmul.f32.gmra.mxu0 %v457
        %v479 = vpop.f32.mrf.mxu0
        %v480 = vadd.f32 0.0, %v479
        %481 = vdwg.mxu0
        %v482 = vadd.f32 %v445, %v477
        %v483 = vadd.f32 %v446, %v480
        %s484 = scalar_lea.vmem %s1, 256
        %v485 = vld [vmem:[%s484] sm:$0xff]
        %v486 = vld [vmem:[%s484 + $0x8] sm:$0xff]
        %v487 = vld [vmem:[%s484 + $0x10] sm:$0xff]
        %v488 = vld [vmem:[%s484 + $0x18] sm:$0xff]
        %v489 = vrot.slane %v409, 2
        %v490 = vrot.slane %v410, 2
        %v491 = vsel %vm258, %v489, %v490
        %v492 = vsel %vm198, %v491, 0
        %v494 = vsel %vm198, %v490, 0
        %496 = vmatpush.msra.mxu0 0.0
        %497 = vmatpush.msra.mxu0 0.0
        %498 = vmatpush.msra.mxu0 0.0
        %499 = vmatpush.msra.mxu0 0.0
        %500 = vmatpush.msra.mxu0 0.0
        %501 = vmatpush.msra.mxu0 0.0
        %502 = vmatpush.msra.mxu0 0.0
        %503 = vmatpush.msra.mxu0 0.0
        %504 = vmatpush.msra.mxu0 0.0
        %505 = vmatpush.msra.mxu0 0.0
        %506 = vmatpush.msra.mxu0 0.0
        %507 = vmatpush.msra.mxu0 0.0
        %508 = vmatpush.msra.mxu0 %v488
        %509 = vmatpush.msra.mxu0 %v487
        %510 = vmatpush.msra.mxu0 %v486
        %511 = vmatpush.msra.mxu0 %v485
        %512 = vmatmul.f32.gmra.mxu0 %v492
        %v513 = vpop.f32.mrf.mxu0
        %v514 = vadd.f32 0.0, %v513
        %515 = vmatmul.f32.gmra.mxu0 %v494
        %v516 = vpop.f32.mrf.mxu0
        %v517 = vadd.f32 0.0, %v516
        %518 = vdwg.mxu0
        %v519 = vadd.f32 %v482, %v514
        %v520 = vadd.f32 %v483, %v517
        %v522 = vperm.slane %v171, 0
        %v524 = vadd.f32 %v519, %v522
        %v525 = vadd.f32 %v520, %v522
        %v526 = vmax.f32 %v524, 0.0
        %v527 = vmax.f32 %v525, 0.0
        %528 = vmatpush.msra.mxu0 0.0
        %529 = vmatpush.msra.mxu0 0.0
        %530 = vmatpush.msra.mxu0 0.0
        %531 = vmatpush.msra.mxu0 0.0
        %532 = vmatpush.msra.mxu0 0.0
        %533 = vmatpush.msra.mxu0 0.0
        %534 = vmatpush.msra.mxu0 0.0
        %535 = vmatpush.msra.mxu0 0.0
        %536 = vmatpush.msra.mxu0 0.0
        %537 = vmatpush.msra.mxu0 0.0
        %538 = vmatpush.msra.mxu0 0.0
        %539 = vmatpush.msra.mxu0 0.0
        %540 = vmatpush.msra.mxu0 %v191
        %541 = vmatpush.msra.mxu0 %v190
        %542 = vmatpush.msra.mxu0 %v189
        %543 = vmatpush.msra.mxu0 %v188
        %544 = vmatmul.f32.gmra.mxu0 %v340
        %v545 = vpop.f32.mrf.mxu0
        %v546 = vadd.f32 0.0, %v545
        %547 = vmatmul.f32.gmra.mxu0 %v342
        %v548 = vpop.f32.mrf.mxu0
        %v549 = vadd.f32 0.0, %v548
        %550 = vdwg.mxu0
        %551 = vmatpush.msra.mxu0 0.0
        %552 = vmatpush.msra.mxu0 0.0
        %553 = vmatpush.msra.mxu0 0.0
        %554 = vmatpush.msra.mxu0 0.0
        %555 = vmatpush.msra.mxu0 0.0
        %556 = vmatpush.msra.mxu0 0.0
        %557 = vmatpush.msra.mxu0 0.0
        %558 = vmatpush.msra.mxu0 0.0
        %559 = vmatpush.msra.mxu0 0.0
        %560 = vmatpush.msra.mxu0 0.0
        %561 = vmatpush.msra.mxu0 0.0
        %562 = vmatpush.msra.mxu0 0.0
        %563 = vmatpush.msra.mxu0 %v186
        %564 = vmatpush.msra.mxu0 %v185
        %565 = vmatpush.msra.mxu0 %v184
        %566 = vmatpush.msra.mxu0 %v183
        %567 = vmatmul.f32.gmra.mxu0 %v302
        %v568 = vpop.f32.mrf.mxu0
        %v569 = vadd.f32 %v546, %v568
        %570 = vmatmul.f32.gmra.mxu0 %v305
        %v571 = vpop.f32.mrf.mxu0
        %v572 = vadd.f32 %v549, %v571
        %573 = vdwg.mxu0
        %574 = vmatpush.msra.mxu0 0.0
        %575 = vmatpush.msra.mxu0 0.0
        %576 = vmatpush.msra.mxu0 0.0
        %577 = vmatpush.msra.mxu0 0.0
        %578 = vmatpush.msra.mxu0 0.0
        %579 = vmatpush.msra.mxu0 0.0
        %580 = vmatpush.msra.mxu0 0.0
        %581 = vmatpush.msra.mxu0 0.0
        %582 = vmatpush.msra.mxu0 0.0
        %583 = vmatpush.msra.mxu0 0.0
        %584 = vmatpush.msra.mxu0 0.0
        %585 = vmatpush.msra.mxu0 0.0
        %586 = vmatpush.msra.mxu0 %v257
        %587 = vmatpush.msra.mxu0 %v256
        %588 = vmatpush.msra.mxu0 %v255
        %589 = vmatpush.msra.mxu0 %v254
        %590 = vmatmul.f32.gmra.mxu0 %v377
        %v591 = vpop.f32.mrf.mxu0
        %v592 = vadd.f32 0.0, %v591
        %593 = vmatmul.f32.gmra.mxu0 %v379
        %v594 = vpop.f32.mrf.mxu0
        %v595 = vadd.f32 0.0, %v594
        %596 = vdwg.mxu0
        %v597 = vadd.f32 %v569, %v592
        %v598 = vadd.f32 %v572, %v595
        %599 = vmatpush.msra.mxu0 0.0
        %600 = vmatpush.msra.mxu0 0.0
        %601 = vmatpush.msra.mxu0 0.0
        %602 = vmatpush.msra.mxu0 0.0
        %603 = vmatpush.msra.mxu0 0.0
        %604 = vmatpush.msra.mxu0 0.0
        %605 = vmatpush.msra.mxu0 0.0
        %606 = vmatpush.msra.mxu0 0.0
        %607 = vmatpush.msra.mxu0 0.0
        %608 = vmatpush.msra.mxu0 0.0
        %609 = vmatpush.msra.mxu0 0.0
        %610 = vmatpush.msra.mxu0 0.0
        %611 = vmatpush.msra.mxu0 %v300
        %612 = vmatpush.msra.mxu0 %v299
        %613 = vmatpush.msra.mxu0 %v298
        %614 = vmatpush.msra.mxu0 %v297
        %615 = vmatmul.f32.gmra.mxu0 %v417
        %v616 = vpop.f32.mrf.mxu0
        %v617 = vadd.f32 0.0, %v616
        %618 = vmatmul.f32.gmra.mxu0 %v420
        %v619 = vpop.f32.mrf.mxu0
        %v620 = vadd.f32 0.0, %v619
        %621 = vdwg.mxu0
        %v622 = vadd.f32 %v597, %v617
        %v623 = vadd.f32 %v598, %v620
        %624 = vmatpush.msra.mxu0 0.0
        %625 = vmatpush.msra.mxu0 0.0
        %626 = vmatpush.msra.mxu0 0.0
        %627 = vmatpush.msra.mxu0 0.0
        %628 = vmatpush.msra.mxu0 0.0
        %629 = vmatpush.msra.mxu0 0.0
        %630 = vmatpush.msra.mxu0 0.0
        %631 = vmatpush.msra.mxu0 0.0
        %632 = vmatpush.msra.mxu0 0.0
        %633 = vmatpush.msra.mxu0 0.0
        %634 = vmatpush.msra.mxu0 0.0
        %635 = vmatpush.msra.mxu0 0.0
        %636 = vmatpush.msra.mxu0 %v336
        %637 = vmatpush.msra.mxu0 %v335
        %638 = vmatpush.msra.mxu0 %v334
        %639 = vmatpush.msra.mxu0 %v333
        %640 = vmatmul.f32.gmra.mxu0 %v455
        %v641 = vpop.f32.mrf.mxu0
        %v642 = vadd.f32 0.0, %v641
        %643 = vmatmul.f32.gmra.mxu0 %v457
        %v644 = vpop.f32.mrf.mxu0
        %v645 = vadd.f32 0.0, %v644
        %646 = vdwg.mxu0
        %v647 = vadd.f32 %v622, %v642
        %v648 = vadd.f32 %v623, %v645
        %649 = vmatpush.msra.mxu0 0.0
        %650 = vmatpush.msra.mxu0 0.0
        %651 = vmatpush.msra.mxu0 0.0
        %652 = vmatpush.msra.mxu0 0.0
        %653 = vmatpush.msra.mxu0 0.0
        %654 = vmatpush.msra.mxu0 0.0
        %655 = vmatpush.msra.mxu0 0.0
        %656 = vmatpush.msra.mxu0 0.0
        %657 = vmatpush.msra.mxu0 0.0
        %658 = vmatpush.msra.mxu0 0.0
        %659 = vmatpush.msra.mxu0 0.0
        %660 = vmatpush.msra.mxu0 0.0
        %661 = vmatpush.msra.mxu0 %v373
        %662 = vmatpush.msra.mxu0 %v372
        %663 = vmatpush.msra.mxu0 %v371
        %664 = vmatpush.msra.mxu0 %v370
        %665 = vmatmul.f32.gmra.mxu0 %v492
        %v666 = vpop.f32.mrf.mxu0
        %v667 = vadd.f32 0.0, %v666
        %668 = vmatmul.f32.gmra.mxu0 %v494
        %v669 = vpop.f32.mrf.mxu0
        %v670 = vadd.f32 0.0, %v669
        %671 = vdwg.mxu0
        %v672 = vadd.f32 %v647, %v667
        %v673 = vadd.f32 %v648, %v670
        %s674 = sadd.s32 %s178, 3
        %s675 = smul.u32 %s674, 16
        %s676 = scalar_lea.vmem %s165, %s675
        %v677 = vld [vmem:[%s676] sm:$0xff]
        %v678 = vld [vmem:[%s676 + $0x8] sm:$0xff]
        %v680 = vsel %vm198, %v677, 0
        %v683 = vsel %vm198, %v678, 0
        %685 = vmatpush.msra.mxu0 0.0
        %686 = vmatpush.msra.mxu0 0.0
        %687 = vmatpush.msra.mxu0 0.0
        %688 = vmatpush.msra.mxu0 0.0
        %689 = vmatpush.msra.mxu0 0.0
        %690 = vmatpush.msra.mxu0 0.0
        %691 = vmatpush.msra.mxu0 0.0
        %692 = vmatpush.msra.mxu0 0.0
        %693 = vmatpush.msra.mxu0 0.0
        %694 = vmatpush.msra.mxu0 0.0
        %695 = vmatpush.msra.mxu0 0.0
        %696 = vmatpush.msra.mxu0 0.0
        %697 = vmatpush.msra.mxu0 %v415
        %698 = vmatpush.msra.mxu0 %v414
        %699 = vmatpush.msra.mxu0 %v413
        %700 = vmatpush.msra.mxu0 %v412
        %701 = vmatmul.f32.gmra.mxu0 %v680
        %v702 = vpop.f32.mrf.mxu0
        %v703 = vadd.f32 0.0, %v702
        %704 = vmatmul.f32.gmra.mxu0 %v683
        %v705 = vpop.f32.mrf.mxu0
        %v706 = vadd.f32 0.0, %v705
        %707 = vdwg.mxu0
        %v708 = vadd.f32 %v672, %v703
        %v709 = vadd.f32 %v673, %v706
        %v710 = vrot.slane %v677, 1
        %v711 = vrot.slane %v678, 1
        %v712 = vsel %vm194, %v710, %v711
        %v713 = vsel %vm198, %v712, 0
        %v715 = vsel %vm198, %v711, 0
        %717 = vmatpush.msra.mxu0 0.0
        %718 = vmatpush.msra.mxu0 0.0
        %719 = vmatpush.msra.mxu0 0.0
        %720 = vmatpush.msra.mxu0 0.0
        %721 = vmatpush.msra.mxu0 0.0
        %722 = vmatpush.msra.mxu0 0.0
        %723 = vmatpush.msra.mxu0 0.0
        %724 = vmatpush.msra.mxu0 0.0
        %725 = vmatpush.msra.mxu0 0.0
        %726 = vmatpush.msra.mxu0 0.0
        %727 = vmatpush.msra.mxu0 0.0
        %728 = vmatpush.msra.mxu0 0.0
        %729 = vmatpush.msra.mxu0 %v451
        %730 = vmatpush.msra.mxu0 %v450
        %731 = vmatpush.msra.mxu0 %v449
        %732 = vmatpush.msra.mxu0 %v448
        %733 = vmatmul.f32.gmra.mxu0 %v713
        %v734 = vpop.f32.mrf.mxu0
        %v735 = vadd.f32 0.0, %v734
        %736 = vmatmul.f32.gmra.mxu0 %v715
        %v737 = vpop.f32.mrf.mxu0
        %v738 = vadd.f32 0.0, %v737
        %739 = vdwg.mxu0
        %v740 = vadd.f32 %v708, %v735
        %v741 = vadd.f32 %v709, %v738
        %v742 = vrot.slane %v677, 2
        %v743 = vrot.slane %v678, 2
        %v744 = vsel %vm258, %v742, %v743
        %v745 = vsel %vm198, %v744, 0
        %v747 = vsel %vm198, %v743, 0
        %749 = vmatpush.msra.mxu0 0.0
        %750 = vmatpush.msra.mxu0 0.0
        %751 = vmatpush.msra.mxu0 0.0
        %752 = vmatpush.msra.mxu0 0.0
        %753 = vmatpush.msra.mxu0 0.0
        %754 = vmatpush.msra.mxu0 0.0
        %755 = vmatpush.msra.mxu0 0.0
        %756 = vmatpush.msra.mxu0 0.0
        %757 = vmatpush.msra.mxu0 0.0
        %758 = vmatpush.msra.mxu0 0.0
        %759 = vmatpush.msra.mxu0 0.0
        %760 = vmatpush.msra.mxu0 0.0
        %761 = vmatpush.msra.mxu0 %v488
        %762 = vmatpush.msra.mxu0 %v487
        %763 = vmatpush.msra.mxu0 %v486
        %764 = vmatpush.msra.mxu0 %v485
        %765 = vmatmul.f32.gmra.mxu0 %v745
        %v766 = vpop.f32.mrf.mxu0
        %v767 = vadd.f32 0.0, %v766
        %768 = vmatmul.f32.gmra.mxu0 %v747
        %v769 = vpop.f32.mrf.mxu0
        %v770 = vadd.f32 0.0, %v769
        %771 = vdwg.mxu0
        %v772 = vadd.f32 %v740, %v767
        %v773 = vadd.f32 %v741, %v770
        %v774 = vadd.f32 %v772, %v522
        %v775 = vadd.f32 %v773, %v522
        %v776 = vmax.f32 %v774, 0.0
        %v777 = vmax.f32 %v775, 0.0
        %v778 = vmax.f32 %v526, %v776
        %v779 = vmax.f32 %v527, %v777
        %vm780 = vcmask 523264
        %781 = vst.msk [vmem:[#allocation2] sm:$0xff] %vm780, %v778
        %vm782 = vcmask 521216
        %783 = vst.msk [vmem:[#allocation2 + $0x8] sm:$0x3f] %vm782, %v779
        %v784 = vld [vmem:[#allocation2] ss:$2 sm:$0x7f]
        %s785 = scalar_lea.vmem [#allocation2], 1
        %v786 = vld [vmem:[%s785] ss:$2 sm:$0x7f]
        %v787 = vmax.f32 %v784, %v786
        %s788 = smul.u32 %s173, 8
        %s789 = scalar_lea.vmem %s170, %s788
        %vm790 = vcmask 522240
        %791 = vst.msk [vmem:[%s789] sm:$0x7f] %vm790, %v787
      $region37: #{cnn_forward.4} parent=31 // loop_footer
        %s177 = sadd.s32 1, %s173
      $region38: #{cnn_forward.4} parent=31 // loop_footer_branch
        %172 = sbr.rel target = $region34
      $region39: #{cnn_forward.4} parent=31 // loop_exit
        _
      %p792 = scmp.lt.s32.totalorder %s14, 1
      %s793 = scalar_select %p792, %s14, 1
      %s794 = smul.addr %s793, 7
      %s795 = smul.addr %s794, 8
      %s796 = scalar_lea.vmem %s3, %s795
      // Predicated region
      $region40: #{cnn_forward.4} parent=31 // pred_check
        %p797 = pneg %p100
      $region41: #{cnn_forward.4} parent=31 // pred_check_branch
        %799 = sbr.rel (%p797) target = $region43
      $region42: #{cnn_forward.4} parent=31 // pred_region
        _
      $region43: #{cnn_forward.4} parent=31 // pred_fallthru
        _
    $region32: #{cnn_forward.4} parent=5 // pred_fallthru
      _
    %p800 = scmp.le.s32.totalorder 2, %s9
    // Predicated region
    $region44: #{cnn_forward.4} parent=5 // pred_check
      %p801 = pneg %p800
    $region45: #{cnn_forward.4} parent=5 // pred_check_branch
      %803 = sbr.rel (%p801) target = $region47
    $region46: #{cnn_forward.4} parent=5 // pred_region
      %s804 = ssub.s32 %s9, 2
      // Predicated region
      $region48: #{cnn_forward.4} parent=46 // pred_check
        %p805 = pneg %p106
      $region49: #{cnn_forward.4} parent=46 // pred_check_branch
        %807 = sbr.rel (%p805) target = $region51
      $region50: #{cnn_forward.4} parent=46 // pred_region
        %p808 = scmp.lt.s32.totalorder %s15, 1
        %s809 = scalar_select %p808, %s15, 1
        %s810 = smul.addr %s809, 7
        %s811 = smul.addr %s810, 8
        %s812 = scalar_lea.vmem %s3, %s811
      $region51: #{cnn_forward.4} parent=46 // pred_fallthru
        _
    $region47: #{cnn_forward.4} parent=5 // pred_fallthru
      _
  $region6: #{cnn_forward.4} parent=0 // loop_footer
    %s13 = sadd.s32 1, %s9
  $region7: #{cnn_forward.4} parent=0 // loop_footer_branch
    %8 = sbr.rel target = $region3
  $region8: #{cnn_forward.4} parent=0 // loop_exit
    _

// kernel: cnn_forward.5
$region0: #{cnn_forward.5}
  #allocation0 [shape = 'u32[]', space=smem, size = 0x4, offset = 0x4, fixed_abs, tag = 'smem constant byte address 0x4 - core index']
  #allocation1 [shape = 'u32[72,128]{1,0:T(1,128)}', space=vmem, size = 0x9000, scoped, tag = 'internal scratch']
  %s0 = inlined_call_operand.vmem [shape: f32[2,3136], index: 0, kind: input, shape index: {}]
  %s1 = inlined_call_operand.vmem [shape: f32[3136,128], index: 1, kind: input, shape index: {}]
  %s2 = inlined_call_operand.vmem [shape: f32[1,128], index: 2, kind: input, shape index: {}]
  %s3 = inlined_call_operand.vmem [shape: f32[128,10], index: 3, kind: input, shape index: {}]
  %s4 = inlined_call_operand.vmem [shape: f32[1,10], index: 4, kind: input, shape index: {}]
  %s5 = inlined_call_operand.hbm [shape: f32[2,10], index: 5, kind: output, shape index: {}]
  %s6 = sld [smem:[#allocation0]]
  $region30: #{cnn_forward.5} parent=0
    _
  %s8 = ssub.s32 1, %s6
  %s9 = scalar_select 0, %s8, %s6
  $region1: #{cnn_forward.5} parent=0
    #allocation2 [shape = 'u8[1024]{0}', space=vmem, size = 0x400, scoped, tag = 'output window, operand 0, single buffered']
    #allocation3 [shape = 's32[1]{0}', space=sflag, size = 0x4, scoped, tag = 'scoped memory for cnn_forward.5']
    %10 = vsyncpa [#allocation3], 0
    // Predicated region
    $region2: #{cnn_forward.5} parent=1 // pred_check
      _
    $region3: #{cnn_forward.5} parent=1 // pred_check_branch
      %12 = sbr.rel (0) target = $region5
    $region4: #{cnn_forward.5} parent=1 // pred_region
      _
    $region5: #{cnn_forward.5} parent=1 // pred_fallthru
      _
    // Predicated region
    $region6: #{cnn_forward.5} parent=1 // pred_check
      _
    $region7: #{cnn_forward.5} parent=1 // pred_check_branch
      %14 = sbr.rel (0) target = $region9
    $region8: #{cnn_forward.5} parent=1 // pred_region
      _
    $region9: #{cnn_forward.5} parent=1 // pred_fallthru
      _
    // Predicated region
    $region10: #{cnn_forward.5} parent=1 // pred_check
      _
    $region11: #{cnn_forward.5} parent=1 // pred_check_branch
      %16 = sbr.rel (0) target = $region13
    $region12: #{cnn_forward.5} parent=1 // pred_region
      _
    $region13: #{cnn_forward.5} parent=1 // pred_fallthru
      _
    // Predicated region
    $region14: #{cnn_forward.5} parent=1 // pred_check
      _
    $region15: #{cnn_forward.5} parent=1 // pred_check_branch
      %18 = sbr.rel (0) target = $region17
    $region16: #{cnn_forward.5} parent=1 // pred_region
      _
    $region17: #{cnn_forward.5} parent=1 // pred_fallthru
      _
    // Predicated region
    $region18: #{cnn_forward.5} parent=1 // pred_check
      _
    $region19: #{cnn_forward.5} parent=1 // pred_check_branch
      %20 = sbr.rel (0) target = $region21
    $region20: #{cnn_forward.5} parent=1 // pred_region
      _
    $region21: #{cnn_forward.5} parent=1 // pred_fallthru
      _
    %v21 = vld [vmem:[%s0] sm:$0xff]
    %v22 = vld [vmem:[%s0 + $0x8] sm:$0xff]
    %v23 = vld [vmem:[%s0 + $0x10] sm:$0xff]
    %v24 = vld [vmem:[%s0 + $0x18] sm:$0xff]
    %v25 = vld [vmem:[%s0 + $0x20] sm:$0xff]
    %v26 = vld [vmem:[%s0 + $0x28] sm:$0xff]
    %v27 = vld [vmem:[%s0 + $0x30] sm:$0x3]
    %v28 = vld [vmem:[%s1] sm:$0xff]
    %v29 = vld [vmem:[%s1 + $0x8] sm:$0xff]
    %v30 = vld [vmem:[%s1 + $0x10] sm:$0xff]
    %v31 = vld [vmem:[%s1 + $0x18] sm:$0xff]
    %v32 = vld [vmem:[%s1 + $0x20] sm:$0xff]
    %v33 = vld [vmem:[%s1 + $0x28] sm:$0xff]
    %v34 = vld [vmem:[%s1 + $0x30] sm:$0xff]
    %v35 = vld [vmem:[%s1 + $0x38] sm:$0xff]
    %v36 = vld [vmem:[%s1 + $0x40] sm:$0xff]
    %v37 = vld [vmem:[%s1 + $0x48] sm:$0xff]
    %v38 = vld [vmem:[%s1 + $0x50] sm:$0xff]
    %v39 = vld [vmem:[%s1 + $0x58] sm:$0xff]
    %v40 = vld [vmem:[%s1 + $0x60] sm:$0xff]
    %v41 = vld [vmem:[%s1 + $0x68] sm:$0xff]
    %v42 = vld [vmem:[%s1 + $0x70] sm:$0xff]
    %v43 = vld [vmem:[%s1 + $0x78] sm:$0xff]
    %v44 = vld [vmem:[%s1 + $0x80] sm:$0xff]
    %v45 = vld [vmem:[%s1 + $0x88] sm:$0xff]
    %v46 = vld [vmem:[%s1 + $0x90] sm:$0xff]
    %v47 = vld [vmem:[%s1 + $0x98] sm:$0xff]
    %v48 = vld [vmem:[%s1 + $0xa0] sm:$0xff]
    %v49 = vld [vmem:[%s1 + $0xa8] sm:$0xff]
    %v50 = vld [vmem:[%s1 + $0xb0] sm:$0xff]
    %v51 = vld [vmem:[%s1 + $0xb8] sm:$0xff]
    %v52 = vld [vmem:[%s1 + $0xc0] sm:$0xff]
    %v53 = vld [vmem:[%s1 + $0xc8] sm:$0xff]
    %v54 = vld [vmem:[%s1 + $0xd0] sm:$0xff]
    %v55 = vld [vmem:[%s1 + $0xd8] sm:$0xff]
    %v56 = vld [vmem:[%s1 + $0xe0] sm:$0xff]
    %v57 = vld [vmem:[%s1 + $0xe8] sm:$0xff]
    %v58 = vld [vmem:[%s1 + $0xf0] sm:$0xff]
    %v59 = vld [vmem:[%s1 + $0xf8] sm:$0xff]
    %v60 = vld [vmem:[%s1 + $0x100] sm:$0xff]
    %v61 = vld [vmem:[%s1 + $0x108] sm:$0xff]
    %v62 = vld [vmem:[%s1 + $0x110] sm:$0xff]
    %v63 = vld [vmem:[%s1 + $0x118] sm:$0xff]
    %v64 = vld [vmem:[%s1 + $0x120] sm:$0xff]
    %v65 = vld [vmem:[%s1 + $0x128] sm:$0xff]
    %v66 = vld [vmem:[%s1 + $0x130] sm:$0xff]
    %v67 = vld [vmem:[%s1 + $0x138] sm:$0xff]
    %v68 = vld [vmem:[%s1 + $0x140] sm:$0xff]
    %v69 = vld [vmem:[%s1 + $0x148] sm:$0xff]
    %v70 = vld [vmem:[%s1 + $0x150] sm:$0xff]
    %v71 = vld [vmem:[%s1 + $0x158] sm:$0xff]
    %v72 = vld [vmem:[%s1 + $0x160] sm:$0xff]
    %v73 = vld [vmem:[%s1 + $0x168] sm:$0xff]
    %v74 = vld [vmem:[%s1 + $0x170] sm:$0xff]
    %v75 = vld [vmem:[%s1 + $0x178] sm:$0xff]
    %v76 = vld [vmem:[%s1 + $0x180] sm:$0xff]
    %v77 = vld [vmem:[%s1 + $0x188] sm:$0xff]
    %v78 = vld [vmem:[%s1 + $0x190] sm:$0xff]
    %v79 = vld [vmem:[%s1 + $0x198] sm:$0xff]
    %v80 = vld [vmem:[%s1 + $0x1a0] sm:$0xff]
    %v81 = vld [vmem:[%s1 + $0x1a8] sm:$0xff]
    %v82 = vld [vmem:[%s1 + $0x1b0] sm:$0xff]
    %v83 = vld [vmem:[%s1 + $0x1b8] sm:$0xff]
    %v84 = vld [vmem:[%s1 + $0x1c0] sm:$0xff]
    %v85 = vld [vmem:[%s1 + $0x1c8] sm:$0xff]
    %v86 = vld [vmem:[%s1 + $0x1d0] sm:$0xff]
    %v87 = vld [vmem:[%s1 + $0x1d8] sm:$0xff]
    %v88 = vld [vmem:[%s1 + $0x1e0] sm:$0xff]
    %v89 = vld [vmem:[%s1 + $0x1e8] sm:$0xff]
    %v90 = vld [vmem:[%s1 + $0x1f0] sm:$0xff]
    %v91 = vld [vmem:[%s1 + $0x1f8] sm:$0xff]
    %v92 = vld [vmem:[%s1 + $0x200] sm:$0xff]
    %v93 = vld [vmem:[%s1 + $0x208] sm:$0xff]
    %v94 = vld [vmem:[%s1 + $0x210] sm:$0xff]
    %v95 = vld [vmem:[%s1 + $0x218] sm:$0xff]
    %v96 = vld [vmem:[%s1 + $0x220] sm:$0xff]
    %v97 = vld [vmem:[%s1 + $0x228] sm:$0xff]
    %v98 = vld [vmem:[%s1 + $0x230] sm:$0xff]
    %v99 = vld [vmem:[%s1 + $0x238] sm:$0xff]
    %v100 = vld [vmem:[%s1 + $0x240] sm:$0xff]
    %v101 = vld [vmem:[%s1 + $0x248] sm:$0xff]
    %v102 = vld [vmem:[%s1 + $0x250] sm:$0xff]
    %v103 = vld [vmem:[%s1 + $0x258] sm:$0xff]
    %v104 = vld [vmem:[%s1 + $0x260] sm:$0xff]
    %v105 = vld [vmem:[%s1 + $0x268] sm:$0xff]
    %v106 = vld [vmem:[%s1 + $0x270] sm:$0xff]
    %v107 = vld [vmem:[%s1 + $0x278] sm:$0xff]
    %v108 = vld [vmem:[%s1 + $0x280] sm:$0xff]
    %v109 = vld [vmem:[%s1 + $0x288] sm:$0xff]
    %v110 = vld [vmem:[%s1 + $0x290] sm:$0xff]
    %v111 = vld [vmem:[%s1 + $0x298] sm:$0xff]
    %v112 = vld [vmem:[%s1 + $0x2a0] sm:$0xff]
    %v113 = vld [vmem:[%s1 + $0x2a8] sm:$0xff]
    %v114 = vld [vmem:[%s1 + $0x2b0] sm:$0xff]
    %v115 = vld [vmem:[%s1 + $0x2b8] sm:$0xff]
    %v116 = vld [vmem:[%s1 + $0x2c0] sm:$0xff]
    %v117 = vld [vmem:[%s1 + $0x2c8] sm:$0xff]
    %v118 = vld [vmem:[%s1 + $0x2d0] sm:$0xff]
    %v119 = vld [vmem:[%s1 + $0x2d8] sm:$0xff]
    %v120 = vld [vmem:[%s1 + $0x2e0] sm:$0xff]
    %v121 = vld [vmem:[%s1 + $0x2e8] sm:$0xff]
    %v122 = vld [vmem:[%s1 + $0x2f0] sm:$0xff]
    %v123 = vld [vmem:[%s1 + $0x2f8] sm:$0xff]
    %v124 = vld [vmem:[%s1 + $0x300] sm:$0xff]
    %v125 = vld [vmem:[%s1 + $0x308] sm:$0xff]
    %v126 = vld [vmem:[%s1 + $0x310] sm:$0xff]
    %v127 = vld [vmem:[%s1 + $0x318] sm:$0xff]
    %v128 = vld [vmem:[%s1 + $0x320] sm:$0xff]
    %v129 = vld [vmem:[%s1 + $0x328] sm:$0xff]
    %v130 = vld [vmem:[%s1 + $0x330] sm:$0xff]
    %v131 = vld [vmem:[%s1 + $0x338] sm:$0xff]
    %v132 = vld [vmem:[%s1 + $0x340] sm:$0xff]
    %v133 = vld [vmem:[%s1 + $0x348] sm:$0xff]
    %v134 = vld [vmem:[%s1 + $0x350] sm:$0xff]
    %v135 = vld [vmem:[%s1 + $0x358] sm:$0xff]
    %v136 = vld [vmem:[%s1 + $0x360] sm:$0xff]
    %v137 = vld [vmem:[%s1 + $0x368] sm:$0xff]
    %v138 = vld [vmem:[%s1 + $0x370] sm:$0xff]
    %v139 = vld [vmem:[%s1 + $0x378] sm:$0xff]
    %v140 = vld [vmem:[%s1 + $0x380] sm:$0xff]
    %v141 = vld [vmem:[%s1 + $0x388] sm:$0xff]
    %v142 = vld [vmem:[%s1 + $0x390] sm:$0xff]
    %v143 = vld [vmem:[%s1 + $0x398] sm:$0xff]
    %v144 = vld [vmem:[%s1 + $0x3a0] sm:$0xff]
    %v145 = vld [vmem:[%s1 + $0x3a8] sm:$0xff]
    %v146 = vld [vmem:[%s1 + $0x3b0] sm:$0xff]
    %v147 = vld [vmem:[%s1 + $0x3b8] sm:$0xff]
    %v148 = vld [vmem:[%s1 + $0x3c0] sm:$0xff]
    %v149 = vld [vmem:[%s1 + $0x3c8] sm:$0xff]
    %v150 = vld [vmem:[%s1 + $0x3d0] sm:$0xff]
    %v151 = vld [vmem:[%s1 + $0x3d8] sm:$0xff]
    %v152 = vld [vmem:[%s1 + $0x3e0] sm:$0xff]
    %v153 = vld [vmem:[%s1 + $0x3e8] sm:$0xff]
    %v154 = vld [vmem:[%s1 + $0x3f0] sm:$0xff]
    %v155 = vld [vmem:[%s1 + $0x3f8] sm:$0xff]
    %v156 = vld [vmem:[%s1 + $0x400] sm:$0xff]
    %v157 = vld [vmem:[%s1 + $0x408] sm:$0xff]
    %v158 = vld [vmem:[%s1 + $0x410] sm:$0xff]
    %v159 = vld [vmem:[%s1 + $0x418] sm:$0xff]
    %v160 = vld [vmem:[%s1 + $0x420] sm:$0xff]
    %v161 = vld [vmem:[%s1 + $0x428] sm:$0xff]
    %v162 = vld [vmem:[%s1 + $0x430] sm:$0xff]
    %v163 = vld [vmem:[%s1 + $0x438] sm:$0xff]
    %v164 = vld [vmem:[%s1 + $0x440] sm:$0xff]
    %v165 = vld [vmem:[%s1 + $0x448] sm:$0xff]
    %v166 = vld [vmem:[%s1 + $0x450] sm:$0xff]
    %v167 = vld [vmem:[%s1 + $0x458] sm:$0xff]
    %v168 = vld [vmem:[%s1 + $0x460] sm:$0xff]
    %v169 = vld [vmem:[%s1 + $0x468] sm:$0xff]
    %v170 = vld [vmem:[%s1 + $0x470] sm:$0xff]
    %v171 = vld [vmem:[%s1 + $0x478] sm:$0xff]
    %v172 = vld [vmem:[%s1 + $0x480] sm:$0xff]
    %v173 = vld [vmem:[%s1 + $0x488] sm:$0xff]
    %v174 = vld [vmem:[%s1 + $0x490] sm:$0xff]
    %v175 = vld [vmem:[%s1 + $0x498] sm:$0xff]
    %v176 = vld [vmem:[%s1 + $0x4a0] sm:$0xff]
    %v177 = vld [vmem:[%s1 + $0x4a8] sm:$0xff]
    %v178 = vld [vmem:[%s1 + $0x4b0] sm:$0xff]
    %v179 = vld [vmem:[%s1 + $0x4b8] sm:$0xff]
    %v180 = vld [vmem:[%s1 + $0x4c0] sm:$0xff]
    %v181 = vld [vmem:[%s1 + $0x4c8] sm:$0xff]
    %v182 = vld [vmem:[%s1 + $0x4d0] sm:$0xff]
    %v183 = vld [vmem:[%s1 + $0x4d8] sm:$0xff]
    %v184 = vld [vmem:[%s1 + $0x4e0] sm:$0xff]
    %v185 = vld [vmem:[%s1 + $0x4e8] sm:$0xff]
    %v186 = vld [vmem:[%s1 + $0x4f0] sm:$0xff]
    %v187 = vld [vmem:[%s1 + $0x4f8] sm:$0xff]
    %v188 = vld [vmem:[%s1 + $0x500] sm:$0xff]
    %v189 = vld [vmem:[%s1 + $0x508] sm:$0xff]
    %v190 = vld [vmem:[%s1 + $0x510] sm:$0xff]
    %v191 = vld [vmem:[%s1 + $0x518] sm:$0xff]
    %v192 = vld [vmem:[%s1 + $0x520] sm:$0xff]
    %v193 = vld [vmem:[%s1 + $0x528] sm:$0xff]
    %v194 = vld [vmem:[%s1 + $0x530] sm:$0xff]
    %v195 = vld [vmem:[%s1 + $0x538] sm:$0xff]
    %v196 = vld [vmem:[%s1 + $0x540] sm:$0xff]
    %v197 = vld [vmem:[%s1 + $0x548] sm:$0xff]
    %v198 = vld [vmem:[%s1 + $0x550] sm:$0xff]
    %v199 = vld [vmem:[%s1 + $0x558] sm:$0xff]
    %v200 = vld [vmem:[%s1 + $0x560] sm:$0xff]
    %v201 = vld [vmem:[%s1 + $0x568] sm:$0xff]
    %v202 = vld [vmem:[%s1 + $0x570] sm:$0xff]
    %v203 = vld [vmem:[%s1 + $0x578] sm:$0xff]
    %v204 = vld [vmem:[%s1 + $0x580] sm:$0xff]
    %v205 = vld [vmem:[%s1 + $0x588] sm:$0xff]
    %v206 = vld [vmem:[%s1 + $0x590] sm:$0xff]
    %v207 = vld [vmem:[%s1 + $0x598] sm:$0xff]
    %v208 = vld [vmem:[%s1 + $0x5a0] sm:$0xff]
    %v209 = vld [vmem:[%s1 + $0x5a8] sm:$0xff]
    %v210 = vld [vmem:[%s1 + $0x5b0] sm:$0xff]
    %v211 = vld [vmem:[%s1 + $0x5b8] sm:$0xff]
    %v212 = vld [vmem:[%s1 + $0x5c0] sm:$0xff]
    %v213 = vld [vmem:[%s1 + $0x5c8] sm:$0xff]
    %v214 = vld [vmem:[%s1 + $0x5d0] sm:$0xff]
    %v215 = vld [vmem:[%s1 + $0x5d8] sm:$0xff]
    %v216 = vld [vmem:[%s1 + $0x5e0] sm:$0xff]
    %v217 = vld [vmem:[%s1 + $0x5e8] sm:$0xff]
    %v218 = vld [vmem:[%s1 + $0x5f0] sm:$0xff]
    %v219 = vld [vmem:[%s1 + $0x5f8] sm:$0xff]
    %v220 = vld [vmem:[%s1 + $0x600] sm:$0xff]
    %v221 = vld [vmem:[%s1 + $0x608] sm:$0xff]
    %v222 = vld [vmem:[%s1 + $0x610] sm:$0xff]
    %v223 = vld [vmem:[%s1 + $0x618] sm:$0xff]
    %v224 = vld [vmem:[%s1 + $0x620] sm:$0xff]
    %v225 = vld [vmem:[%s1 + $0x628] sm:$0xff]
    %v226 = vld [vmem:[%s1 + $0x630] sm:$0xff]
    %v227 = vld [vmem:[%s1 + $0x638] sm:$0xff]
    %v228 = vld [vmem:[%s1 + $0x640] sm:$0xff]
    %v229 = vld [vmem:[%s1 + $0x648] sm:$0xff]
    %v230 = vld [vmem:[%s1 + $0x650] sm:$0xff]
    %v231 = vld [vmem:[%s1 + $0x658] sm:$0xff]
    %v232 = vld [vmem:[%s1 + $0x660] sm:$0xff]
    %v233 = vld [vmem:[%s1 + $0x668] sm:$0xff]
    %v234 = vld [vmem:[%s1 + $0x670] sm:$0xff]
    %v235 = vld [vmem:[%s1 + $0x678] sm:$0xff]
    %v236 = vld [vmem:[%s1 + $0x680] sm:$0xff]
    %v237 = vld [vmem:[%s1 + $0x688] sm:$0xff]
    %v238 = vld [vmem:[%s1 + $0x690] sm:$0xff]
    %v239 = vld [vmem:[%s1 + $0x698] sm:$0xff]
    %v240 = vld [vmem:[%s1 + $0x6a0] sm:$0xff]
    %v241 = vld [vmem:[%s1 + $0x6a8] sm:$0xff]
    %v242 = vld [vmem:[%s1 + $0x6b0] sm:$0xff]
    %v243 = vld [vmem:[%s1 + $0x6b8] sm:$0xff]
    %v244 = vld [vmem:[%s1 + $0x6c0] sm:$0xff]
    %v245 = vld [vmem:[%s1 + $0x6c8] sm:$0xff]
    %v246 = vld [vmem:[%s1 + $0x6d0] sm:$0xff]
    %v247 = vld [vmem:[%s1 + $0x6d8] sm:$0xff]
    %v248 = vld [vmem:[%s1 + $0x6e0] sm:$0xff]
    %v249 = vld [vmem:[%s1 + $0x6e8] sm:$0xff]
    %v250 = vld [vmem:[%s1 + $0x6f0] sm:$0xff]
    %v251 = vld [vmem:[%s1 + $0x6f8] sm:$0xff]
    %v252 = vld [vmem:[%s1 + $0x700] sm:$0xff]
    %v253 = vld [vmem:[%s1 + $0x708] sm:$0xff]
    %v254 = vld [vmem:[%s1 + $0x710] sm:$0xff]
    %v255 = vld [vmem:[%s1 + $0x718] sm:$0xff]
    %v256 = vld [vmem:[%s1 + $0x720] sm:$0xff]
    %v257 = vld [vmem:[%s1 + $0x728] sm:$0xff]
    %v258 = vld [vmem:[%s1 + $0x730] sm:$0xff]
    %v259 = vld [vmem:[%s1 + $0x738] sm:$0xff]
    %v260 = vld [vmem:[%s1 + $0x740] sm:$0xff]
    %v261 = vld [vmem:[%s1 + $0x748] sm:$0xff]
    %v262 = vld [vmem:[%s1 + $0x750] sm:$0xff]
    %v263 = vld [vmem:[%s1 + $0x758] sm:$0xff]
    %v264 = vld [vmem:[%s1 + $0x760] sm:$0xff]
    %v265 = vld [vmem:[%s1 + $0x768] sm:$0xff]
    %v266 = vld [vmem:[%s1 + $0x770] sm:$0xff]
    %v267 = vld [vmem:[%s1 + $0x778] sm:$0xff]
    %v268 = vld [vmem:[%s1 + $0x780] sm:$0xff]
    %v269 = vld [vmem:[%s1 + $0x788] sm:$0xff]
    %v270 = vld [vmem:[%s1 + $0x790] sm:$0xff]
    %v271 = vld [vmem:[%s1 + $0x798] sm:$0xff]
    %v272 = vld [vmem:[%s1 + $0x7a0] sm:$0xff]
    %v273 = vld [vmem:[%s1 + $0x7a8] sm:$0xff]
    %v274 = vld [vmem:[%s1 + $0x7b0] sm:$0xff]
    %v275 = vld [vmem:[%s1 + $0x7b8] sm:$0xff]
    %v276 = vld [vmem:[%s1 + $0x7c0] sm:$0xff]
    %v277 = vld [vmem:[%s1 + $0x7c8] sm:$0xff]
    %v278 = vld [vmem:[%s1 + $0x7d0] sm:$0xff]
    %v279 = vld [vmem:[%s1 + $0x7d8] sm:$0xff]
    %v280 = vld [vmem:[%s1 + $0x7e0] sm:$0xff]
    %v281 = vld [vmem:[%s1 + $0x7e8] sm:$0xff]
    %v282 = vld [vmem:[%s1 + $0x7f0] sm:$0xff]
    %v283 = vld [vmem:[%s1 + $0x7f8] sm:$0xff]
    %v284 = vld [vmem:[%s1 + $0x800] sm:$0xff]
    %v285 = vld [vmem:[%s1 + $0x808] sm:$0xff]
    %v286 = vld [vmem:[%s1 + $0x810] sm:$0xff]
    %v287 = vld [vmem:[%s1 + $0x818] sm:$0xff]
    %v288 = vld [vmem:[%s1 + $0x820] sm:$0xff]
    %v289 = vld [vmem:[%s1 + $0x828] sm:$0xff]
    %v290 = vld [vmem:[%s1 + $0x830] sm:$0xff]
    %v291 = vld [vmem:[%s1 + $0x838] sm:$0xff]
    %v292 = vld [vmem:[%s1 + $0x840] sm:$0xff]
    %v293 = vld [vmem:[%s1 + $0x848] sm:$0xff]
    %v294 = vld [vmem:[%s1 + $0x850] sm:$0xff]
    %v295 = vld [vmem:[%s1 + $0x858] sm:$0xff]
    %v296 = vld [vmem:[%s1 + $0x860] sm:$0xff]
    %v297 = vld [vmem:[%s1 + $0x868] sm:$0xff]
    %v298 = vld [vmem:[%s1 + $0x870] sm:$0xff]
    %v299 = vld [vmem:[%s1 + $0x878] sm:$0xff]
    %v300 = vld [vmem:[%s1 + $0x880] sm:$0xff]
    %v301 = vld [vmem:[%s1 + $0x888] sm:$0xff]
    %v302 = vld [vmem:[%s1 + $0x890] sm:$0xff]
    %v303 = vld [vmem:[%s1 + $0x898] sm:$0xff]
    %v304 = vld [vmem:[%s1 + $0x8a0] sm:$0xff]
    %v305 = vld [vmem:[%s1 + $0x8a8] sm:$0xff]
    %v306 = vld [vmem:[%s1 + $0x8b0] sm:$0xff]
    %v307 = vld [vmem:[%s1 + $0x8b8] sm:$0xff]
    %v308 = vld [vmem:[%s1 + $0x8c0] sm:$0xff]
    %v309 = vld [vmem:[%s1 + $0x8c8] sm:$0xff]
    %v310 = vld [vmem:[%s1 + $0x8d0] sm:$0xff]
    %v311 = vld [vmem:[%s1 + $0x8d8] sm:$0xff]
    %v312 = vld [vmem:[%s1 + $0x8e0] sm:$0xff]
    %v313 = vld [vmem:[%s1 + $0x8e8] sm:$0xff]
    %v314 = vld [vmem:[%s1 + $0x8f0] sm:$0xff]
    %v315 = vld [vmem:[%s1 + $0x8f8] sm:$0xff]
    %v316 = vld [vmem:[%s1 + $0x900] sm:$0xff]
    %v317 = vld [vmem:[%s1 + $0x908] sm:$0xff]
    %v318 = vld [vmem:[%s1 + $0x910] sm:$0xff]
    %v319 = vld [vmem:[%s1 + $0x918] sm:$0xff]
    %v320 = vld [vmem:[%s1 + $0x920] sm:$0xff]
    %v321 = vld [vmem:[%s1 + $0x928] sm:$0xff]
    %v322 = vld [vmem:[%s1 + $0x930] sm:$0xff]
    %v323 = vld [vmem:[%s1 + $0x938] sm:$0xff]
    %v324 = vld [vmem:[%s1 + $0x940] sm:$0xff]
    %v325 = vld [vmem:[%s1 + $0x948] sm:$0xff]
    %v326 = vld [vmem:[%s1 + $0x950] sm:$0xff]
    %v327 = vld [vmem:[%s1 + $0x958] sm:$0xff]
    %v328 = vld [vmem:[%s1 + $0x960] sm:$0xff]
    %v329 = vld [vmem:[%s1 + $0x968] sm:$0xff]
    %v330 = vld [vmem:[%s1 + $0x970] sm:$0xff]
    %v331 = vld [vmem:[%s1 + $0x978] sm:$0xff]
    %v332 = vld [vmem:[%s1 + $0x980] sm:$0xff]
    %v333 = vld [vmem:[%s1 + $0x988] sm:$0xff]
    %v334 = vld [vmem:[%s1 + $0x990] sm:$0xff]
    %v335 = vld [vmem:[%s1 + $0x998] sm:$0xff]
    %v336 = vld [vmem:[%s1 + $0x9a0] sm:$0xff]
    %v337 = vld [vmem:[%s1 + $0x9a8] sm:$0xff]
    %v338 = vld [vmem:[%s1 + $0x9b0] sm:$0xff]
    %v339 = vld [vmem:[%s1 + $0x9b8] sm:$0xff]
    %v340 = vld [vmem:[%s1 + $0x9c0] sm:$0xff]
    %v341 = vld [vmem:[%s1 + $0x9c8] sm:$0xff]
    %v342 = vld [vmem:[%s1 + $0x9d0] sm:$0xff]
    %v343 = vld [vmem:[%s1 + $0x9d8] sm:$0xff]
    %v344 = vld [vmem:[%s1 + $0x9e0] sm:$0xff]
    %v345 = vld [vmem:[%s1 + $0x9e8] sm:$0xff]
    %v346 = vld [vmem:[%s1 + $0x9f0] sm:$0xff]
    %v347 = vld [vmem:[%s1 + $0x9f8] sm:$0xff]
    %v348 = vld [vmem:[%s1 + $0xa00] sm:$0xff]
    %v349 = vld [vmem:[%s1 + $0xa08] sm:$0xff]
    %v350 = vld [vmem:[%s1 + $0xa10] sm:$0xff]
    %v351 = vld [vmem:[%s1 + $0xa18] sm:$0xff]
    %v352 = vld [vmem:[%s1 + $0xa20] sm:$0xff]
    %v353 = vld [vmem:[%s1 + $0xa28] sm:$0xff]
    %v354 = vld [vmem:[%s1 + $0xa30] sm:$0xff]
    %v355 = vld [vmem:[%s1 + $0xa38] sm:$0xff]
    %v356 = vld [vmem:[%s1 + $0xa40] sm:$0xff]
    %v357 = vld [vmem:[%s1 + $0xa48] sm:$0xff]
    %v358 = vld [vmem:[%s1 + $0xa50] sm:$0xff]
    %v359 = vld [vmem:[%s1 + $0xa58] sm:$0xff]
    %v360 = vld [vmem:[%s1 + $0xa60] sm:$0xff]
    %v361 = vld [vmem:[%s1 + $0xa68] sm:$0xff]
    %v362 = vld [vmem:[%s1 + $0xa70] sm:$0xff]
    %v363 = vld [vmem:[%s1 + $0xa78] sm:$0xff]
    %v364 = vld [vmem:[%s1 + $0xa80] sm:$0xff]
    %v365 = vld [vmem:[%s1 + $0xa88] sm:$0xff]
    %v366 = vld [vmem:[%s1 + $0xa90] sm:$0xff]
    %v367 = vld [vmem:[%s1 + $0xa98] sm:$0xff]
    %v368 = vld [vmem:[%s1 + $0xaa0] sm:$0xff]
    %v369 = vld [vmem:[%s1 + $0xaa8] sm:$0xff]
    %v370 = vld [vmem:[%s1 + $0xab0] sm:$0xff]
    %v371 = vld [vmem:[%s1 + $0xab8] sm:$0xff]
    %v372 = vld [vmem:[%s1 + $0xac0] sm:$0xff]
    %v373 = vld [vmem:[%s1 + $0xac8] sm:$0xff]
    %v374 = vld [vmem:[%s1 + $0xad0] sm:$0xff]
    %v375 = vld [vmem:[%s1 + $0xad8] sm:$0xff]
    %v376 = vld [vmem:[%s1 + $0xae0] sm:$0xff]
    %v377 = vld [vmem:[%s1 + $0xae8] sm:$0xff]
    %v378 = vld [vmem:[%s1 + $0xaf0] sm:$0xff]
    %v379 = vld [vmem:[%s1 + $0xaf8] sm:$0xff]
    %v380 = vld [vmem:[%s1 + $0xb00] sm:$0xff]
    %v381 = vld [vmem:[%s1 + $0xb08] sm:$0xff]
    %v382 = vld [vmem:[%s1 + $0xb10] sm:$0xff]
    %v383 = vld [vmem:[%s1 + $0xb18] sm:$0xff]
    %v384 = vld [vmem:[%s1 + $0xb20] sm:$0xff]
    %v385 = vld [vmem:[%s1 + $0xb28] sm:$0xff]
    %v386 = vld [vmem:[%s1 + $0xb30] sm:$0xff]
    %v387 = vld [vmem:[%s1 + $0xb38] sm:$0xff]
    %v388 = vld [vmem:[%s1 + $0xb40] sm:$0xff]
    %v389 = vld [vmem:[%s1 + $0xb48] sm:$0xff]
    %v390 = vld [vmem:[%s1 + $0xb50] sm:$0xff]
    %v391 = vld [vmem:[%s1 + $0xb58] sm:$0xff]
    %v392 = vld [vmem:[%s1 + $0xb60] sm:$0xff]
    %v393 = vld [vmem:[%s1 + $0xb68] sm:$0xff]
    %v394 = vld [vmem:[%s1 + $0xb70] sm:$0xff]
    %v395 = vld [vmem:[%s1 + $0xb78] sm:$0xff]
    %v396 = vld [vmem:[%s1 + $0xb80] sm:$0xff]
    %v397 = vld [vmem:[%s1 + $0xb88] sm:$0xff]
    %v398 = vld [vmem:[%s1 + $0xb90] sm:$0xff]
    %v399 = vld [vmem:[%s1 + $0xb98] sm:$0xff]
    %v400 = vld [vmem:[%s1 + $0xba0] sm:$0xff]
    %v401 = vld [vmem:[%s1 + $0xba8] sm:$0xff]
    %v402 = vld [vmem:[%s1 + $0xbb0] sm:$0xff]
    %v403 = vld [vmem:[%s1 + $0xbb8] sm:$0xff]
    %v404 = vld [vmem:[%s1 + $0xbc0] sm:$0xff]
    %v405 = vld [vmem:[%s1 + $0xbc8] sm:$0xff]
    %v406 = vld [vmem:[%s1 + $0xbd0] sm:$0xff]
    %v407 = vld [vmem:[%s1 + $0xbd8] sm:$0xff]
    %v408 = vld [vmem:[%s1 + $0xbe0] sm:$0xff]
    %v409 = vld [vmem:[%s1 + $0xbe8] sm:$0xff]
    %v410 = vld [vmem:[%s1 + $0xbf0] sm:$0xff]
    %v411 = vld [vmem:[%s1 + $0xbf8] sm:$0xff]
    %v412 = vld [vmem:[%s1 + $0xc00] sm:$0xff]
    %v413 = vld [vmem:[%s1 + $0xc08] sm:$0xff]
    %v414 = vld [vmem:[%s1 + $0xc10] sm:$0xff]
    %v415 = vld [vmem:[%s1 + $0xc18] sm:$0xff]
    %v416 = vld [vmem:[%s1 + $0xc20] sm:$0xff]
    %v417 = vld [vmem:[%s1 + $0xc28] sm:$0xff]
    %v418 = vld [vmem:[%s1 + $0xc30] sm:$0xff]
    %v419 = vld [vmem:[%s1 + $0xc38] sm:$0xff]
    %v420 = vld [vmem:[%s2] sm:$0x1]
    %v422 = vperm.slane %v420, 0
    %431 = vst [vmem:[#allocation1] ss:$4 sm:$0xff] %v21
    %s432 = scalar_lea.vmem [#allocation1], 32
    %433 = vst [vmem:[%s432] ss:$4 sm:$0xff] %v22
    %v434 = vld.sshfl [vmem:[#allocation1] sm:$0xff pattern:$0x73625140]
    %v435 = vld.sshfl [vmem:[#allocation1 + $0x8] sm:$0xff pattern:$0x73625140]
    %v436 = vld.sshfl [vmem:[#allocation1 + $0x10] sm:$0xff pattern:$0x73625140]
    %v437 = vld.sshfl [vmem:[#allocation1 + $0x18] sm:$0xff pattern:$0x73625140]
    %v438 = vld.sshfl [vmem:[#allocation1 + $0x20] sm:$0xff pattern:$0x73625140]
    %v439 = vld.sshfl [vmem:[#allocation1 + $0x28] sm:$0xff pattern:$0x73625140]
    %v440 = vld.sshfl [vmem:[#allocation1 + $0x30] sm:$0xff pattern:$0x73625140]
    %v441 = vld.sshfl [vmem:[#allocation1 + $0x38] sm:$0xff pattern:$0x73625140]
    %442 = vst [vmem:[#allocation1] ss:$4 sm:$0xff] %v23
    %443 = vst [vmem:[%s432] ss:$4 sm:$0xff] %v24
    %v444 = vld.sshfl [vmem:[#allocation1] sm:$0xff pattern:$0x73625140]
    %v445 = vld.sshfl [vmem:[#allocation1 + $0x8] sm:$0xff pattern:$0x73625140]
    %v446 = vld.sshfl [vmem:[#allocation1 + $0x10] sm:$0xff pattern:$0x73625140]
    %v447 = vld.sshfl [vmem:[#allocation1 + $0x18] sm:$0xff pattern:$0x73625140]
    %v448 = vld.sshfl [vmem:[#allocation1 + $0x20] sm:$0xff pattern:$0x73625140]
    %v449 = vld.sshfl [vmem:[#allocation1 + $0x28] sm:$0xff pattern:$0x73625140]
    %v450 = vld.sshfl [vmem:[#allocation1 + $0x30] sm:$0xff pattern:$0x73625140]
    %v451 = vld.sshfl [vmem:[#allocation1 + $0x38] sm:$0xff pattern:$0x73625140]
    %452 = vst [vmem:[#allocation1] ss:$4 sm:$0xff] %v25
    %453 = vst [vmem:[%s432] ss:$4 sm:$0xff] %v26
    %v454 = vld.sshfl [vmem:[#allocation1] sm:$0xff pattern:$0x73625140]
    %v455 = vld.sshfl [vmem:[#allocation1 + $0x8] sm:$0xff pattern:$0x73625140]
    %v456 = vld.sshfl [vmem:[#allocation1 + $0x10] sm:$0xff pattern:$0x73625140]
    %v457 = vld.sshfl [vmem:[#allocation1 + $0x18] sm:$0xff pattern:$0x73625140]
    %v458 = vld.sshfl [vmem:[#allocation1 + $0x20] sm:$0xff pattern:$0x73625140]
    %v459 = vld.sshfl [vmem:[#allocation1 + $0x28] sm:$0xff pattern:$0x73625140]
    %v460 = vld.sshfl [vmem:[#allocation1 + $0x30] sm:$0xff pattern:$0x73625140]
    %v461 = vld.sshfl [vmem:[#allocation1 + $0x38] sm:$0xff pattern:$0x73625140]
    %462 = vst [vmem:[#allocation1] ss:$4 sm:$0xff] %v27
    %v463 = vld.sshfl [vmem:[#allocation1] sm:$0xff pattern:$0x73625140]
    %vm488 = vcmask 523264
    %v489 = vsel %vm488, %v463, 0
    %491 = vmatpush.msra.mxu0 %v43
    %492 = vmatpush.msra.mxu0 %v42
    %493 = vmatpush.msra.mxu0 %v41
    %494 = vmatpush.msra.mxu0 %v40
    %495 = vmatpush.msra.mxu0 %v39
    %496 = vmatpush.msra.mxu0 %v38
    %497 = vmatpush.msra.mxu0 %v37
    %498 = vmatpush.msra.mxu0 %v36
    %499 = vmatpush.msra.mxu0 %v35
    %500 = vmatpush.msra.mxu0 %v34
    %501 = vmatpush.msra.mxu0 %v33
    %502 = vmatpush.msra.mxu0 %v32
    %503 = vmatpush.msra.mxu0 %v31
    %504 = vmatpush.msra.mxu0 %v30
    %505 = vmatpush.msra.mxu0 %v29
    %506 = vmatpush.msra.mxu0 %v28
    %507 = vmatmul.f32.gmra.mxu0 %v434
    %v508 = vpop.f32.mrf.mxu0
    %v509 = vadd.f32 %v422, %v508
    %510 = vdwg.mxu0
    %511 = vmatpush.msra.mxu0 %v59
    %512 = vmatpush.msra.mxu0 %v58
    %513 = vmatpush.msra.mxu0 %v57
    %514 = vmatpush.msra.mxu0 %v56
    %515 = vmatpush.msra.mxu0 %v55
    %516 = vmatpush.msra.mxu0 %v54
    %517 = vmatpush.msra.mxu0 %v53
    %518 = vmatpush.msra.mxu0 %v52
    %519 = vmatpush.msra.mxu0 %v51
    %520 = vmatpush.msra.mxu0 %v50
    %521 = vmatpush.msra.mxu0 %v49
    %522 = vmatpush.msra.mxu0 %v48
    %523 = vmatpush.msra.mxu0 %v47
    %524 = vmatpush.msra.mxu0 %v46
    %525 = vmatpush.msra.mxu0 %v45
    %526 = vmatpush.msra.mxu0 %v44
    %527 = vmatmul.f32.gmra.mxu0 %v435
    %v528 = vpop.f32.mrf.mxu0
    %v529 = vadd.f32 %v509, %v528
    %530 = vdwg.mxu0
    %531 = vmatpush.msra.mxu0 %v75
    %532 = vmatpush.msra.mxu0 %v74
    %533 = vmatpush.msra.mxu0 %v73
    %534 = vmatpush.msra.mxu0 %v72
    %535 = vmatpush.msra.mxu0 %v71
    %536 = vmatpush.msra.mxu0 %v70
    %537 = vmatpush.msra.mxu0 %v69
    %538 = vmatpush.msra.mxu0 %v68
    %539 = vmatpush.msra.mxu0 %v67
    %540 = vmatpush.msra.mxu0 %v66
    %541 = vmatpush.msra.mxu0 %v65
    %542 = vmatpush.msra.mxu0 %v64
    %543 = vmatpush.msra.mxu0 %v63
    %544 = vmatpush.msra.mxu0 %v62
    %545 = vmatpush.msra.mxu0 %v61
    %546 = vmatpush.msra.mxu0 %v60
    %547 = vmatmul.f32.gmra.mxu0 %v436
    %v548 = vpop.f32.mrf.mxu0
    %v549 = vadd.f32 %v529, %v548
    %550 = vdwg.mxu0
    %551 = vmatpush.msra.mxu0 %v91
    %552 = vmatpush.msra.mxu0 %v90
    %553 = vmatpush.msra.mxu0 %v89
    %554 = vmatpush.msra.mxu0 %v88
    %555 = vmatpush.msra.mxu0 %v87
    %556 = vmatpush.msra.mxu0 %v86
    %557 = vmatpush.msra.mxu0 %v85
    %558 = vmatpush.msra.mxu0 %v84
    %559 = vmatpush.msra.mxu0 %v83
    %560 = vmatpush.msra.mxu0 %v82
    %561 = vmatpush.msra.mxu0 %v81
    %562 = vmatpush.msra.mxu0 %v80
    %563 = vmatpush.msra.mxu0 %v79
    %564 = vmatpush.msra.mxu0 %v78
    %565 = vmatpush.msra.mxu0 %v77
    %566 = vmatpush.msra.mxu0 %v76
    %567 = vmatmul.f32.gmra.mxu0 %v437
    %v568 = vpop.f32.mrf.mxu0
    %v569 = vadd.f32 %v549, %v568
    %570 = vdwg.mxu0
    %571 = vmatpush.msra.mxu0 %v107
    %572 = vmatpush.msra.mxu0 %v106
    %573 = vmatpush.msra.mxu0 %v105
    %574 = vmatpush.msra.mxu0 %v104
    %575 = vmatpush.msra.mxu0 %v103
    %576 = vmatpush.msra.mxu0 %v102
    %577 = vmatpush.msra.mxu0 %v101
    %578 = vmatpush.msra.mxu0 %v100
    %579 = vmatpush.msra.mxu0 %v99
    %580 = vmatpush.msra.mxu0 %v98
    %581 = vmatpush.msra.mxu0 %v97
    %582 = vmatpush.msra.mxu0 %v96
    %583 = vmatpush.msra.mxu0 %v95
    %584 = vmatpush.msra.mxu0 %v94
    %585 = vmatpush.msra.mxu0 %v93
    %586 = vmatpush.msra.mxu0 %v92
    %587 = vmatmul.f32.gmra.mxu0 %v438
    %v588 = vpop.f32.mrf.mxu0
    %v589 = vadd.f32 %v569, %v588
    %590 = vdwg.mxu0
    %591 = vmatpush.msra.mxu0 %v123
    %592 = vmatpush.msra.mxu0 %v122
    %593 = vmatpush.msra.mxu0 %v121
    %594 = vmatpush.msra.mxu0 %v120
    %595 = vmatpush.msra.mxu0 %v119
    %596 = vmatpush.msra.mxu0 %v118
    %597 = vmatpush.msra.mxu0 %v117
    %598 = vmatpush.msra.mxu0 %v116
    %599 = vmatpush.msra.mxu0 %v115
    %600 = vmatpush.msra.mxu0 %v114
    %601 = vmatpush.msra.mxu0 %v113
    %602 = vmatpush.msra.mxu0 %v112
    %603 = vmatpush.msra.mxu0 %v111
    %604 = vmatpush.msra.mxu0 %v110
    %605 = vmatpush.msra.mxu0 %v109
    %606 = vmatpush.msra.mxu0 %v108
    %607 = vmatmul.f32.gmra.mxu0 %v439
    %v608 = vpop.f32.mrf.mxu0
    %v609 = vadd.f32 %v589, %v608
    %610 = vdwg.mxu0
    %611 = vmatpush.msra.mxu0 %v139
    %612 = vmatpush.msra.mxu0 %v138
    %613 = vmatpush.msra.mxu0 %v137
    %614 = vmatpush.msra.mxu0 %v136
    %615 = vmatpush.msra.mxu0 %v135
    %616 = vmatpush.msra.mxu0 %v134
    %617 = vmatpush.msra.mxu0 %v133
    %618 = vmatpush.msra.mxu0 %v132
    %619 = vmatpush.msra.mxu0 %v131
    %620 = vmatpush.msra.mxu0 %v130
    %621 = vmatpush.msra.mxu0 %v129
    %622 = vmatpush.msra.mxu0 %v128
    %623 = vmatpush.msra.mxu0 %v127
    %624 = vmatpush.msra.mxu0 %v126
    %625 = vmatpush.msra.mxu0 %v125
    %626 = vmatpush.msra.mxu0 %v124
    %627 = vmatmul.f32.gmra.mxu0 %v440
    %v628 = vpop.f32.mrf.mxu0
    %v629 = vadd.f32 %v609, %v628
    %630 = vdwg.mxu0
    %631 = vmatpush.msra.mxu0 %v155
    %632 = vmatpush.msra.mxu0 %v154
    %633 = vmatpush.msra.mxu0 %v153
    %634 = vmatpush.msra.mxu0 %v152
    %635 = vmatpush.msra.mxu0 %v151
    %636 = vmatpush.msra.mxu0 %v150
    %637 = vmatpush.msra.mxu0 %v149
    %638 = vmatpush.msra.mxu0 %v148
    %639 = vmatpush.msra.mxu0 %v147
    %640 = vmatpush.msra.mxu0 %v146
    %641 = vmatpush.msra.mxu0 %v145
    %642 = vmatpush.msra.mxu0 %v144
    %643 = vmatpush.msra.mxu0 %v143
    %644 = vmatpush.msra.mxu0 %v142
    %645 = vmatpush.msra.mxu0 %v141
    %646 = vmatpush.msra.mxu0 %v140
    %647 = vmatmul.f32.gmra.mxu0 %v441
    %v648 = vpop.f32.mrf.mxu0
    %v649 = vadd.f32 %v629, %v648
    %650 = vdwg.mxu0
    %651 = vmatpush.msra.mxu0 %v171
    %652 = vmatpush.msra.mxu0 %v170
    %653 = vmatpush.msra.mxu0 %v169
    %654 = vmatpush.msra.mxu0 %v168
    %655 = vmatpush.msra.mxu0 %v167
    %656 = vmatpush.msra.mxu0 %v166
    %657 = vmatpush.msra.mxu0 %v165
    %658 = vmatpush.msra.mxu0 %v164
    %659 = vmatpush.msra.mxu0 %v163
    %660 = vmatpush.msra.mxu0 %v162
    %661 = vmatpush.msra.mxu0 %v161
    %662 = vmatpush.msra.mxu0 %v160
    %663 = vmatpush.msra.mxu0 %v159
    %664 = vmatpush.msra.mxu0 %v158
    %665 = vmatpush.msra.mxu0 %v157
    %666 = vmatpush.msra.mxu0 %v156
    %667 = vmatmul.f32.gmra.mxu0 %v444
    %v668 = vpop.f32.mrf.mxu0
    %v669 = vadd.f32 %v649, %v668
    %670 = vdwg.mxu0
    %671 = vmatpush.msra.mxu0 %v187
    %672 = vmatpush.msra.mxu0 %v186
    %673 = vmatpush.msra.mxu0 %v185
    %674 = vmatpush.msra.mxu0 %v184
    %675 = vmatpush.msra.mxu0 %v183
    %676 = vmatpush.msra.mxu0 %v182
    %677 = vmatpush.msra.mxu0 %v181
    %678 = vmatpush.msra.mxu0 %v180
    %679 = vmatpush.msra.mxu0 %v179
    %680 = vmatpush.msra.mxu0 %v178
    %681 = vmatpush.msra.mxu0 %v177
    %682 = vmatpush.msra.mxu0 %v176
    %683 = vmatpush.msra.mxu0 %v175
    %684 = vmatpush.msra.mxu0 %v174
    %685 = vmatpush.msra.mxu0 %v173
    %686 = vmatpush.msra.mxu0 %v172
    %687 = vmatmul.f32.gmra.mxu0 %v445
    %v688 = vpop.f32.mrf.mxu0
    %v689 = vadd.f32 %v669, %v688
    %690 = vdwg.mxu0
    %691 = vmatpush.msra.mxu0 %v203
    %692 = vmatpush.msra.mxu0 %v202
    %693 = vmatpush.msra.mxu0 %v201
    %694 = vmatpush.msra.mxu0 %v200
    %695 = vmatpush.msra.mxu0 %v199
    %696 = vmatpush.msra.mxu0 %v198
    %697 = vmatpush.msra.mxu0 %v197
    %698 = vmatpush.msra.mxu0 %v196
    %699 = vmatpush.msra.mxu0 %v195
    %700 = vmatpush.msra.mxu0 %v194
    %701 = vmatpush.msra.mxu0 %v193
    %702 = vmatpush.msra.mxu0 %v192
    %703 = vmatpush.msra.mxu0 %v191
    %704 = vmatpush.msra.mxu0 %v190
    %705 = vmatpush.msra.mxu0 %v189
    %706 = vmatpush.msra.mxu0 %v188
    %707 = vmatmul.f32.gmra.mxu0 %v446
    %v708 = vpop.f32.mrf.mxu0
    %v709 = vadd.f32 %v689, %v708
    %710 = vdwg.mxu0
    %711 = vmatpush.msra.mxu0 %v219
    %712 = vmatpush.msra.mxu0 %v218
    %713 = vmatpush.msra.mxu0 %v217
    %714 = vmatpush.msra.mxu0 %v216
    %715 = vmatpush.msra.mxu0 %v215
    %716 = vmatpush.msra.mxu0 %v214
    %717 = vmatpush.msra.mxu0 %v213
    %718 = vmatpush.msra.mxu0 %v212
    %719 = vmatpush.msra.mxu0 %v211
    %720 = vmatpush.msra.mxu0 %v210
    %721 = vmatpush.msra.mxu0 %v209
    %722 = vmatpush.msra.mxu0 %v208
    %723 = vmatpush.msra.mxu0 %v207
    %724 = vmatpush.msra.mxu0 %v206
    %725 = vmatpush.msra.mxu0 %v205
    %726 = vmatpush.msra.mxu0 %v204
    %727 = vmatmul.f32.gmra.mxu0 %v447
    %v728 = vpop.f32.mrf.mxu0
    %v729 = vadd.f32 %v709, %v728
    %730 = vdwg.mxu0
    %731 = vmatpush.msra.mxu0 %v235
    %732 = vmatpush.msra.mxu0 %v234
    %733 = vmatpush.msra.mxu0 %v233
    %734 = vmatpush.msra.mxu0 %v232
    %735 = vmatpush.msra.mxu0 %v231
    %736 = vmatpush.msra.mxu0 %v230
    %737 = vmatpush.msra.mxu0 %v229
    %738 = vmatpush.msra.mxu0 %v228
    %739 = vmatpush.msra.mxu0 %v227
    %740 = vmatpush.msra.mxu0 %v226
    %741 = vmatpush.msra.mxu0 %v225
    %742 = vmatpush.msra.mxu0 %v224
    %743 = vmatpush.msra.mxu0 %v223
    %744 = vmatpush.msra.mxu0 %v222
    %745 = vmatpush.msra.mxu0 %v221
    %746 = vmatpush.msra.mxu0 %v220
    %747 = vmatmul.f32.gmra.mxu0 %v448
    %v748 = vpop.f32.mrf.mxu0
    %v749 = vadd.f32 %v729, %v748
    %750 = vdwg.mxu0
    %751 = vmatpush.msra.mxu0 %v251
    %752 = vmatpush.msra.mxu0 %v250
    %753 = vmatpush.msra.mxu0 %v249
    %754 = vmatpush.msra.mxu0 %v248
    %755 = vmatpush.msra.mxu0 %v247
    %756 = vmatpush.msra.mxu0 %v246
    %757 = vmatpush.msra.mxu0 %v245
    %758 = vmatpush.msra.mxu0 %v244
    %759 = vmatpush.msra.mxu0 %v243
    %760 = vmatpush.msra.mxu0 %v242
    %761 = vmatpush.msra.mxu0 %v241
    %762 = vmatpush.msra.mxu0 %v240
    %763 = vmatpush.msra.mxu0 %v239
    %764 = vmatpush.msra.mxu0 %v238
    %765 = vmatpush.msra.mxu0 %v237
    %766 = vmatpush.msra.mxu0 %v236
    %767 = vmatmul.f32.gmra.mxu0 %v449
    %v768 = vpop.f32.mrf.mxu0
    %v769 = vadd.f32 %v749, %v768
    %770 = vdwg.mxu0
    %771 = vmatpush.msra.mxu0 %v267
    %772 = vmatpush.msra.mxu0 %v266
    %773 = vmatpush.msra.mxu0 %v265
    %774 = vmatpush.msra.mxu0 %v264
    %775 = vmatpush.msra.mxu0 %v263
    %776 = vmatpush.msra.mxu0 %v262
    %777 = vmatpush.msra.mxu0 %v261
    %778 = vmatpush.msra.mxu0 %v260
    %779 = vmatpush.msra.mxu0 %v259
    %780 = vmatpush.msra.mxu0 %v258
    %781 = vmatpush.msra.mxu0 %v257
    %782 = vmatpush.msra.mxu0 %v256
    %783 = vmatpush.msra.mxu0 %v255
    %784 = vmatpush.msra.mxu0 %v254
    %785 = vmatpush.msra.mxu0 %v253
    %786 = vmatpush.msra.mxu0 %v252
    %787 = vmatmul.f32.gmra.mxu0 %v450
    %v788 = vpop.f32.mrf.mxu0
    %v789 = vadd.f32 %v769, %v788
    %790 = vdwg.mxu0
    %791 = vmatpush.msra.mxu0 %v283
    %792 = vmatpush.msra.mxu0 %v282
    %793 = vmatpush.msra.mxu0 %v281
    %794 = vmatpush.msra.mxu0 %v280
    %795 = vmatpush.msra.mxu0 %v279
    %796 = vmatpush.msra.mxu0 %v278
    %797 = vmatpush.msra.mxu0 %v277
    %798 = vmatpush.msra.mxu0 %v276
    %799 = vmatpush.msra.mxu0 %v275
    %800 = vmatpush.msra.mxu0 %v274
    %801 = vmatpush.msra.mxu0 %v273
    %802 = vmatpush.msra.mxu0 %v272
    %803 = vmatpush.msra.mxu0 %v271
    %804 = vmatpush.msra.mxu0 %v270
    %805 = vmatpush.msra.mxu0 %v269
    %806 = vmatpush.msra.mxu0 %v268
    %807 = vmatmul.f32.gmra.mxu0 %v451
    %v808 = vpop.f32.mrf.mxu0
    %v809 = vadd.f32 %v789, %v808
    %810 = vdwg.mxu0
    %811 = vmatpush.msra.mxu0 %v299
    %812 = vmatpush.msra.mxu0 %v298
    %813 = vmatpush.msra.mxu0 %v297
    %814 = vmatpush.msra.mxu0 %v296
    %815 = vmatpush.msra.mxu0 %v295
    %816 = vmatpush.msra.mxu0 %v294
    %817 = vmatpush.msra.mxu0 %v293
    %818 = vmatpush.msra.mxu0 %v292
    %819 = vmatpush.msra.mxu0 %v291
    %820 = vmatpush.msra.mxu0 %v290
    %821 = vmatpush.msra.mxu0 %v289
    %822 = vmatpush.msra.mxu0 %v288
    %823 = vmatpush.msra.mxu0 %v287
    %824 = vmatpush.msra.mxu0 %v286
    %825 = vmatpush.msra.mxu0 %v285
    %826 = vmatpush.msra.mxu0 %v284
    %827 = vmatmul.f32.gmra.mxu0 %v454
    %v828 = vpop.f32.mrf.mxu0
    %v829 = vadd.f32 %v809, %v828
    %830 = vdwg.mxu0
    %831 = vmatpush.msra.mxu0 %v315
    %832 = vmatpush.msra.mxu0 %v314
    %833 = vmatpush.msra.mxu0 %v313
    %834 = vmatpush.msra.mxu0 %v312
    %835 = vmatpush.msra.mxu0 %v311
    %836 = vmatpush.msra.mxu0 %v310
    %837 = vmatpush.msra.mxu0 %v309
    %838 = vmatpush.msra.mxu0 %v308
    %839 = vmatpush.msra.mxu0 %v307
    %840 = vmatpush.msra.mxu0 %v306
    %841 = vmatpush.msra.mxu0 %v305
    %842 = vmatpush.msra.mxu0 %v304
    %843 = vmatpush.msra.mxu0 %v303
    %844 = vmatpush.msra.mxu0 %v302
    %845 = vmatpush.msra.mxu0 %v301
    %846 = vmatpush.msra.mxu0 %v300
    %847 = vmatmul.f32.gmra.mxu0 %v455
    %v848 = vpop.f32.mrf.mxu0
    %v849 = vadd.f32 %v829, %v848
    %850 = vdwg.mxu0
    %851 = vmatpush.msra.mxu0 %v331
    %852 = vmatpush.msra.mxu0 %v330
    %853 = vmatpush.msra.mxu0 %v329
    %854 = vmatpush.msra.mxu0 %v328
    %855 = vmatpush.msra.mxu0 %v327
    %856 = vmatpush.msra.mxu0 %v326
    %857 = vmatpush.msra.mxu0 %v325
    %858 = vmatpush.msra.mxu0 %v324
    %859 = vmatpush.msra.mxu0 %v323
    %860 = vmatpush.msra.mxu0 %v322
    %861 = vmatpush.msra.mxu0 %v321
    %862 = vmatpush.msra.mxu0 %v320
    %863 = vmatpush.msra.mxu0 %v319
    %864 = vmatpush.msra.mxu0 %v318
    %865 = vmatpush.msra.mxu0 %v317
    %866 = vmatpush.msra.mxu0 %v316
    %867 = vmatmul.f32.gmra.mxu0 %v456
    %v868 = vpop.f32.mrf.mxu0
    %v869 = vadd.f32 %v849, %v868
    %870 = vdwg.mxu0
    %871 = vmatpush.msra.mxu0 %v347
    %872 = vmatpush.msra.mxu0 %v346
    %873 = vmatpush.msra.mxu0 %v345
    %874 = vmatpush.msra.mxu0 %v344
    %875 = vmatpush.msra.mxu0 %v343
    %876 = vmatpush.msra.mxu0 %v342
    %877 = vmatpush.msra.mxu0 %v341
    %878 = vmatpush.msra.mxu0 %v340
    %879 = vmatpush.msra.mxu0 %v339
    %880 = vmatpush.msra.mxu0 %v338
    %881 = vmatpush.msra.mxu0 %v337
    %882 = vmatpush.msra.mxu0 %v336
    %883 = vmatpush.msra.mxu0 %v335
    %884 = vmatpush.msra.mxu0 %v334
    %885 = vmatpush.msra.mxu0 %v333
    %886 = vmatpush.msra.mxu0 %v332
    %887 = vmatmul.f32.gmra.mxu0 %v457
    %v888 = vpop.f32.mrf.mxu0
    %v889 = vadd.f32 %v869, %v888
    %890 = vdwg.mxu0
    %891 = vmatpush.msra.mxu0 %v363
    %892 = vmatpush.msra.mxu0 %v362
    %893 = vmatpush.msra.mxu0 %v361
    %894 = vmatpush.msra.mxu0 %v360
    %895 = vmatpush.msra.mxu0 %v359
    %896 = vmatpush.msra.mxu0 %v358
    %897 = vmatpush.msra.mxu0 %v357
    %898 = vmatpush.msra.mxu0 %v356
    %899 = vmatpush.msra.mxu0 %v355
    %900 = vmatpush.msra.mxu0 %v354
    %901 = vmatpush.msra.mxu0 %v353
    %902 = vmatpush.msra.mxu0 %v352
    %903 = vmatpush.msra.mxu0 %v351
    %904 = vmatpush.msra.mxu0 %v350
    %905 = vmatpush.msra.mxu0 %v349
    %906 = vmatpush.msra.mxu0 %v348
    %907 = vmatmul.f32.gmra.mxu0 %v458
    %v908 = vpop.f32.mrf.mxu0
    %v909 = vadd.f32 %v889, %v908
    %910 = vdwg.mxu0
    %911 = vmatpush.msra.mxu0 %v379
    %912 = vmatpush.msra.mxu0 %v378
    %913 = vmatpush.msra.mxu0 %v377
    %914 = vmatpush.msra.mxu0 %v376
    %915 = vmatpush.msra.mxu0 %v375
    %916 = vmatpush.msra.mxu0 %v374
    %917 = vmatpush.msra.mxu0 %v373
    %918 = vmatpush.msra.mxu0 %v372
    %919 = vmatpush.msra.mxu0 %v371
    %920 = vmatpush.msra.mxu0 %v370
    %921 = vmatpush.msra.mxu0 %v369
    %922 = vmatpush.msra.mxu0 %v368
    %923 = vmatpush.msra.mxu0 %v367
    %924 = vmatpush.msra.mxu0 %v366
    %925 = vmatpush.msra.mxu0 %v365
    %926 = vmatpush.msra.mxu0 %v364
    %927 = vmatmul.f32.gmra.mxu0 %v459
    %v928 = vpop.f32.mrf.mxu0
    %v929 = vadd.f32 %v909, %v928
    %930 = vdwg.mxu0
    %931 = vmatpush.msra.mxu0 %v395
    %932 = vmatpush.msra.mxu0 %v394
    %933 = vmatpush.msra.mxu0 %v393
    %934 = vmatpush.msra.mxu0 %v392
    %935 = vmatpush.msra.mxu0 %v391
    %936 = vmatpush.msra.mxu0 %v390
    %937 = vmatpush.msra.mxu0 %v389
    %938 = vmatpush.msra.mxu0 %v388
    %939 = vmatpush.msra.mxu0 %v387
    %940 = vmatpush.msra.mxu0 %v386
    %941 = vmatpush.msra.mxu0 %v385
    %942 = vmatpush.msra.mxu0 %v384
    %943 = vmatpush.msra.mxu0 %v383
    %944 = vmatpush.msra.mxu0 %v382
    %945 = vmatpush.msra.mxu0 %v381
    %946 = vmatpush.msra.mxu0 %v380
    %947 = vmatmul.f32.gmra.mxu0 %v460
    %v948 = vpop.f32.mrf.mxu0
    %v949 = vadd.f32 %v929, %v948
    %950 = vdwg.mxu0
    %951 = vmatpush.msra.mxu0 %v411
    %952 = vmatpush.msra.mxu0 %v410
    %953 = vmatpush.msra.mxu0 %v409
    %954 = vmatpush.msra.mxu0 %v408
    %955 = vmatpush.msra.mxu0 %v407
    %956 = vmatpush.msra.mxu0 %v406
    %957 = vmatpush.msra.mxu0 %v405
    %958 = vmatpush.msra.mxu0 %v404
    %959 = vmatpush.msra.mxu0 %v403
    %960 = vmatpush.msra.mxu0 %v402
    %961 = vmatpush.msra.mxu0 %v401
    %962 = vmatpush.msra.mxu0 %v400
    %963 = vmatpush.msra.mxu0 %v399
    %964 = vmatpush.msra.mxu0 %v398
    %965 = vmatpush.msra.mxu0 %v397
    %966 = vmatpush.msra.mxu0 %v396
    %967 = vmatmul.f32.gmra.mxu0 %v461
    %v968 = vpop.f32.mrf.mxu0
    %v969 = vadd.f32 %v949, %v968
    %970 = vdwg.mxu0
    %971 = vmatpush.msra.mxu0 0.0
    %972 = vmatpush.msra.mxu0 0.0
    %973 = vmatpush.msra.mxu0 0.0
    %974 = vmatpush.msra.mxu0 0.0
    %975 = vmatpush.msra.mxu0 0.0
    %976 = vmatpush.msra.mxu0 0.0
    %977 = vmatpush.msra.mxu0 0.0
    %978 = vmatpush.msra.mxu0 0.0
    %979 = vmatpush.msra.mxu0 %v419
    %980 = vmatpush.msra.mxu0 %v418
    %981 = vmatpush.msra.mxu0 %v417
    %982 = vmatpush.msra.mxu0 %v416
    %983 = vmatpush.msra.mxu0 %v415
    %984 = vmatpush.msra.mxu0 %v414
    %985 = vmatpush.msra.mxu0 %v413
    %986 = vmatpush.msra.mxu0 %v412
    %987 = vmatmul.f32.gmra.mxu0 %v489
    %v988 = vpop.f32.mrf.mxu0
    %v989 = vadd.f32 %v969, %v988
    %990 = vdwg.mxu0
    %v991 = vmax.f32 %v989, 0.0
    %v992 = vld [vmem:[%s3] sm:$0xff]
    %v993 = vld [vmem:[%s3 + $0x8] sm:$0xff]
    %v994 = vld [vmem:[%s3 + $0x10] sm:$0xff]
    %v995 = vld [vmem:[%s3 + $0x18] sm:$0xff]
    %v996 = vld [vmem:[%s3 + $0x20] sm:$0xff]
    %v997 = vld [vmem:[%s3 + $0x28] sm:$0xff]
    %v998 = vld [vmem:[%s3 + $0x30] sm:$0xff]
    %v999 = vld [vmem:[%s3 + $0x38] sm:$0xff]
    %v1000 = vld [vmem:[%s3 + $0x40] sm:$0xff]
    %v1001 = vld [vmem:[%s3 + $0x48] sm:$0xff]
    %v1002 = vld [vmem:[%s3 + $0x50] sm:$0xff]
    %v1003 = vld [vmem:[%s3 + $0x58] sm:$0xff]
    %v1004 = vld [vmem:[%s3 + $0x60] sm:$0xff]
    %v1005 = vld [vmem:[%s3 + $0x68] sm:$0xff]
    %v1006 = vld [vmem:[%s3 + $0x70] sm:$0xff]
    %v1007 = vld [vmem:[%s3 + $0x78] sm:$0xff]
    %v1008 = vld [vmem:[%s4] sm:$0x1]
    %v1010 = vperm.slane %v1008, 0
    %1012 = vmatpush.msra.mxu0 %v1007
    %1013 = vmatpush.msra.mxu0 %v1006
    %1014 = vmatpush.msra.mxu0 %v1005
    %1015 = vmatpush.msra.mxu0 %v1004
    %1016 = vmatpush.msra.mxu0 %v1003
    %1017 = vmatpush.msra.mxu0 %v1002
    %1018 = vmatpush.msra.mxu0 %v1001
    %1019 = vmatpush.msra.mxu0 %v1000
    %1020 = vmatpush.msra.mxu0 %v999
    %1021 = vmatpush.msra.mxu0 %v998
    %1022 = vmatpush.msra.mxu0 %v997
    %1023 = vmatpush.msra.mxu0 %v996
    %1024 = vmatpush.msra.mxu0 %v995
    %1025 = vmatpush.msra.mxu0 %v994
    %1026 = vmatpush.msra.mxu0 %v993
    %1027 = vmatpush.msra.mxu0 %v992
    %1028 = vmatmul.f32.gmra.mxu0 %v991
    %v1029 = vpop.f32.mrf.mxu0
    %v1030 = vadd.f32 %v1010, %v1029
    %1031 = vdwg.mxu0
    %vm1032 = vcmask 74752
    %1033 = vst.msk [vmem:[#allocation2] sm:$0x3] %vm1032, %v1030
    // Predicated region
    $region22: #{cnn_forward.5} parent=1 // pred_check
      _
    $region23: #{cnn_forward.5} parent=1 // pred_check_branch
      %1035 = sbr.rel (0) target = $region25
    $region24: #{cnn_forward.5} parent=1 // pred_region
      %1037 = vsyncadd [#allocation3], 0
      %s1039 = sshll.u32 [#allocation2], 4
      %s1040 = int_to_ptr.vmem [resolvable:$true] %s1039
      %s1041 = sshll.u32 %s5, 4
      %s1042 = int_to_ptr.hbm [resolvable:$true] %s1041
      %1044 = dma.vmem_to_hbm [thread:$0]  %s1040, 32, %s1042, [#allocation3]
    $region25: #{cnn_forward.5} parent=1 // pred_fallthru
      _
    // Predicated region
    $region26: #{cnn_forward.5} parent=1 // pred_check
      _
    $region27: #{cnn_forward.5} parent=1 // pred_check_branch
      %1046 = sbr.rel (0) target = $region29
    $region28: #{cnn_forward.5} parent=1 // pred_region
      %1048 = dma.done [#allocation3], 32
    $region29: #{cnn_forward.5} parent=1 // pred_fallthru
      _
    %1049 = vsyncpa [#allocation3], 1

</llo_original>
